<compile_context>
chip_gen: v7x
topology: tpu7x:2x2x1
jax: 0.10.0
libtpu: 0.0.40
codegen_flags: <defaults>
</compile_context>

<pallas_src>
import functools
import math

import numpy as np
import jax
import jax.numpy as jnp
from jax.experimental import pallas as pl
from jax.experimental.pallas import tpu as pltpu

# ------------------------------- config -------------------------------------
SAMPLING_RATE = 16000
FFT_SIZE = 64
HOP_SIZE = 16
WIN_LENGTH = 64
NUM_MELS = 16
N_BINS = FFT_SIZE // 2 + 1       # 33
N_PAD = 64                       # freq bins padded so re/im halves are sublane aligned
EPS = 1e-10

# generator_params (ParallelWaveGANGenerator, out_channels == 1 branch)
IN_CHANNELS = 1
OUT_CHANNELS = 1
RESIDUAL_CHANNELS = 16
GATE_CHANNELS = 32
SKIP_CHANNELS = 16
LAYERS = 4
STACKS = 2
KERNEL_SIZE = 3
AUX_CONTEXT_WINDOW = 0           # ReplicationPad1d(0) -> no-op pad_fn
LAYERS_PER_STACK = LAYERS // STACKS
DILATIONS = [2 ** (l % LAYERS_PER_STACK) for l in range(LAYERS)]  # [1, 2, 1, 2]

# ----- tiling config -----
RECEPTIVE_PER_SIDE = sum(DILATIONS) * ((KERNEL_SIZE - 1) // 2)    # 6 samples
# HALO: >= dilated receptive field (halo is recomputed per tile), a multiple of
# HOP_SIZE (exact frame alignment of the frame-rate aux tiles), and 2*HALO a
# multiple of 128 so T_h = T_TILE + 2*HALO stays lane-aligned for pltpu.roll.
HALO = 64
T_TILE_MAX = 4096                # generator time tile (multiple of 128 and HOP);
                                 # capped so the resident f32 expansion matrix +
                                 # temporaries stay well under 32 MiB scoped VMEM
F_TILE_MAX = 512                 # feature-kernel frame tile (multiple of 128)
VMEM_LIMIT_BYTES = 32 * 1024 * 1024
assert HALO >= RECEPTIVE_PER_SIDE
assert HALO % HOP_SIZE == 0 and (2 * HALO) % 128 == 0
assert T_TILE_MAX % 128 == 0 and T_TILE_MAX % HOP_SIZE == 0
assert F_TILE_MAX % 128 == 0


def _round_up(x, m):
    return ((x + m - 1) // m) * m


def _full_block(arr):
    """Whole-array block with a constant index_map (kept resident across grid)."""
    nd = arr.ndim
    return pl.BlockSpec(arr.shape, lambda *_, nd=nd: (0,) * nd)


@functools.lru_cache(maxsize=None)
def _gate_dtype():
    """bf16 gate nonlinearity on chips with a bf16 VPU/EUP path (v6e / v7x);
    f32 on v5e and older (no bf16 EUP: casts would only add work)."""
    try:
        kind = jax.devices()[0].device_kind.lower()
    except Exception:
        return jnp.float32
    if ("v6" in kind) or ("v7" in kind) or ("7x" in kind):
        return jnp.bfloat16
    return jnp.float32


# --------------------------- Pallas kernel 1: features ----------------------
def _feature_kernel(frames_ref, trig_ref, melb_ref, mean_ref, inv_scale_ref,
                    out_ref):
    """log-mel filterbank + StandardScaler for one (batch, frame-tile) block.

    frames: (1, FFT, F_TILE) time-major windows.  trig packs the windowed cos
    (rows [0, N_BINS)) and sin (rows [N_PAD, N_PAD + N_BINS)) DFT bases so the
    real/imag projections are a single MXU pass and split on an aligned
    sublane boundary.  Output is (1, NUM_MELS, F_TILE): mels on sublanes,
    frames on lanes (lane-dense stores; also what the generator consumes).
    """
    f = frames_ref[0]                                                # (FFT, Ft)
    r = jnp.dot(trig_ref[...], f, preferred_element_type=jnp.float32)  # (2*N_PAD, Ft)
    sq = r * r
    power = sq[:N_PAD] + sq[N_PAD:]            # |STFT|^2, padded bins are exactly 0
    spc = jnp.sqrt(power)                      # magnitude spectrogram
    mel = jnp.dot(melb_ref[...], spc, preferred_element_type=jnp.float32)
    logmel = jnp.log10(jnp.maximum(jnp.float32(EPS), mel))
    out_ref[0] = (logmel - mean_ref[...]) * inv_scale_ref[...]


def feature_extract(frames_t, trig, melb, mean, inv_scale, *, f_tile):
    b, fft, f_pad = frames_t.shape
    consts = (trig, melb, mean, inv_scale)
    return pl.pallas_call(
        _feature_kernel,
        out_shape=jax.ShapeDtypeStruct((b, NUM_MELS, f_pad), jnp.float32),
        grid=(b, f_pad // f_tile),
        in_specs=[pl.BlockSpec((1, fft, f_tile), lambda bi, fi: (bi, 0, fi))]
                + [_full_block(a) for a in consts],
        out_specs=pl.BlockSpec((1, NUM_MELS, f_tile), lambda bi, fi: (bi, 0, fi)),
        compiler_params=pltpu.CompilerParams(
            dimension_semantics=("parallel", "parallel"),
            vmem_limit_bytes=VMEM_LIMIT_BYTES),
    )(frames_t, *consts)


# --------------------------- Pallas kernel 2: generator ---------------------
def _generator_kernel(noise_ref, cf_ref, expand_ref,
                      first_w_ref, first_b_ref,
                      dilaux_w_ref, dilaux_b_ref,
                      sr_w_ref, sr_b_ref,
                      last1_w_ref, last1_b_ref,
                      last2_w_ref, last2_b_ref,
                      out_ref, *, t_gen, t_tile, halo, gate_dtype):
    """One (batch, time-tile) step of the ParallelWaveGAN generator.

    noise: (1, 1, 1, T_h)  cf (frame-rate mel): (1, 1, M, F_h)  out: (1, 1, T_TILE)
    with T_h = t_tile + 2*halo and F_h = T_h // HOP.  The halo is recomputed
    from the raw inputs so tiles are fully independent ("parallel" grid).
    """
    t_h = t_tile + 2 * halo
    half = GATE_CHANNELS // 2
    tile = pl.program_id(1)

    # validity mask: reproduces the original zero "same" padding of the dilated
    # convs at the sequence boundaries (positions outside [0, t_gen)).
    pos = tile * t_tile - halo + jax.lax.broadcasted_iota(jnp.int32, (1, t_h), 1)
    mask = jnp.logical_and(pos >= 0, pos < t_gen).astype(jnp.float32)
    mask_res = mask * jnp.float32(math.sqrt(0.5))

    z = noise_ref[0, 0]                                  # (1, T_h)
    cf = cf_ref[0, 0]                                    # (M, F_h)

    # nearest-neighbour xHOP upsample of the frame-rate conditioning as ONE
    # exact matmul against a resident one-hot expansion matrix (MXU has slack;
    # the sample-rate mel never touches HBM).
    c = jnp.dot(cf, expand_ref[...], preferred_element_type=jnp.float32)  # (M, T_h)

    # first 1x1 conv: (R, 1) * (1, T_h) -> (R, T_h)
    x = (first_w_ref[...] * z + first_b_ref[...]) * mask

    skips = jnp.zeros((SKIP_CHANNELS, t_h), jnp.float32)

    for layer in range(LAYERS):
        d = DILATIONS[layer]

        # 3-tap dilated conv fused with the aux 1x1 conv as ONE matmul:
        # stack [x[t-d], x[t], x[t+d], c] on the sublane axis and contract
        # against the fused (G, 3R + M) weight.  Wrap from the rolls never
        # reaches the written interior (halo >= dilated receptive field).
        x_m = pltpu.roll(x, d, axis=1)            # x[:, t - d]
        x_p = pltpu.roll(x, t_h - d, axis=1)      # x[:, t + d]
        x_stack = jnp.concatenate([x_m, x, x_p, c], axis=0)          # (3R+M, T_h)
        acc = jnp.dot(dilaux_w_ref[layer], x_stack,
                      preferred_element_type=jnp.float32) + dilaux_b_ref[layer]

        # gated activation; sigmoid(v) == 0.5*(tanh(0.5*v)+1) (one EUP op per
        # gate half); computed in bf16 on v6e/v7x, f32 on v5e.
        xa = acc[:half].astype(gate_dtype)
        xb = acc[half:].astype(gate_dtype)
        g = jnp.tanh(xa) * (0.5 * (jnp.tanh(0.5 * xb) + 1.0))

        # fused skip + residual 1x1 convs: one (S+R, half) x (half, T_h) matmul
        sr = jnp.dot(sr_w_ref[layer], g.astype(jnp.float32),
                     preferred_element_type=jnp.float32) + sr_b_ref[layer]
        skips = skips + sr[:SKIP_CHANNELS]
        x = (sr[SKIP_CHANNELS:] + x) * mask_res

    skips = skips * jnp.float32(math.sqrt(1.0 / LAYERS))

    # last_conv_layers: ReLU, 1x1, ReLU, 1x1 -> out_channels = 1
    h = jnp.maximum(skips, 0.0)
    h = jnp.dot(last1_w_ref[...], h,
                preferred_element_type=jnp.float32) + last1_b_ref[...]
    h = jnp.maximum(h, 0.0)
    y = jnp.dot(last2_w_ref[...], h,
                preferred_element_type=jnp.float32) + last2_b_ref[...]

    # write only the interior (lane-dense: t_tile is a multiple of 128);
    # the offset slice is a single sublane row -> negligible relayout.
    out_ref[0] = y[:, halo:halo + t_tile]


def generate_waveform(noise_tiles, melf_tiles, expand, params, *,
                      t_gen, t_tile, halo):
    b, n_tiles, _, t_h = noise_tiles.shape
    f_h = melf_tiles.shape[-1]
    t_padded = n_tiles * t_tile
    weights = (params["first_w"], params["first_b"],
               params["dilaux_w"], params["dilaux_b"],
               params["sr_w"], params["sr_b"],
               params["last1_w"], params["last1_b"],
               params["last2_w"], params["last2_b"])
    kernel = functools.partial(_generator_kernel,
                               t_gen=t_gen, t_tile=t_tile, halo=halo,
                               gate_dtype=_gate_dtype())
    return pl.pallas_call(
        kernel,
        out_shape=jax.ShapeDtypeStruct((b, 1, t_padded), jnp.float32),
        grid=(b, n_tiles),
        in_specs=[pl.BlockSpec((1, 1, 1, t_h), lambda bi, ti: (bi, ti, 0, 0)),
                  pl.BlockSpec((1, 1, NUM_MELS, f_h),
                               lambda bi, ti: (bi, ti, 0, 0)),
                  _full_block(expand)]
                + [_full_block(w) for w in weights],
        out_specs=pl.BlockSpec((1, 1, t_tile), lambda bi, ti: (bi, 0, ti)),
        compiler_params=pltpu.CompilerParams(
            dimension_semantics=("parallel", "parallel"),
            vmem_limit_bytes=VMEM_LIMIT_BYTES),
    )(noise_tiles, melf_tiles, expand, *weights)


# ------------------------- host-side glue / params --------------------------
def _mel_filterbank():
    # Triangular HTK-style mel filterbank (deterministic).
    # TODO(synk): librosa.filters.mel uses the Slaney mel scale + slaney norm;
    # not reproducible bit-exactly without librosa in-script.
    def hz_to_mel(f):
        return 2595.0 * np.log10(1.0 + f / 700.0)

    def mel_to_hz(m):
        return 700.0 * (10.0 ** (m / 2595.0) - 1.0)

    fmin, fmax = 0.0, SAMPLING_RATE / 2.0
    fft_freqs = np.linspace(0.0, SAMPLING_RATE / 2.0, N_BINS)
    mel_pts = np.linspace(hz_to_mel(fmin), hz_to_mel(fmax), NUM_MELS + 2)
    hz_pts = mel_to_hz(mel_pts)
    fb = np.zeros((NUM_MELS, N_BINS), dtype=np.float32)
    for m in range(NUM_MELS):
        lo, ctr, hi = hz_pts[m], hz_pts[m + 1], hz_pts[m + 2]
        up = (fft_freqs - lo) / max(ctr - lo, 1e-8)
        down = (hi - fft_freqs) / max(hi - ctr, 1e-8)
        fb[m] = np.maximum(0.0, np.minimum(up, down))
    return fb


def make_feature_constants():
    n = np.arange(FFT_SIZE)
    # periodic Hann (matches torch/librosa while WIN_LENGTH == FFT_SIZE)
    window = 0.5 - 0.5 * np.cos(2.0 * np.pi * n / WIN_LENGTH)
    k = np.arange(N_BINS)
    phase = 2.0 * np.pi * np.outer(k, n) / FFT_SIZE               # (N_BINS, FFT)
    trig = np.zeros((2 * N_PAD, FFT_SIZE), dtype=np.float32)      # fused cos|sin basis
    trig[:N_BINS] = np.cos(phase) * window[None, :]
    trig[N_PAD:N_PAD + N_BINS] = np.sin(phase) * window[None, :]
    melb = np.zeros((NUM_MELS, N_PAD), dtype=np.float32)          # lane-padded mel basis
    melb[:, :N_BINS] = _mel_filterbank()
    # StandardScaler stats (checkpoint-derived in the original): deterministic.
    mean = np.linspace(-3.0, -1.0, NUM_MELS, dtype=np.float32).reshape(-1, 1)
    scale = np.linspace(0.5, 1.5, NUM_MELS, dtype=np.float32).reshape(-1, 1)
    inv_scale = (1.0 / scale).astype(np.float32)
    return (jnp.asarray(trig), jnp.asarray(melb),
            jnp.asarray(mean), jnp.asarray(inv_scale))


def init_generator_params(key):
    # TODO(synk): the original loads checkpoint weights; synthetic init here.
    ks = jax.random.split(key, 8)
    s = 0.1
    half = GATE_CHANNELS // 2
    dil_w = jax.random.normal(
        ks[1], (LAYERS, KERNEL_SIZE, GATE_CHANNELS, RESIDUAL_CHANNELS)) * s
    # fused tap layout (G, K*R), tap order matches [x[t-d], x[t], x[t+d]]
    dil_w_flat = jnp.transpose(dil_w, (0, 2, 1, 3)).reshape(
        LAYERS, GATE_CHANNELS, KERNEL_SIZE * RESIDUAL_CHANNELS)
    aux_w = jax.random.normal(ks[2], (LAYERS, GATE_CHANNELS, NUM_MELS)) * s
    skip_w = jax.random.normal(ks[3], (LAYERS, SKIP_CHANNELS, half)) * s
    res_w = jax.random.normal(ks[4], (LAYERS, RESIDUAL_CHANNELS, half)) * s
    p = {
        "first_w": jax.random.normal(ks[0], (RESIDUAL_CHANNELS, 1)) * s,
        "first_b": jnp.zeros((RESIDUAL_CHANNELS, 1), jnp.float32),
        # dilated conv (tap order [t-d, t, t+d]) fused with the aux 1x1 conv:
        # one (L, G, 3R + M) weight per layer
        "dilaux_w": jnp.concatenate([dil_w_flat, aux_w], axis=2),
        "dilaux_b": jnp.zeros((LAYERS, GATE_CHANNELS, 1), jnp.float32),
        # fused skip + residual 1x1 convs: (L, S+R, half)
        "sr_w": jnp.concatenate([skip_w, res_w], axis=1),
        "sr_b": jnp.zeros((LAYERS, SKIP_CHANNELS + RESIDUAL_CHANNELS, 1),
                          jnp.float32),
        "last1_w": jax.random.normal(ks[5], (SKIP_CHANNELS, SKIP_CHANNELS)) * s,
        "last1_b": jnp.zeros((SKIP_CHANNELS, 1), jnp.float32),
        "last2_w": jax.random.normal(ks[6], (OUT_CHANNELS, SKIP_CHANNELS)) * s,
        "last2_b": jnp.zeros((OUT_CHANNELS, 1), jnp.float32),
    }
    return {k: v.astype(jnp.float32) for k, v in p.items()}


@jax.jit
def _wavegan_pipeline(audio, noise_key, feat_consts, gen_params):
    """audio: (B, T0) -> reconstructed audio (B, T0)."""
    trig, melb, mean, inv_scale = feat_consts
    b, t0 = audio.shape
    n_frames = 1 + t0 // HOP_SIZE
    t_gen = n_frames * HOP_SIZE

    # ---- STFT framing (center, reflect pad), time-major frames ----
    # TODO(synk): trim_silence (librosa.effects.trim) not implemented; treated
    # as trim_silence=False.
    pad = FFT_SIZE // 2
    padded = jnp.pad(audio, ((0, 0), (pad, pad)), mode="reflect")
    fidx = (jnp.arange(n_frames) * HOP_SIZE)[:, None] + jnp.arange(FFT_SIZE)[None, :]
    frames = padded[:, fidx]                                  # (B, F, FFT)
    frames_t = jnp.transpose(frames, (0, 2, 1)).astype(jnp.float32)  # (B, FFT, F)

    f_tile = min(F_TILE_MAX, _round_up(n_frames, 128))
    f_pad = _round_up(n_frames, f_tile)
    frames_t = jnp.pad(frames_t, ((0, 0), (0, 0), (0, f_pad - n_frames)))

    mel = feature_extract(frames_t, trig, melb, mean, inv_scale, f_tile=f_tile)
    mel = mel[:, :, :n_frames]                                # (B, M, F)

    # ---- generator tiling (all static shape arithmetic) ----
    # pad_fn = ReplicationPad1d(aux_context_window=0) -> no-op.
    # TODO(synk): ParallelWaveGAN's ConvInUpsampleNetwork replaced by nearest-
    # neighbor upsampling by hop_size (done in-kernel, at frame rate in HBM).
    t_tile = min(T_TILE_MAX, _round_up(t_gen, 128))
    if b == 1 and t_gen > 128:
        # keep >= 2 grid steps so both v7x TensorCores get work
        t_tile = min(t_tile, max(128, _round_up(-(-t_gen // 2), 128)))
    n_tiles = -(-t_gen // t_tile)
    t_padded = n_tiles * t_tile
    t_h = t_tile + 2 * HALO
    f_tile_gen = t_tile // HOP_SIZE
    halo_f = HALO // HOP_SIZE
    f_h = f_tile_gen + 2 * halo_f                             # == t_h // HOP_SIZE

    # ---- noise input (halo'd tiles; 1 channel -> small) ----
    # TODO(synk): in-kernel PRNG (pltpu.prng_*) would remove this gather, but
    # it changes the random stream vs jax.random; kept host-side.
    noise = jax.random.normal(noise_key, (b, 1, t_gen), dtype=jnp.float32)
    noise_pad = jnp.pad(noise, ((0, 0), (0, 0), (HALO, HALO + t_padded - t_gen)))
    tidx = (jnp.arange(n_tiles) * t_tile)[:, None] + jnp.arange(t_h)[None, :]
    noise_tiles = jnp.transpose(noise_pad[:, :, tidx], (0, 2, 1, 3))  # (B,nt,1,T_h)

    # ---- frame-rate conditioning tiles (16x less HBM traffic than sample rate)
    f_padded_gen = n_tiles * f_tile_gen
    mel_pad = jnp.pad(mel, ((0, 0), (0, 0),
                            (halo_f, halo_f + f_padded_gen - n_frames)))
    fidx2 = (jnp.arange(n_tiles) * f_tile_gen)[:, None] + jnp.arange(f_h)[None, :]
    melf_tiles = jnp.transpose(mel_pad[:, :, fidx2], (0, 2, 1, 3))    # (B,nt,M,F_h)

    # exact one-hot nearest-neighbour xHOP expansion matrix (resident in VMEM):
    # expand[f, p] = 1 iff p // HOP == f  (t_tile and HALO are multiples of HOP)
    expand = jnp.asarray(np.kron(np.eye(f_h, dtype=np.float32),
                                 np.ones((1, HOP_SIZE), np.float32)))  # (F_h, T_h)

    y = generate_waveform(noise_tiles, melf_tiles, expand, gen_params,
                          t_gen=t_gen, t_tile=t_tile, halo=HALO)  # (B, 1, t_padded)
    return y[:, 0, :t0]                                       # trim to input length


def wavegan_defend(audio, feat_consts, gen_params, noise_key):
    return _wavegan_pipeline(audio, noise_key, feat_consts, gen_params)


# --------------------------------- main --------------------------------------
if __name__ == "__main__":
    B = 2
    NUM_SAMPLES = 256

    key = jax.random.PRNGKey(0)
    k_audio, k_params, k_noise = jax.random.split(key, 3)

    audio = 0.1 * jax.random.normal(k_audio, (B, NUM_SAMPLES), dtype=jnp.float32)
    feat_consts = make_feature_constants()
    gen_params = init_generator_params(k_params)

    out = wavegan_defend(audio, feat_consts, gen_params, k_noise)
    out = jax.block_until_ready(out)

    assert out.shape == (B, NUM_SAMPLES), out.shape
    assert out.dtype == jnp.float32
    assert bool(jnp.all(jnp.isfinite(out)))
    print("KERNEL_OK")
</pallas_src>

<mosaic_0001>
module attributes {stable_mosaic.version = 11 : i64} {
  func.func @_feature_kernel(%arg0: i32, %arg1: i32, %arg2: memref<1x64x128xf32, #tpu.memory_space<vmem>>, %arg3: memref<128x64xf32, #tpu.memory_space<vmem>>, %arg4: memref<16x64xf32, #tpu.memory_space<vmem>>, %arg5: memref<16x1xf32, #tpu.memory_space<vmem>>, %arg6: memref<16x1xf32, #tpu.memory_space<vmem>>, %arg7: memref<1x16x128xf32, #tpu.memory_space<vmem>>) attributes {dimension_semantics = [#tpu.dimension_semantics<parallel>, #tpu.dimension_semantics<parallel>], iteration_bounds = array<i64: 2, 1>, scalar_prefetch = 0 : i64, scratch_operands = 0 : i64, tpu.core_type = #tpu.core_type<tc>, window_params = [{transform_indices = @transform_0, window_bounds = array<i64: 1, 64, 128>}, {pipeline_mode = #tpu.pipeline_mode<synchronous>, transform_indices = @transform_1, window_bounds = array<i64: 128, 64>}, {pipeline_mode = #tpu.pipeline_mode<synchronous>, transform_indices = @transform_2, window_bounds = array<i64: 16, 64>}, {pipeline_mode = #tpu.pipeline_mode<synchronous>, transform_indices = @transform_3, window_bounds = array<i64: 16, 1>}, {pipeline_mode = #tpu.pipeline_mode<synchronous>, transform_indices = @transform_4, window_bounds = array<i64: 16, 1>}, {transform_indices = @transform_5, window_bounds = array<i64: 1, 16, 128>}]} {
    %c0 = arith.constant 0 : index
    %c0_0 = arith.constant 0 : index
    %c0_1 = arith.constant 0 : index
    %0 = vector.load %arg2[%c0, %c0_0, %c0_1] : memref<1x64x128xf32, #tpu.memory_space<vmem>>, vector<1x64x128xf32>
    %1 = vector.shape_cast %0 : vector<1x64x128xf32> to vector<64x128xf32>
    %c0_2 = arith.constant 0 : index
    %c0_3 = arith.constant 0 : index
    %2 = vector.load %arg3[%c0_2, %c0_3] : memref<128x64xf32, #tpu.memory_space<vmem>>, vector<128x64xf32>
    %cst = arith.constant dense<0.000000e+00> : vector<128x128xf32>
    %3 = tpu.matmul %2, %1, %cst {dimension_numbers = #tpu.dot_dimension_numbers<[1], [0], [0], [1], [0, 0, 1, 1], [], []>} : vector<128x64xf32>, vector<64x128xf32>, vector<128x128xf32> -> vector<128x128xf32>
    %4 = arith.mulf %3, %3 : vector<128x128xf32>
    %5 = vector.extract_strided_slice %4 {offsets = [0, 0], sizes = [64, 128], strides = [1, 1]} : vector<128x128xf32> to vector<64x128xf32>
    %6 = vector.extract_strided_slice %4 {offsets = [64, 0], sizes = [64, 128], strides = [1, 1]} : vector<128x128xf32> to vector<64x128xf32>
    %7 = arith.addf %5, %6 : vector<64x128xf32>
    %8 = math.sqrt %7 : vector<64x128xf32>
    %c0_4 = arith.constant 0 : index
    %c0_5 = arith.constant 0 : index
    %9 = vector.load %arg4[%c0_4, %c0_5] : memref<16x64xf32, #tpu.memory_space<vmem>>, vector<16x64xf32>
    %cst_6 = arith.constant dense<0.000000e+00> : vector<16x128xf32>
    %10 = tpu.matmul %9, %8, %cst_6 {dimension_numbers = #tpu.dot_dimension_numbers<[1], [0], [0], [1], [0, 0, 1, 1], [], []>} : vector<16x64xf32>, vector<64x128xf32>, vector<16x128xf32> -> vector<16x128xf32>
    %cst_7 = arith.constant 1.000000e-10 : f32
    %11 = vector.broadcast %cst_7 : f32 to vector<16x128xf32>
    %12 = arith.maximumf %11, %10 : vector<16x128xf32>
    %13 = math.log %12 : vector<16x128xf32>
    %cst_8 = arith.constant 0.434294492 : f32
    %14 = vector.broadcast %cst_8 : f32 to vector<16x128xf32>
    %15 = arith.mulf %13, %14 : vector<16x128xf32>
    %c0_9 = arith.constant 0 : index
    %c0_10 = arith.constant 0 : index
    %16 = vector.load %arg5[%c0_9, %c0_10] : memref<16x1xf32, #tpu.memory_space<vmem>>, vector<16x1xf32>
    %17 = vector.broadcast %16 : vector<16x1xf32> to vector<16x128xf32>
    %18 = arith.subf %15, %17 : vector<16x128xf32>
    %c0_11 = arith.constant 0 : index
    %c0_12 = arith.constant 0 : index
    %19 = vector.load %arg6[%c0_11, %c0_12] : memref<16x1xf32, #tpu.memory_space<vmem>>, vector<16x1xf32>
    %20 = vector.broadcast %19 : vector<16x1xf32> to vector<16x128xf32>
    %21 = arith.mulf %18, %20 : vector<16x128xf32>
    %c0_13 = arith.constant 0 : index
    %c0_14 = arith.constant 0 : index
    %c0_15 = arith.constant 0 : index
    %22 = vector.load %arg7[%c0_13, %c0_14, %c0_15] : memref<1x16x128xf32, #tpu.memory_space<vmem>>, vector<1x16x128xf32>
    %23 = vector.shape_cast %22 : vector<1x16x128xf32> to vector<16x128xf32>
    %24 = vector.shape_cast %21 : vector<16x128xf32> to vector<1x16x128xf32>
    tpu.vector_store %arg7[%c0_13, %c0_14, %c0_15], %24 {strides = array<i32>} : memref<1x16x128xf32, #tpu.memory_space<vmem>>, vector<1x16x128xf32>,
    return
  }
  func.func @transform_0(%arg0: i32, %arg1: i32) -> (i32, i32, i32) {
    %c0_i32 = arith.constant 0 : i32
    %c0_i32_0 = arith.constant 0 : i32
    return %arg0, %c0_i32, %arg1 : i32, i32, i32
  }
  func.func @transform_1(%arg0: i32, %arg1: i32) -> (i32, i32) {
    %c0_i32 = arith.constant 0 : i32
    %c0_i32_0 = arith.constant 0 : i32
    %c0_i32_1 = arith.constant 0 : i32
    return %c0_i32, %c0_i32_0 : i32, i32
  }
  func.func @transform_2(%arg0: i32, %arg1: i32) -> (i32, i32) {
    %c0_i32 = arith.constant 0 : i32
    %c0_i32_0 = arith.constant 0 : i32
    %c0_i32_1 = arith.constant 0 : i32
    return %c0_i32, %c0_i32_0 : i32, i32
  }
  func.func @transform_3(%arg0: i32, %arg1: i32) -> (i32, i32) {
    %c0_i32 = arith.constant 0 : i32
    %c0_i32_0 = arith.constant 0 : i32
    %c0_i32_1 = arith.constant 0 : i32
    return %c0_i32, %c0_i32_0 : i32, i32
  }
  func.func @transform_4(%arg0: i32, %arg1: i32) -> (i32, i32) {
    %c0_i32 = arith.constant 0 : i32
    %c0_i32_0 = arith.constant 0 : i32
    %c0_i32_1 = arith.constant 0 : i32
    return %c0_i32, %c0_i32_0 : i32, i32
  }
  func.func @transform_5(%arg0: i32, %arg1: i32) -> (i32, i32, i32) {
    %c0_i32 = arith.constant 0 : i32
    %c0_i32_0 = arith.constant 0 : i32
    return %arg0, %c0_i32, %arg1 : i32, i32, i32
  }
}

module attributes {stable_mosaic.version = 11 : i64} {
  func.func @_generator_kernel(%arg0: i32, %arg1: i32, %arg2: memref<1x1x1x512xf32, #tpu.memory_space<vmem>>, %arg3: memref<1x1x16x32xf32, #tpu.memory_space<vmem>>, %arg4: memref<32x512xf32, #tpu.memory_space<vmem>>, %arg5: memref<16x1xf32, #tpu.memory_space<vmem>>, %arg6: memref<16x1xf32, #tpu.memory_space<vmem>>, %arg7: memref<4x32x64xf32, #tpu.memory_space<vmem>>, %arg8: memref<4x32x1xf32, #tpu.memory_space<vmem>>, %arg9: memref<4x32x16xf32, #tpu.memory_space<vmem>>, %arg10: memref<4x32x1xf32, #tpu.memory_space<vmem>>, %arg11: memref<16x16xf32, #tpu.memory_space<vmem>>, %arg12: memref<16x1xf32, #tpu.memory_space<vmem>>, %arg13: memref<1x16xf32, #tpu.memory_space<vmem>>, %arg14: memref<1x1xf32, #tpu.memory_space<vmem>>, %arg15: memref<1x1x384xf32, #tpu.memory_space<vmem>>) attributes {dimension_semantics = [#tpu.dimension_semantics<parallel>, #tpu.dimension_semantics<parallel>], iteration_bounds = array<i64: 2, 1>, scalar_prefetch = 0 : i64, scratch_operands = 0 : i64, tpu.core_type = #tpu.core_type<tc>, window_params = [{transform_indices = @transform_0, window_bounds = array<i64: 1, 1, 1, 512>}, {transform_indices = @transform_1, window_bounds = array<i64: 1, 1, 16, 32>}, {pipeline_mode = #tpu.pipeline_mode<synchronous>, transform_indices = @transform_2, window_bounds = array<i64: 32, 512>}, {pipeline_mode = #tpu.pipeline_mode<synchronous>, transform_indices = @transform_3, window_bounds = array<i64: 16, 1>}, {pipeline_mode = #tpu.pipeline_mode<synchronous>, transform_indices = @transform_4, window_bounds = array<i64: 16, 1>}, {pipeline_mode = #tpu.pipeline_mode<synchronous>, transform_indices = @transform_5, window_bounds = array<i64: 4, 32, 64>}, {pipeline_mode = #tpu.pipeline_mode<synchronous>, transform_indices = @transform_6, window_bounds = array<i64: 4, 32, 1>}, {pipeline_mode = #tpu.pipeline_mode<synchronous>, transform_indices = @transform_7, window_bounds = array<i64: 4, 32, 16>}, {pipeline_mode = #tpu.pipeline_mode<synchronous>, transform_indices = @transform_8, window_bounds = array<i64: 4, 32, 1>}, {pipeline_mode = #tpu.pipeline_mode<synchronous>, transform_indices = @transform_9, window_bounds = array<i64: 16, 16>}, {pipeline_mode = #tpu.pipeline_mode<synchronous>, transform_indices = @transform_10, window_bounds = array<i64: 16, 1>}, {pipeline_mode = #tpu.pipeline_mode<synchronous>, transform_indices = @transform_11, window_bounds = array<i64: 1, 16>}, {pipeline_mode = #tpu.pipeline_mode<synchronous>, transform_indices = @transform_12, window_bounds = array<i64: 1, 1>}, {transform_indices = @transform_13, window_bounds = array<i64: 1, 1, 384>}]} {
    %c384_i32 = arith.constant 384 : i32
    %0 = arith.muli %arg1, %c384_i32 : i32
    %c64_i32 = arith.constant 64 : i32
    %1 = arith.subi %0, %c64_i32 : i32
    %2 = tpu.iota {dimensions = array<i32: 1>} : vector<1x512xi32>
    %3 = vector.broadcast %1 : i32 to vector<1x512xi32>
    %4 = arith.addi %3, %2 : vector<1x512xi32>
    %c0_i32 = arith.constant 0 : i32
    %5 = vector.broadcast %c0_i32 : i32 to vector<1x512xi32>
    %6 = arith.cmpi sge, %4, %5 : vector<1x512xi32>
    %c272_i32 = arith.constant 272 : i32
    %7 = vector.broadcast %c272_i32 : i32 to vector<1x512xi32>
    %8 = arith.cmpi slt, %4, %7 : vector<1x512xi32>
    %9 = arith.andi %6, %8 : vector<1x512xi1>
    %10 = arith.extui %9 : vector<1x512xi1> to vector<1x512xi32>
    %11 = arith.sitofp %10 : vector<1x512xi32> to vector<1x512xf32>
    %cst = arith.constant 0.707106769 : f32
    %12 = vector.broadcast %cst : f32 to vector<1x512xf32>
    %13 = arith.mulf %11, %12 : vector<1x512xf32>
    %c0 = arith.constant 0 : index
    %c0_0 = arith.constant 0 : index
    %c0_1 = arith.constant 0 : index
    %c0_2 = arith.constant 0 : index
    %14 = vector.load %arg2[%c0, %c0_0, %c0_1, %c0_2] : memref<1x1x1x512xf32, #tpu.memory_space<vmem>>, vector<1x1x1x512xf32>
    %15 = vector.shape_cast %14 : vector<1x1x1x512xf32> to vector<1x512xf32>
    %c0_3 = arith.constant 0 : index
    %c0_4 = arith.constant 0 : index
    %c0_5 = arith.constant 0 : index
    %c0_6 = arith.constant 0 : index
    %16 = vector.load %arg3[%c0_3, %c0_4, %c0_5, %c0_6] : memref<1x1x16x32xf32, #tpu.memory_space<vmem>>, vector<1x1x16x32xf32>
    %17 = vector.shape_cast %16 : vector<1x1x16x32xf32> to vector<16x32xf32>
    %c0_7 = arith.constant 0 : index
    %c0_8 = arith.constant 0 : index
    %18 = vector.load %arg4[%c0_7, %c0_8] : memref<32x512xf32, #tpu.memory_space<vmem>>, vector<32x512xf32>
    %cst_9 = arith.constant dense<0.000000e+00> : vector<16x512xf32>
    %19 = tpu.matmul %17, %18, %cst_9 {dimension_numbers = #tpu.dot_dimension_numbers<[1], [0], [0], [1], [0, 0, 1, 1], [], []>} : vector<16x32xf32>, vector<32x512xf32>, vector<16x512xf32> -> vector<16x512xf32>
    %c0_10 = arith.constant 0 : index
    %c0_11 = arith.constant 0 : index
    %20 = vector.load %arg5[%c0_10, %c0_11] : memref<16x1xf32, #tpu.memory_space<vmem>>, vector<16x1xf32>
    %21 = vector.broadcast %20 : vector<16x1xf32> to vector<16x512xf32>
    %22 = vector.broadcast %15 : vector<1x512xf32> to vector<16x512xf32>
    %23 = arith.mulf %21, %22 : vector<16x512xf32>
    %c0_12 = arith.constant 0 : index
    %c0_13 = arith.constant 0 : index
    %24 = vector.load %arg6[%c0_12, %c0_13] : memref<16x1xf32, #tpu.memory_space<vmem>>, vector<16x1xf32>
    %25 = vector.broadcast %24 : vector<16x1xf32> to vector<16x512xf32>
    %26 = arith.addf %23, %25 : vector<16x512xf32>
    %27 = vector.broadcast %11 : vector<1x512xf32> to vector<16x512xf32>
    %28 = arith.mulf %26, %27 : vector<16x512xf32>
    %cst_14 = arith.constant 0.000000e+00 : f32
    %29 = vector.broadcast %cst_14 : f32 to vector<16x512xf32>
    %c1_i32 = arith.constant 1 : i32
    %30 = tpu.dynamic_rotate %28 by %c1_i32 dim 1 : vector<16x512xf32>, i32 -> vector<16x512xf32>
    %c511_i32 = arith.constant 511 : i32
    %31 = tpu.dynamic_rotate %28 by %c511_i32 dim 1 : vector<16x512xf32>, i32 -> vector<16x512xf32>
    %32 = tpu.concatenate %30, %28, %31, %19 in 0 : vector<16x512xf32>, vector<16x512xf32>, vector<16x512xf32>, vector<16x512xf32> -> vector<64x512xf32>
    %c0_15 = arith.constant 0 : index
    %c0_16 = arith.constant 0 : index
    %c0_17 = arith.constant 0 : index
    %33 = vector.load %arg7[%c0_15, %c0_16, %c0_17] : memref<4x32x64xf32, #tpu.memory_space<vmem>>, vector<1x32x64xf32>
    %34 = vector.shape_cast %33 : vector<1x32x64xf32> to vector<32x64xf32>
    %cst_18 = arith.constant dense<0.000000e+00> : vector<32x512xf32>
    %35 = tpu.matmul %34, %32, %cst_18 {dimension_numbers = #tpu.dot_dimension_numbers<[1], [0], [0], [1], [0, 0, 1, 1], [], []>} : vector<32x64xf32>, vector<64x512xf32>, vector<32x512xf32> -> vector<32x512xf32>
    %c0_19 = arith.constant 0 : index
    %c0_20 = arith.constant 0 : index
    %c0_21 = arith.constant 0 : index
    %36 = vector.load %arg8[%c0_19, %c0_20, %c0_21] : memref<4x32x1xf32, #tpu.memory_space<vmem>>, vector<1x32x1xf32>
    %37 = vector.shape_cast %36 : vector<1x32x1xf32> to vector<32x1xf32>
    %38 = vector.broadcast %37 : vector<32x1xf32> to vector<32x512xf32>
    %39 = arith.addf %35, %38 : vector<32x512xf32>
    %40 = vector.extract_strided_slice %39 {offsets = [0, 0], sizes = [16, 512], strides = [1, 1]} : vector<32x512xf32> to vector<16x512xf32>
    %41 = vector.extract_strided_slice %39 {offsets = [16, 0], sizes = [16, 512], strides = [1, 1]} : vector<32x512xf32> to vector<16x512xf32>
    %42 = math.tanh %40 : vector<16x512xf32>
    %cst_22 = arith.constant 5.000000e-01 : f32
    %43 = vector.broadcast %cst_22 : f32 to vector<16x512xf32>
    %44 = arith.mulf %43, %41 : vector<16x512xf32>
    %45 = math.tanh %44 : vector<16x512xf32>
    %cst_23 = arith.constant 1.000000e+00 : f32
    %46 = vector.broadcast %cst_23 : f32 to vector<16x512xf32>
    %47 = arith.addf %45, %46 : vector<16x512xf32>
    %cst_24 = arith.constant 5.000000e-01 : f32
    %48 = vector.broadcast %cst_24 : f32 to vector<16x512xf32>
    %49 = arith.mulf %48, %47 : vector<16x512xf32>
    %50 = arith.mulf %42, %49 : vector<16x512xf32>
    %c0_25 = arith.constant 0 : index
    %c0_26 = arith.constant 0 : index
    %c0_27 = arith.constant 0 : index
    %51 = vector.load %arg9[%c0_25, %c0_26, %c0_27] : memref<4x32x16xf32, #tpu.memory_space<vmem>>, vector<1x32x16xf32>
    %52 = vector.shape_cast %51 : vector<1x32x16xf32> to vector<32x16xf32>
    %cst_28 = arith.constant dense<0.000000e+00> : vector<32x512xf32>
    %53 = tpu.matmul %52, %50, %cst_28 {dimension_numbers = #tpu.dot_dimension_numbers<[1], [0], [0], [1], [0, 0, 1, 1], [], []>} : vector<32x16xf32>, vector<16x512xf32>, vector<32x512xf32> -> vector<32x512xf32>
    %c0_29 = arith.constant 0 : index
    %c0_30 = arith.constant 0 : index
    %c0_31 = arith.constant 0 : index
    %54 = vector.load %arg10[%c0_29, %c0_30, %c0_31] : memref<4x32x1xf32, #tpu.memory_space<vmem>>, vector<1x32x1xf32>
    %55 = vector.shape_cast %54 : vector<1x32x1xf32> to vector<32x1xf32>
    %56 = vector.broadcast %55 : vector<32x1xf32> to vector<32x512xf32>
    %57 = arith.addf %53, %56 : vector<32x512xf32>
    %58 = vector.extract_strided_slice %57 {offsets = [0, 0], sizes = [16, 512], strides = [1, 1]} : vector<32x512xf32> to vector<16x512xf32>
    %59 = arith.addf %29, %58 : vector<16x512xf32>
    %60 = vector.extract_strided_slice %57 {offsets = [16, 0], sizes = [16, 512], strides = [1, 1]} : vector<32x512xf32> to vector<16x512xf32>
    %61 = arith.addf %60, %28 : vector<16x512xf32>
    %62 = vector.broadcast %13 : vector<1x512xf32> to vector<16x512xf32>
    %63 = arith.mulf %61, %62 : vector<16x512xf32>
    %c2_i32 = arith.constant 2 : i32
    %64 = tpu.dynamic_rotate %63 by %c2_i32 dim 1 : vector<16x512xf32>, i32 -> vector<16x512xf32>
    %c510_i32 = arith.constant 510 : i32
    %65 = tpu.dynamic_rotate %63 by %c510_i32 dim 1 : vector<16x512xf32>, i32 -> vector<16x512xf32>
    %66 = tpu.concatenate %64, %63, %65, %19 in 0 : vector<16x512xf32>, vector<16x512xf32>, vector<16x512xf32>, vector<16x512xf32> -> vector<64x512xf32>
    %c1 = arith.constant 1 : index
    %c0_32 = arith.constant 0 : index
    %c0_33 = arith.constant 0 : index
    %67 = vector.load %arg7[%c1, %c0_32, %c0_33] : memref<4x32x64xf32, #tpu.memory_space<vmem>>, vector<1x32x64xf32>
    %68 = vector.shape_cast %67 : vector<1x32x64xf32> to vector<32x64xf32>
    %cst_34 = arith.constant dense<0.000000e+00> : vector<32x512xf32>
    %69 = tpu.matmul %68, %66, %cst_34 {dimension_numbers = #tpu.dot_dimension_numbers<[1], [0], [0], [1], [0, 0, 1, 1], [], []>} : vector<32x64xf32>, vector<64x512xf32>, vector<32x512xf32> -> vector<32x512xf32>
    %c1_35 = arith.constant 1 : index
    %c0_36 = arith.constant 0 : index
    %c0_37 = arith.constant 0 : index
    %70 = vector.load %arg8[%c1_35, %c0_36, %c0_37] : memref<4x32x1xf32, #tpu.memory_space<vmem>>, vector<1x32x1xf32>
    %71 = vector.shape_cast %70 : vector<1x32x1xf32> to vector<32x1xf32>
    %72 = vector.broadcast %71 : vector<32x1xf32> to vector<32x512xf32>
    %73 = arith.addf %69, %72 : vector<32x512xf32>
    %74 = vector.extract_strided_slice %73 {offsets = [0, 0], sizes = [16, 512], strides = [1, 1]} : vector<32x512xf32> to vector<16x512xf32>
    %75 = vector.extract_strided_slice %73 {offsets = [16, 0], sizes = [16, 512], strides = [1, 1]} : vector<32x512xf32> to vector<16x512xf32>
    %76 = math.tanh %74 : vector<16x512xf32>
    %cst_38 = arith.constant 5.000000e-01 : f32
    %77 = vector.broadcast %cst_38 : f32 to vector<16x512xf32>
    %78 = arith.mulf %77, %75 : vector<16x512xf32>
    %79 = math.tanh %78 : vector<16x512xf32>
    %cst_39 = arith.constant 1.000000e+00 : f32
    %80 = vector.broadcast %cst_39 : f32 to vector<16x512xf32>
    %81 = arith.addf %79, %80 : vector<16x512xf32>
    %cst_40 = arith.constant 5.000000e-01 : f32
    %82 = vector.broadcast %cst_40 : f32 to vector<16x512xf32>
    %83 = arith.mulf %82, %81 : vector<16x512xf32>
    %84 = arith.mulf %76, %83 : vector<16x512xf32>
    %c1_41 = arith.constant 1 : index
    %c0_42 = arith.constant 0 : index
    %c0_43 = arith.constant 0 : index
    %85 = vector.load %arg9[%c1_41, %c0_42, %c0_43] : memref<4x32x16xf32, #tpu.memory_space<vmem>>, vector<1x32x16xf32>
    %86 = vector.shape_cast %85 : vector<1x32x16xf32> to vector<32x16xf32>
    %cst_44 = arith.constant dense<0.000000e+00> : vector<32x512xf32>
    %87 = tpu.matmul %86, %84, %cst_44 {dimension_numbers = #tpu.dot_dimension_numbers<[1], [0], [0], [1], [0, 0, 1, 1], [], []>} : vector<32x16xf32>, vector<16x512xf32>, vector<32x512xf32> -> vector<32x512xf32>
    %c1_45 = arith.constant 1 : index
    %c0_46 = arith.constant 0 : index
    %c0_47 = arith.constant 0 : index
    %88 = vector.load %arg10[%c1_45, %c0_46, %c0_47] : memref<4x32x1xf32, #tpu.memory_space<vmem>>, vector<1x32x1xf32>
    %89 = vector.shape_cast %88 : vector<1x32x1xf32> to vector<32x1xf32>
    %90 = vector.broadcast %89 : vector<32x1xf32> to vector<32x512xf32>
    %91 = arith.addf %87, %90 : vector<32x512xf32>
    %92 = vector.extract_strided_slice %91 {offsets = [0, 0], sizes = [16, 512], strides = [1, 1]} : vector<32x512xf32> to vector<16x512xf32>
    %93 = arith.addf %59, %92 : vector<16x512xf32>
    %94 = vector.extract_strided_slice %91 {offsets = [16, 0], sizes = [16, 512], strides = [1, 1]} : vector<32x512xf32> to vector<16x512xf32>
    %95 = arith.addf %94, %63 : vector<16x512xf32>
    %96 = vector.broadcast %13 : vector<1x512xf32> to vector<16x512xf32>
    %97 = arith.mulf %95, %96 : vector<16x512xf32>
    %c1_i32_48 = arith.constant 1 : i32
    %98 = tpu.dynamic_rotate %97 by %c1_i32_48 dim 1 : vector<16x512xf32>, i32 -> vector<16x512xf32>
    %c511_i32_49 = arith.constant 511 : i32
    %99 = tpu.dynamic_rotate %97 by %c511_i32_49 dim 1 : vector<16x512xf32>, i32 -> vector<16x512xf32>
    %100 = tpu.concatenate %98, %97, %99, %19 in 0 : vector<16x512xf32>, vector<16x512xf32>, vector<16x512xf32>, vector<16x512xf32> -> vector<64x512xf32>
    %c2 = arith.constant 2 : index
    %c0_50 = arith.constant 0 : index
    %c0_51 = arith.constant 0 : index
    %101 = vector.load %arg7[%c2, %c0_50, %c0_51] : memref<4x32x64xf32, #tpu.memory_space<vmem>>, vector<1x32x64xf32>
    %102 = vector.shape_cast %101 : vector<1x32x64xf32> to vector<32x64xf32>
    %cst_52 = arith.constant dense<0.000000e+00> : vector<32x512xf32>
    %103 = tpu.matmul %102, %100, %cst_52 {dimension_numbers = #tpu.dot_dimension_numbers<[1], [0], [0], [1], [0, 0, 1, 1], [], []>} : vector<32x64xf32>, vector<64x512xf32>, vector<32x512xf32> -> vector<32x512xf32>
    %c2_53 = arith.constant 2 : index
    %c0_54 = arith.constant 0 : index
    %c0_55 = arith.constant 0 : index
    %104 = vector.load %arg8[%c2_53, %c0_54, %c0_55] : memref<4x32x1xf32, #tpu.memory_space<vmem>>, vector<1x32x1xf32>
    %105 = vector.shape_cast %104 : vector<1x32x1xf32> to vector<32x1xf32>
    %106 = vector.broadcast %105 : vector<32x1xf32> to vector<32x512xf32>
    %107 = arith.addf %103, %106 : vector<32x512xf32>
    %108 = vector.extract_strided_slice %107 {offsets = [0, 0], sizes = [16, 512], strides = [1, 1]} : vector<32x512xf32> to vector<16x512xf32>
    %109 = vector.extract_strided_slice %107 {offsets = [16, 0], sizes = [16, 512], strides = [1, 1]} : vector<32x512xf32> to vector<16x512xf32>
    %110 = math.tanh %108 : vector<16x512xf32>
    %cst_56 = arith.constant 5.000000e-01 : f32
    %111 = vector.broadcast %cst_56 : f32 to vector<16x512xf32>
    %112 = arith.mulf %111, %109 : vector<16x512xf32>
    %113 = math.tanh %112 : vector<16x512xf32>
    %cst_57 = arith.constant 1.000000e+00 : f32
    %114 = vector.broadcast %cst_57 : f32 to vector<16x512xf32>
    %115 = arith.addf %113, %114 : vector<16x512xf32>
    %cst_58 = arith.constant 5.000000e-01 : f32
    %116 = vector.broadcast %cst_58 : f32 to vector<16x512xf32>
    %117 = arith.mulf %116, %115 : vector<16x512xf32>
    %118 = arith.mulf %110, %117 : vector<16x512xf32>
    %c2_59 = arith.constant 2 : index
    %c0_60 = arith.constant 0 : index
    %c0_61 = arith.constant 0 : index
    %119 = vector.load %arg9[%c2_59, %c0_60, %c0_61] : memref<4x32x16xf32, #tpu.memory_space<vmem>>, vector<1x32x16xf32>
    %120 = vector.shape_cast %119 : vector<1x32x16xf32> to vector<32x16xf32>
    %cst_62 = arith.constant dense<0.000000e+00> : vector<32x512xf32>
    %121 = tpu.matmul %120, %118, %cst_62 {dimension_numbers = #tpu.dot_dimension_numbers<[1], [0], [0], [1], [0, 0, 1, 1], [], []>} : vector<32x16xf32>, vector<16x512xf32>, vector<32x512xf32> -> vector<32x512xf32>
    %c2_63 = arith.constant 2 : index
    %c0_64 = arith.constant 0 : index
    %c0_65 = arith.constant 0 : index
    %122 = vector.load %arg10[%c2_63, %c0_64, %c0_65] : memref<4x32x1xf32, #tpu.memory_space<vmem>>, vector<1x32x1xf32>
    %123 = vector.shape_cast %122 : vector<1x32x1xf32> to vector<32x1xf32>
    %124 = vector.broadcast %123 : vector<32x1xf32> to vector<32x512xf32>
    %125 = arith.addf %121, %124 : vector<32x512xf32>
    %126 = vector.extract_strided_slice %125 {offsets = [0, 0], sizes = [16, 512], strides = [1, 1]} : vector<32x512xf32> to vector<16x512xf32>
    %127 = arith.addf %93, %126 : vector<16x512xf32>
    %128 = vector.extract_strided_slice %125 {offsets = [16, 0], sizes = [16, 512], strides = [1, 1]} : vector<32x512xf32> to vector<16x512xf32>
    %129 = arith.addf %128, %97 : vector<16x512xf32>
    %130 = vector.broadcast %13 : vector<1x512xf32> to vector<16x512xf32>
    %131 = arith.mulf %129, %130 : vector<16x512xf32>
    %c2_i32_66 = arith.constant 2 : i32
    %132 = tpu.dynamic_rotate %131 by %c2_i32_66 dim 1 : vector<16x512xf32>, i32 -> vector<16x512xf32>
    %c510_i32_67 = arith.constant 510 : i32
    %133 = tpu.dynamic_rotate %131 by %c510_i32_67 dim 1 : vector<16x512xf32>, i32 -> vector<16x512xf32>
    %134 = tpu.concatenate %132, %131, %133, %19 in 0 : vector<16x512xf32>, vector<16x512xf32>, vector<16x512xf32>, vector<16x512xf32> -> vector<64x512xf32>
    %c3 = arith.constant 3 : index
    %c0_68 = arith.constant 0 : index
    %c0_69 = arith.constant 0 : index
    %135 = vector.load %arg7[%c3, %c0_68, %c0_69] : memref<4x32x64xf32, #tpu.memory_space<vmem>>, vector<1x32x64xf32>
    %136 = vector.shape_cast %135 : vector<1x32x64xf32> to vector<32x64xf32>
    %cst_70 = arith.constant dense<0.000000e+00> : vector<32x512xf32>
    %137 = tpu.matmul %136, %134, %cst_70 {dimension_numbers = #tpu.dot_dimension_numbers<[1], [0], [0], [1], [0, 0, 1, 1], [], []>} : vector<32x64xf32>, vector<64x512xf32>, vector<32x512xf32> -> vector<32x512xf32>
    %c3_71 = arith.constant 3 : index
    %c0_72 = arith.constant 0 : index
    %c0_73 = arith.constant 0 : index
    %138 = vector.load %arg8[%c3_71, %c0_72, %c0_73] : memref<4x32x1xf32, #tpu.memory_space<vmem>>, vector<1x32x1xf32>
    %139 = vector.shape_cast %138 : vector<1x32x1xf32> to vector<32x1xf32>
    %140 = vector.broadcast %139 : vector<32x1xf32> to vector<32x512xf32>
    %141 = arith.addf %137, %140 : vector<32x512xf32>
    %142 = vector.extract_strided_slice %141 {offsets = [0, 0], sizes = [16, 512], strides = [1, 1]} : vector<32x512xf32> to vector<16x512xf32>
    %143 = vector.extract_strided_slice %141 {offsets = [16, 0], sizes = [16, 512], strides = [1, 1]} : vector<32x512xf32> to vector<16x512xf32>
    %144 = math.tanh %142 : vector<16x512xf32>
    %cst_74 = arith.constant 5.000000e-01 : f32
    %145 = vector.broadcast %cst_74 : f32 to vector<16x512xf32>
    %146 = arith.mulf %145, %143 : vector<16x512xf32>
    %147 = math.tanh %146 : vector<16x512xf32>
    %cst_75 = arith.constant 1.000000e+00 : f32
    %148 = vector.broadcast %cst_75 : f32 to vector<16x512xf32>
    %149 = arith.addf %147, %148 : vector<16x512xf32>
    %cst_76 = arith.constant 5.000000e-01 : f32
    %150 = vector.broadcast %cst_76 : f32 to vector<16x512xf32>
    %151 = arith.mulf %150, %149 : vector<16x512xf32>
    %152 = arith.mulf %144, %151 : vector<16x512xf32>
    %c3_77 = arith.constant 3 : index
    %c0_78 = arith.constant 0 : index
    %c0_79 = arith.constant 0 : index
    %153 = vector.load %arg9[%c3_77, %c0_78, %c0_79] : memref<4x32x16xf32, #tpu.memory_space<vmem>>, vector<1x32x16xf32>
    %154 = vector.shape_cast %153 : vector<1x32x16xf32> to vector<32x16xf32>
    %cst_80 = arith.constant dense<0.000000e+00> : vector<32x512xf32>
    %155 = tpu.matmul %154, %152, %cst_80 {dimension_numbers = #tpu.dot_dimension_numbers<[1], [0], [0], [1], [0, 0, 1, 1], [], []>} : vector<32x16xf32>, vector<16x512xf32>, vector<32x512xf32> -> vector<32x512xf32>
    %c3_81 = arith.constant 3 : index
    %c0_82 = arith.constant 0 : index
    %c0_83 = arith.constant 0 : index
    %156 = vector.load %arg10[%c3_81, %c0_82, %c0_83] : memref<4x32x1xf32, #tpu.memory_space<vmem>>, vector<1x32x1xf32>
    %157 = vector.shape_cast %156 : vector<1x32x1xf32> to vector<32x1xf32>
    %158 = vector.broadcast %157 : vector<32x1xf32> to vector<32x512xf32>
    %159 = arith.addf %155, %158 : vector<32x512xf32>
    %160 = vector.extract_strided_slice %159 {offsets = [0, 0], sizes = [16, 512], strides = [1, 1]} : vector<32x512xf32> to vector<16x512xf32>
    %161 = arith.addf %127, %160 : vector<16x512xf32>
    %cst_84 = arith.constant 5.000000e-01 : f32
    %162 = vector.broadcast %cst_84 : f32 to vector<16x512xf32>
    %163 = arith.mulf %161, %162 : vector<16x512xf32>
    %cst_85 = arith.constant 0.000000e+00 : f32
    %164 = vector.broadcast %cst_85 : f32 to vector<16x512xf32>
    %165 = arith.maximumf %163, %164 : vector<16x512xf32>
    %c0_86 = arith.constant 0 : index
    %c0_87 = arith.constant 0 : index
    %166 = vector.load %arg11[%c0_86, %c0_87] : memref<16x16xf32, #tpu.memory_space<vmem>>, vector<16x16xf32>
    %cst_88 = arith.constant dense<0.000000e+00> : vector<16x512xf32>
    %167 = tpu.matmul %166, %165, %cst_88 {dimension_numbers = #tpu.dot_dimension_numbers<[1], [0], [0], [1], [0, 0, 1, 1], [], []>} : vector<16x16xf32>, vector<16x512xf32>, vector<16x512xf32> -> vector<16x512xf32>
    %c0_89 = arith.constant 0 : index
    %c0_90 = arith.constant 0 : index
    %168 = vector.load %arg12[%c0_89, %c0_90] : memref<16x1xf32, #tpu.memory_space<vmem>>, vector<16x1xf32>
    %169 = vector.broadcast %168 : vector<16x1xf32> to vector<16x512xf32>
    %170 = arith.addf %167, %169 : vector<16x512xf32>
    %cst_91 = arith.constant 0.000000e+00 : f32
    %171 = vector.broadcast %cst_91 : f32 to vector<16x512xf32>
    %172 = arith.maximumf %170, %171 : vector<16x512xf32>
    %c0_92 = arith.constant 0 : index
    %c0_93 = arith.constant 0 : index
    %173 = vector.load %arg13[%c0_92, %c0_93] : memref<1x16xf32, #tpu.memory_space<vmem>>, vector<1x16xf32>
    %cst_94 = arith.constant dense<0.000000e+00> : vector<1x512xf32>
    %174 = tpu.matmul %173, %172, %cst_94 {dimension_numbers = #tpu.dot_dimension_numbers<[1], [0], [0], [1], [0, 0, 1, 1], [], []>} : vector<1x16xf32>, vector<16x512xf32>, vector<1x512xf32> -> vector<1x512xf32>
    %c0_95 = arith.constant 0 : index
    %c0_96 = arith.constant 0 : index
    %175 = vector.load %arg14[%c0_95, %c0_96] : memref<1x1xf32, #tpu.memory_space<vmem>>, vector<1x1xf32>
    %176 = vector.broadcast %175 : vector<1x1xf32> to vector<1x512xf32>
    %177 = arith.addf %174, %176 : vector<1x512xf32>
    %178 = vector.extract_strided_slice %177 {offsets = [0, 64], sizes = [1, 384], strides = [1, 1]} : vector<1x512xf32> to vector<1x384xf32>
    %c0_97 = arith.constant 0 : index
    %c0_98 = arith.constant 0 : index
    %c0_99 = arith.constant 0 : index
    %179 = vector.load %arg15[%c0_97, %c0_98, %c0_99] : memref<1x1x384xf32, #tpu.memory_space<vmem>>, vector<1x1x384xf32>
    %180 = vector.shape_cast %179 : vector<1x1x384xf32> to vector<1x384xf32>
    %181 = vector.shape_cast %178 : vector<1x384xf32> to vector<1x1x384xf32>
    tpu.vector_store %arg15[%c0_97, %c0_98, %c0_99], %181 {strides = array<i32>} : memref<1x1x384xf32, #tpu.memory_space<vmem>>, vector<1x1x384xf32>,
    return
  }
  func.func @transform_0(%arg0: i32, %arg1: i32) -> (i32, i32, i32, i32) {
    %c0_i32 = arith.constant 0 : i32
    %c0_i32_0 = arith.constant 0 : i32
    %c0_i32_1 = arith.constant 0 : i32
    return %arg0, %arg1, %c0_i32, %c0_i32_0 : i32, i32, i32, i32
  }
  func.func @transform_1(%arg0: i32, %arg1: i32) -> (i32, i32, i32, i32) {
    %c0_i32 = arith.constant 0 : i32
    %c0_i32_0 = arith.constant 0 : i32
    %c0_i32_1 = arith.constant 0 : i32
    return %arg0, %arg1, %c0_i32, %c0_i32_0 : i32, i32, i32, i32
  }
  func.func @transform_2(%arg0: i32, %arg1: i32) -> (i32, i32) {
    %c0_i32 = arith.constant 0 : i32
    %c0_i32_0 = arith.constant 0 : i32
    %c0_i32_1 = arith.constant 0 : i32
    return %c0_i32, %c0_i32_0 : i32, i32
  }
  func.func @transform_3(%arg0: i32, %arg1: i32) -> (i32, i32) {
    %c0_i32 = arith.constant 0 : i32
    %c0_i32_0 = arith.constant 0 : i32
    %c0_i32_1 = arith.constant 0 : i32
    return %c0_i32, %c0_i32_0 : i32, i32
  }
  func.func @transform_4(%arg0: i32, %arg1: i32) -> (i32, i32) {
    %c0_i32 = arith.constant 0 : i32
    %c0_i32_0 = arith.constant 0 : i32
    %c0_i32_1 = arith.constant 0 : i32
    return %c0_i32, %c0_i32_0 : i32, i32
  }
  func.func @transform_5(%arg0: i32, %arg1: i32) -> (i32, i32, i32) {
    %c0_i32 = arith.constant 0 : i32
    %c0_i32_0 = arith.constant 0 : i32
    %c0_i32_1 = arith.constant 0 : i32
    %c0_i32_2 = arith.constant 0 : i32
    return %c0_i32, %c0_i32_0, %c0_i32_1 : i32, i32, i32
  }
  func.func @transform_6(%arg0: i32, %arg1: i32) -> (i32, i32, i32) {
    %c0_i32 = arith.constant 0 : i32
    %c0_i32_0 = arith.constant 0 : i32
    %c0_i32_1 = arith.constant 0 : i32
    %c0_i32_2 = arith.constant 0 : i32
    return %c0_i32, %c0_i32_0, %c0_i32_1 : i32, i32, i32
  }
  func.func @transform_7(%arg0: i32, %arg1: i32) -> (i32, i32, i32) {
    %c0_i32 = arith.constant 0 : i32
    %c0_i32_0 = arith.constant 0 : i32
    %c0_i32_1 = arith.constant 0 : i32
    %c0_i32_2 = arith.constant 0 : i32
    return %c0_i32, %c0_i32_0, %c0_i32_1 : i32, i32, i32
  }
  func.func @transform_8(%arg0: i32, %arg1: i32) -> (i32, i32, i32) {
    %c0_i32 = arith.constant 0 : i32
    %c0_i32_0 = arith.constant 0 : i32
    %c0_i32_1 = arith.constant 0 : i32
    %c0_i32_2 = arith.constant 0 : i32
    return %c0_i32, %c0_i32_0, %c0_i32_1 : i32, i32, i32
  }
  func.func @transform_9(%arg0: i32, %arg1: i32) -> (i32, i32) {
    %c0_i32 = arith.constant 0 : i32
    %c0_i32_0 = arith.constant 0 : i32
    %c0_i32_1 = arith.constant 0 : i32
    return %c0_i32, %c0_i32_0 : i32, i32
  }
  func.func @transform_10(%arg0: i32, %arg1: i32) -> (i32, i32) {
    %c0_i32 = arith.constant 0 : i32
    %c0_i32_0 = arith.constant 0 : i32
    %c0_i32_1 = arith.constant 0 : i32
    return %c0_i32, %c0_i32_0 : i32, i32
  }
  func.func @transform_11(%arg0: i32, %arg1: i32) -> (i32, i32) {
    %c0_i32 = arith.constant 0 : i32
    %c0_i32_0 = arith.constant 0 : i32
    %c0_i32_1 = arith.constant 0 : i32
    return %c0_i32, %c0_i32_0 : i32, i32
  }
  func.func @transform_12(%arg0: i32, %arg1: i32) -> (i32, i32) {
    %c0_i32 = arith.constant 0 : i32
    %c0_i32_0 = arith.constant 0 : i32
    %c0_i32_1 = arith.constant 0 : i32
    return %c0_i32, %c0_i32_0 : i32, i32
  }
  func.func @transform_13(%arg0: i32, %arg1: i32) -> (i32, i32, i32) {
    %c0_i32 = arith.constant 0 : i32
    %c0_i32_0 = arith.constant 0 : i32
    return %arg0, %c0_i32, %arg1 : i32, i32, i32
  }
}

</mosaic_0001>

<llo_original>
// kernel: _wavegan_pipeline.2
$region0: #{_wavegan_pipeline.2}
  #allocation0 [shape = 'u32[]', space=smem, size = 0x4, offset = 0x4, fixed_abs, tag = 'smem constant byte address 0x4 - core index']
  #allocation1 [shape = 'u32[144,128]{1,0:T(1,128)}', space=vmem, size = 0x12000, scoped, tag = 'internal scratch']
  %s0 = inlined_call_operand.vmem [shape: f32[2,64,128], index: 0, kind: input, shape index: {}]
  %s1 = inlined_call_operand.vmem [shape: f32[128,64], index: 1, kind: input, shape index: {}]
  %s2 = inlined_call_operand.vmem [shape: f32[16,64], index: 2, kind: input, shape index: {}]
  %s3 = inlined_call_operand.vmem [shape: f32[16,1], index: 3, kind: input, shape index: {}]
  %s4 = inlined_call_operand.vmem [shape: f32[16,1], index: 4, kind: input, shape index: {}]
  %s5 = inlined_call_operand.vmem [shape: f32[2,16,128], index: 5, kind: output, shape index: {}]
  %s6 = sld [smem:[#allocation0]]
  $region53: #{_wavegan_pipeline.2} parent=0
    _
  %s8 = ssub.s32 1, %s6
  %s9 = scalar_select 0, %s8, %s6
  loop: start=0, step=1, limit=4
  $region2: #{_wavegan_pipeline.2} parent=0 // loop_pre_header
    _
  $region3: #{_wavegan_pipeline.2} parent=0 // loop_header
    %s11 = sphi 0, %s15
    %p12 = scmp.ge.s32.totalorder %s11, 4
    %s18 = sphi 0, %s30
    %s19 = sphi 0, %s26
    %s20 = sphi 0, %s18
    %s21 = sphi 0, %s19
    %s22 = sphi 0, %s20
    %s23 = sphi 0, %s21
    %s35 = sphi 0, %s37
    %s38 = sphi 0, %s35
    %s39 = sphi 0, %s38
    %s55 = sphi 0, %s39
    %s59 = sphi 0, %s59
    %s61 = sphi 0, %s59
    %s62 = sphi 0, %s61
    %s76 = sphi 0, %s62
    %s80 = sphi 0, %s80
    %s82 = sphi 0, %s80
    %s83 = sphi 0, %s82
    %s97 = sphi 0, %s83
    %s101 = sphi 0, %s101
    %s103 = sphi 0, %s101
    %s104 = sphi 0, %s103
    %s118 = sphi 0, %s104
    %s122 = sphi 0, %s122
    %s124 = sphi 0, %s122
    %s125 = sphi 0, %s124
    %s139 = sphi 0, %s125
    %s147 = sphi 0, %s149
    %s150 = sphi 0, %s147
    %s151 = sphi 0, %s150
    %s167 = sphi 0, %s151
  $region4: #{_wavegan_pipeline.2} parent=0 // loop_header_branch
    %14 = sbr.rel (%p12) target = $region8
  $region5: #{_wavegan_pipeline.2} parent=0 // loop_body
    %s16 = ssub.s32 %s11, 1
    %s17 = ssub.s32 %s11, 2
    %s24 = sadd.s32 1, %s19
    %p25 = scmp.ge.s32.totalorder %s24, 1
    %s26 = scalar_select %p25, 0, %s24
    %s27 = sadd.s32 1, %s18
    %s28 = scalar_select %p25, %s27, %s18
    %p29 = scmp.ge.s32.totalorder %s28, 2
    %s30 = scalar_select %p29, 0, %s28
    %s31 = ssub.s32 %s18, %s30
    %s32 = ssub.s32 %s19, %s26
    %s33 = sor.u32 %s31, %s32
    %p34 = scmp.eq.s32.totalorder %s33, 0
    %s36 = sadd.s32 %s35, 1
    %s37 = scalar_select %p34, %s35, %s36
    %p40 = pneg %p34
    %p41 = scmp.eq.s32.totalorder %s11, 1
    %p42 = por %p40, %p41
    %p43 = scmp.ne.s32.totalorder %s35, %s38
    %p44 = scmp.eq.s32.totalorder %s11, 0
    %p45 = por %p43, %p44
    %p46 = scmp.ne.s32.totalorder %s35, %s38
    %p47 = scmp.eq.s32.totalorder %s16, 1
    %p48 = por %p46, %p47
    %p49 = scmp.ne.s32.totalorder %s38, %s39
    %p50 = scmp.eq.s32.totalorder %s16, 0
    %p51 = por %p49, %p50
    %p52 = scmp.ne.s32.totalorder %s38, %s39
    %p53 = scmp.eq.s32.totalorder %s17, 1
    %p54 = por %p52, %p53
    %p56 = scmp.ne.s32.totalorder %s39, %s55
    %p57 = scmp.eq.s32.totalorder %s17, 0
    %p58 = por %p56, %p57
    %s60 = sadd.s32 %s59, 1
    %p63 = scmp.eq.s32.totalorder %s11, 1
    %p64 = scmp.ne.s32.totalorder %s59, %s61
    %p65 = scmp.eq.s32.totalorder %s11, 0
    %p66 = por %p64, %p65
    %p67 = scmp.ne.s32.totalorder %s59, %s61
    %p68 = scmp.eq.s32.totalorder %s16, 1
    %p69 = por %p67, %p68
    %p70 = scmp.ne.s32.totalorder %s61, %s62
    %p71 = scmp.eq.s32.totalorder %s16, 0
    %p72 = por %p70, %p71
    %p73 = scmp.ne.s32.totalorder %s61, %s62
    %p74 = scmp.eq.s32.totalorder %s17, 1
    %p75 = por %p73, %p74
    %p77 = scmp.ne.s32.totalorder %s62, %s76
    %p78 = scmp.eq.s32.totalorder %s17, 0
    %p79 = por %p77, %p78
    %s81 = sadd.s32 %s80, 1
    %p84 = scmp.eq.s32.totalorder %s11, 1
    %p85 = scmp.ne.s32.totalorder %s80, %s82
    %p86 = scmp.eq.s32.totalorder %s11, 0
    %p87 = por %p85, %p86
    %p88 = scmp.ne.s32.totalorder %s80, %s82
    %p89 = scmp.eq.s32.totalorder %s16, 1
    %p90 = por %p88, %p89
    %p91 = scmp.ne.s32.totalorder %s82, %s83
    %p92 = scmp.eq.s32.totalorder %s16, 0
    %p93 = por %p91, %p92
    %p94 = scmp.ne.s32.totalorder %s82, %s83
    %p95 = scmp.eq.s32.totalorder %s17, 1
    %p96 = por %p94, %p95
    %p98 = scmp.ne.s32.totalorder %s83, %s97
    %p99 = scmp.eq.s32.totalorder %s17, 0
    %p100 = por %p98, %p99
    %s102 = sadd.s32 %s101, 1
    %p105 = scmp.eq.s32.totalorder %s11, 1
    %p106 = scmp.ne.s32.totalorder %s101, %s103
    %p107 = scmp.eq.s32.totalorder %s11, 0
    %p108 = por %p106, %p107
    %p109 = scmp.ne.s32.totalorder %s101, %s103
    %p110 = scmp.eq.s32.totalorder %s16, 1
    %p111 = por %p109, %p110
    %p112 = scmp.ne.s32.totalorder %s103, %s104
    %p113 = scmp.eq.s32.totalorder %s16, 0
    %p114 = por %p112, %p113
    %p115 = scmp.ne.s32.totalorder %s103, %s104
    %p116 = scmp.eq.s32.totalorder %s17, 1
    %p117 = por %p115, %p116
    %p119 = scmp.ne.s32.totalorder %s104, %s118
    %p120 = scmp.eq.s32.totalorder %s17, 0
    %p121 = por %p119, %p120
    %s123 = sadd.s32 %s122, 1
    %p126 = scmp.eq.s32.totalorder %s11, 1
    %p127 = scmp.ne.s32.totalorder %s122, %s124
    %p128 = scmp.eq.s32.totalorder %s11, 0
    %p129 = por %p127, %p128
    %p130 = scmp.ne.s32.totalorder %s122, %s124
    %p131 = scmp.eq.s32.totalorder %s16, 1
    %p132 = por %p130, %p131
    %p133 = scmp.ne.s32.totalorder %s124, %s125
    %p134 = scmp.eq.s32.totalorder %s16, 0
    %p135 = por %p133, %p134
    %p136 = scmp.ne.s32.totalorder %s124, %s125
    %p137 = scmp.eq.s32.totalorder %s17, 1
    %p138 = por %p136, %p137
    %p140 = scmp.ne.s32.totalorder %s125, %s139
    %p141 = scmp.eq.s32.totalorder %s17, 0
    %p142 = por %p140, %p141
    %s143 = ssub.s32 %s18, %s30
    %s144 = ssub.s32 %s19, %s26
    %s145 = sor.u32 %s143, %s144
    %p146 = scmp.eq.s32.totalorder %s145, 0
    %s148 = sadd.s32 %s147, 1
    %s149 = scalar_select %p146, %s147, %s148
    %p152 = pneg %p146
    %p153 = scmp.eq.s32.totalorder %s11, 1
    %p154 = por %p152, %p153
    %p155 = scmp.ne.s32.totalorder %s147, %s150
    %p156 = scmp.eq.s32.totalorder %s11, 0
    %p157 = por %p155, %p156
    %p158 = scmp.ne.s32.totalorder %s147, %s150
    %p159 = scmp.eq.s32.totalorder %s16, 1
    %p160 = por %p158, %p159
    %p161 = scmp.ne.s32.totalorder %s150, %s151
    %p162 = scmp.eq.s32.totalorder %s16, 0
    %p163 = por %p161, %p162
    %p164 = scmp.ne.s32.totalorder %s150, %s151
    %p165 = scmp.eq.s32.totalorder %s17, 1
    %p166 = por %p164, %p165
    %p168 = scmp.ne.s32.totalorder %s151, %s167
    %p169 = scmp.eq.s32.totalorder %s17, 0
    %p170 = por %p168, %p169
    %p171 = scmp.le.s32.totalorder 1, %s11
    %p172 = scmp.lt.s32.totalorder %s11, 3
    %p173 = pnand %p171, %p172
    %p174 = pneg %p173
    // Predicated region
    $region9: #{_wavegan_pipeline.2} parent=5 // pred_check
      _
    $region10: #{_wavegan_pipeline.2} parent=5 // pred_check_branch
      %176 = sbr.rel (%p173) target = $region12
    $region11: #{_wavegan_pipeline.2} parent=5 // pred_region
      %s177 = ssub.s32 %s11, 1
      // Predicated region
      $region13: #{_wavegan_pipeline.2} parent=11 // pred_check
        %p178 = pneg %p72
      $region14: #{_wavegan_pipeline.2} parent=11 // pred_check_branch
        %180 = sbr.rel (%p178) target = $region16
      $region15: #{_wavegan_pipeline.2} parent=11 // pred_region
        _
      $region16: #{_wavegan_pipeline.2} parent=11 // pred_fallthru
        _
      // Predicated region
      $region17: #{_wavegan_pipeline.2} parent=11 // pred_check
        %p181 = pneg %p93
      $region18: #{_wavegan_pipeline.2} parent=11 // pred_check_branch
        %183 = sbr.rel (%p181) target = $region20
      $region19: #{_wavegan_pipeline.2} parent=11 // pred_region
        _
      $region20: #{_wavegan_pipeline.2} parent=11 // pred_fallthru
        _
      // Predicated region
      $region21: #{_wavegan_pipeline.2} parent=11 // pred_check
        %p184 = pneg %p114
      $region22: #{_wavegan_pipeline.2} parent=11 // pred_check_branch
        %186 = sbr.rel (%p184) target = $region24
      $region23: #{_wavegan_pipeline.2} parent=11 // pred_region
        _
      $region24: #{_wavegan_pipeline.2} parent=11 // pred_fallthru
        _
      // Predicated region
      $region25: #{_wavegan_pipeline.2} parent=11 // pred_check
        %p187 = pneg %p135
      $region26: #{_wavegan_pipeline.2} parent=11 // pred_check_branch
        %189 = sbr.rel (%p187) target = $region28
      $region27: #{_wavegan_pipeline.2} parent=11 // pred_region
        _
      $region28: #{_wavegan_pipeline.2} parent=11 // pred_fallthru
        _
    $region12: #{_wavegan_pipeline.2} parent=5 // pred_fallthru
      _
    %p190 = scmp.lt.s32.totalorder %s11, 2
    // Predicated region
    $region29: #{_wavegan_pipeline.2} parent=5 // pred_check
      %p191 = pneg %p190
    $region30: #{_wavegan_pipeline.2} parent=5 // pred_check_branch
      %193 = sbr.rel (%p191) target = $region32
    $region31: #{_wavegan_pipeline.2} parent=5 // pred_region
      // Predicated region
      $region33: #{_wavegan_pipeline.2} parent=31 // pred_check
        %p194 = pneg %p45
      $region34: #{_wavegan_pipeline.2} parent=31 // pred_check_branch
        %196 = sbr.rel (%p194) target = $region36
      $region35: #{_wavegan_pipeline.2} parent=31 // pred_region
        %p197 = scmp.lt.s32.totalorder %s18, 1
        %s198 = scalar_select %p197, %s18, 1
        %p199 = scmp.lt.s32.totalorder %s19, 0
        %s200 = scalar_select %p199, %s19, 0
        %s201 = smul.addr %s198, 8
        %s202 = sadd.s32 %s200, %s201
        %s203 = smul.addr %s202, 8
        %s204 = scalar_lea.vmem %s0, %s203
      $region36: #{_wavegan_pipeline.2} parent=31 // pred_fallthru
        _
    $region32: #{_wavegan_pipeline.2} parent=5 // pred_fallthru
      _
    %p205 = scmp.le.s32.totalorder 1, %s11
    %p206 = scmp.lt.s32.totalorder %s11, 3
    %p207 = pnand %p205, %p206
    %p208 = pneg %p207
    // Predicated region
    $region37: #{_wavegan_pipeline.2} parent=5 // pred_check
      _
    $region38: #{_wavegan_pipeline.2} parent=5 // pred_check_branch
      %210 = sbr.rel (%p207) target = $region40
    $region39: #{_wavegan_pipeline.2} parent=5 // pred_region
      %s211 = ssub.s32 %s11, 1
      %p212 = scmp.lt.s32.totalorder %s20, 1
      %s213 = scalar_select %p212, %s20, 1
      %p214 = scmp.lt.s32.totalorder %s21, 0
      %s215 = scalar_select %p214, %s21, 0
      %s216 = smul.addr %s213, 8
      %s217 = sadd.s32 %s215, %s216
      %s218 = smul.addr %s217, 8
      %s219 = scalar_lea.vmem %s0, %s218
      %p220 = pneg %p51
      %p221 = pneg %p48
      %p222 = pneg %p72
      %p223 = pneg %p69
      %p224 = pneg %p93
      %p225 = pneg %p90
      %p226 = pneg %p114
      %p227 = pneg %p111
      %p228 = pneg %p135
      %p229 = pneg %p132
      %p230 = pneg %p163
      %p231 = pneg %p160
      %p232 = scmp.lt.s32.totalorder %s20, 1
      %s233 = scalar_select %p232, %s20, 1
      %p234 = scmp.lt.s32.totalorder %s21, 0
      %s235 = scalar_select %p234, %s21, 0
      %s236 = smul.addr %s233, 2
      %s237 = sadd.s32 %s235, %s236
      %s238 = smul.addr %s237, 8
      %s239 = scalar_lea.vmem %s5, %s238
      %p240 = scmp.lt.s32.totalorder %s20, 1
      %s241 = scalar_select %p240, %s20, 1
      %p242 = scmp.lt.s32.totalorder %s21, 0
      %s243 = scalar_select %p242, %s21, 0
      %s244 = smul.addr %s241, 8
      %s245 = sadd.s32 %s243, %s244
      %s246 = smul.addr %s245, 8
      %s247 = scalar_lea.vmem %s0, %s246
      %p248 = scmp.lt.s32.totalorder %s20, 1
      %s249 = scalar_select %p248, %s20, 1
      %p250 = scmp.lt.s32.totalorder %s21, 0
      %s251 = scalar_select %p250, %s21, 0
      %s252 = smul.addr %s249, 2
      %s253 = sadd.s32 %s251, %s252
      %s254 = smul.addr %s253, 8
      %s255 = scalar_lea.vmem %s5, %s254
      %v256 = vld [vmem:[%s247] sm:$0xff]
      %v257 = vld [vmem:[%s247 + $0x8] sm:$0xff]
      %v258 = vld [vmem:[%s247 + $0x10] sm:$0xff]
      %v259 = vld [vmem:[%s247 + $0x18] sm:$0xff]
      %v260 = vld [vmem:[%s247 + $0x20] sm:$0xff]
      %v261 = vld [vmem:[%s247 + $0x28] sm:$0xff]
      %v262 = vld [vmem:[%s247 + $0x30] sm:$0xff]
      %v263 = vld [vmem:[%s247 + $0x38] sm:$0xff]
      %v264 = vld [vmem:[%s1] sm:$0xff]
      %v265 = vld [vmem:[%s1 + $0x8] sm:$0xff]
      %v266 = vld [vmem:[%s1 + $0x10] sm:$0xff]
      %v267 = vld [vmem:[%s1 + $0x18] sm:$0xff]
      %v268 = vld [vmem:[%s1 + $0x20] sm:$0xff]
      %v269 = vld [vmem:[%s1 + $0x28] sm:$0xff]
      %v270 = vld [vmem:[%s1 + $0x30] sm:$0xff]
      %v271 = vld [vmem:[%s1 + $0x38] sm:$0xff]
      %v272 = vld [vmem:[%s1 + $0x40] sm:$0xff]
      %v273 = vld [vmem:[%s1 + $0x48] sm:$0xff]
      %v274 = vld [vmem:[%s1 + $0x50] sm:$0xff]
      %v275 = vld [vmem:[%s1 + $0x58] sm:$0xff]
      %v276 = vld [vmem:[%s1 + $0x60] sm:$0xff]
      %v277 = vld [vmem:[%s1 + $0x68] sm:$0xff]
      %v278 = vld [vmem:[%s1 + $0x70] sm:$0xff]
      %v279 = vld [vmem:[%s1 + $0x78] sm:$0xff]
      %vm280 = vcmask 523264
      %v282 = vsel %vm280, %v264, 0
      %v285 = vsel %vm280, %v265, 0
      %v288 = vsel %vm280, %v266, 0
      %v291 = vsel %vm280, %v267, 0
      %v294 = vsel %vm280, %v268, 0
      %v297 = vsel %vm280, %v269, 0
      %v300 = vsel %vm280, %v270, 0
      %v303 = vsel %vm280, %v271, 0
      %v306 = vsel %vm280, %v272, 0
      %v309 = vsel %vm280, %v273, 0
      %v312 = vsel %vm280, %v274, 0
      %v315 = vsel %vm280, %v275, 0
      %v318 = vsel %vm280, %v276, 0
      %v321 = vsel %vm280, %v277, 0
      %v324 = vsel %vm280, %v278, 0
      %v327 = vsel %vm280, %v279, 0
      %329 = vmatprep.subr.mxu0 0.0
      %330 = vmatpush1.msra.mxu0 %v256
      %331 = vmatprep.subr.mxu0 0.0
      %332 = vmatpush1.msra.mxu0 %v257
      %333 = vmatprep.subr.mxu0 0.0
      %334 = vmatpush1.msra.mxu0 %v258
      %335 = vmatprep.subr.mxu0 0.0
      %336 = vmatpush1.msra.mxu0 %v259
      %337 = vmatprep.subr.mxu0 0.0
      %338 = vmatpush1.msra.mxu0 %v260
      %339 = vmatprep.subr.mxu0 0.0
      %340 = vmatpush1.msra.mxu0 %v261
      %341 = vmatprep.subr.mxu0 0.0
      %342 = vmatpush1.msra.mxu0 %v262
      %343 = vmatprep.subr.mxu0 0.0
      %344 = vmatpush1.msra.mxu0 %v263
      %345 = vmatprep.subr.mxu0 0.0
      %346 = vmatpush1.msra.mxu0 0.0
      %347 = vmatprep.subr.mxu0 0.0
      %348 = vmatpush1.msra.mxu0 0.0
      %349 = vmatprep.subr.mxu0 0.0
      %350 = vmatpush1.msra.mxu0 0.0
      %351 = vmatprep.subr.mxu0 0.0
      %352 = vmatpush1.msra.mxu0 0.0
      %353 = vmatprep.subr.mxu0 0.0
      %354 = vmatpush1.msra.mxu0 0.0
      %355 = vmatprep.subr.mxu0 0.0
      %356 = vmatpush1.msra.mxu0 0.0
      %357 = vmatprep.subr.mxu0 0.0
      %358 = vmatpush1.msra.mxu0 0.0
      %359 = vmatprep.subr.mxu0 0.0
      %360 = vmatpush1.msra.mxu0 0.0
      %361 = vmatprep.subr.mxu0 0.0
      %362 = vmatpush1.msra.mxu0 0.0
      %363 = vmatprep.subr.mxu0 0.0
      %364 = vmatpush1.msra.mxu0 0.0
      %365 = vmatprep.subr.mxu0 0.0
      %366 = vmatpush1.msra.mxu0 0.0
      %367 = vmatprep.subr.mxu0 0.0
      %368 = vmatpush1.msra.mxu0 0.0
      %369 = vmatprep.subr.mxu0 0.0
      %370 = vmatpush1.msra.mxu0 0.0
      %371 = vmatprep.subr.mxu0 0.0
      %372 = vmatpush1.msra.mxu0 0.0
      %373 = vmatprep.subr.mxu0 0.0
      %374 = vmatpush1.msra.mxu0 0.0
      %375 = vmatprep.subr.mxu0 0.0
      %376 = vmatpush1.msra.mxu0 0.0
      %377 = vmatprep.subr.mxu0 0.0
      %378 = vmatpush1.msra.mxu0 0.0
      %379 = vmatprep.subr.mxu0 0.0
      %380 = vmatpush1.msra.mxu0 0.0
      %381 = vmatprep.subr.mxu0 0.0
      %382 = vmatpush1.msra.mxu0 0.0
      %383 = vmatprep.subr.mxu0 0.0
      %384 = vmatpush1.msra.mxu0 0.0
      %385 = vmatprep.subr.mxu0 0.0
      %386 = vmatpush1.msra.mxu0 0.0
      %387 = vmatprep.subr.mxu0 0.0
      %388 = vmatpush1.msra.mxu0 0.0
      %389 = vmatprep.subr.mxu0 0.0
      %390 = vmatpush1.msra.mxu0 0.0
      %391 = vmatprep.subr.mxu0 0.0
      %392 = vmatpush1.msra.mxu0 0.0
      %393 = vmatprep.mubr.f32.mxu0 0.0
      %394 = vmatmul.mubr.f32.gmra.mrb[0].mxu0 %v282
      %v395 = vpop.f32.mrb[0].mxu0
      %v396 = vadd.f32 0.0, %v395
      %v397 = vpop.f32.mrb[0].mxu0
      %398 = vmatprep.mubr.f32.mxu0 0.0
      %399 = vmatmul.mubr.f32.gmra.mrb[0].mxu0 %v285
      %v400 = vpop.f32.mrb[0].mxu0
      %v401 = vadd.f32 0.0, %v400
      %v402 = vpop.f32.mrb[0].mxu0
      %403 = vmatprep.mubr.f32.mxu0 0.0
      %404 = vmatmul.mubr.f32.gmra.mrb[0].mxu0 %v288
      %v405 = vpop.f32.mrb[0].mxu0
      %v406 = vadd.f32 0.0, %v405
      %v407 = vpop.f32.mrb[0].mxu0
      %408 = vmatprep.mubr.f32.mxu0 0.0
      %409 = vmatmul.mubr.f32.gmra.mrb[0].mxu0 %v291
      %v410 = vpop.f32.mrb[0].mxu0
      %v411 = vadd.f32 0.0, %v410
      %v412 = vpop.f32.mrb[0].mxu0
      %413 = vmatprep.mubr.f32.mxu0 0.0
      %414 = vmatmul.mubr.f32.gmra.mrb[0].mxu0 %v294
      %v415 = vpop.f32.mrb[0].mxu0
      %v416 = vadd.f32 0.0, %v415
      %v417 = vpop.f32.mrb[0].mxu0
      %418 = vmatprep.mubr.f32.mxu0 0.0
      %419 = vmatmul.mubr.f32.gmra.mrb[0].mxu0 %v297
      %v420 = vpop.f32.mrb[0].mxu0
      %v421 = vadd.f32 0.0, %v420
      %v422 = vpop.f32.mrb[0].mxu0
      %423 = vmatprep.mubr.f32.mxu0 0.0
      %424 = vmatmul.mubr.f32.gmra.mrb[0].mxu0 %v300
      %v425 = vpop.f32.mrb[0].mxu0
      %v426 = vadd.f32 0.0, %v425
      %v427 = vpop.f32.mrb[0].mxu0
      %428 = vmatprep.mubr.f32.mxu0 0.0
      %429 = vmatmul.mubr.f32.gmra.mrb[0].mxu0 %v303
      %v430 = vpop.f32.mrb[0].mxu0
      %v431 = vadd.f32 0.0, %v430
      %v432 = vpop.f32.mrb[0].mxu0
      %433 = vmatprep.mubr.f32.mxu0 0.0
      %434 = vmatmul.mubr.f32.gmra.mrb[0].mxu0 %v306
      %v435 = vpop.f32.mrb[0].mxu0
      %v436 = vadd.f32 0.0, %v435
      %v437 = vpop.f32.mrb[0].mxu0
      %438 = vmatprep.mubr.f32.mxu0 0.0
      %439 = vmatmul.mubr.f32.gmra.mrb[0].mxu0 %v309
      %v440 = vpop.f32.mrb[0].mxu0
      %v441 = vadd.f32 0.0, %v440
      %v442 = vpop.f32.mrb[0].mxu0
      %443 = vmatprep.mubr.f32.mxu0 0.0
      %444 = vmatmul.mubr.f32.gmra.mrb[0].mxu0 %v312
      %v445 = vpop.f32.mrb[0].mxu0
      %v446 = vadd.f32 0.0, %v445
      %v447 = vpop.f32.mrb[0].mxu0
      %448 = vmatprep.mubr.f32.mxu0 0.0
      %449 = vmatmul.mubr.f32.gmra.mrb[0].mxu0 %v315
      %v450 = vpop.f32.mrb[0].mxu0
      %v451 = vadd.f32 0.0, %v450
      %v452 = vpop.f32.mrb[0].mxu0
      %453 = vmatprep.mubr.f32.mxu0 0.0
      %454 = vmatmul.mubr.f32.gmra.mrb[0].mxu0 %v318
      %v455 = vpop.f32.mrb[0].mxu0
      %v456 = vadd.f32 0.0, %v455
      %v457 = vpop.f32.mrb[0].mxu0
      %458 = vmatprep.mubr.f32.mxu0 0.0
      %459 = vmatmul.mubr.f32.gmra.mrb[0].mxu0 %v321
      %v460 = vpop.f32.mrb[0].mxu0
      %v461 = vadd.f32 0.0, %v460
      %v462 = vpop.f32.mrb[0].mxu0
      %463 = vmatprep.mubr.f32.mxu0 0.0
      %464 = vmatmul.mubr.f32.gmra.mrb[0].mxu0 %v324
      %v465 = vpop.f32.mrb[0].mxu0
      %v466 = vadd.f32 0.0, %v465
      %v467 = vpop.f32.mrb[0].mxu0
      %468 = vmatprep.mubr.f32.mxu0 0.0
      %469 = vmatmul.mubr.f32.gmra.mrb[0].mxu0 %v327
      %v470 = vpop.f32.mrb[0].mxu0
      %v471 = vadd.f32 0.0, %v470
      %v472 = vpop.f32.mrb[0].mxu0
      %473 = vdwg.mxu0
      %v474 = vmul.f32 %v396, %v396
      %v475 = vmul.f32 %v401, %v401
      %v476 = vmul.f32 %v406, %v406
      %v477 = vmul.f32 %v411, %v411
      %v478 = vmul.f32 %v416, %v416
      %v479 = vmul.f32 %v421, %v421
      %v480 = vmul.f32 %v426, %v426
      %v481 = vmul.f32 %v431, %v431
      %v482 = vmul.f32 %v436, %v436
      %v483 = vmul.f32 %v441, %v441
      %v484 = vmul.f32 %v446, %v446
      %v485 = vmul.f32 %v451, %v451
      %v486 = vmul.f32 %v456, %v456
      %v487 = vmul.f32 %v461, %v461
      %v488 = vmul.f32 %v466, %v466
      %v489 = vmul.f32 %v471, %v471
      %v490 = vadd.f32 %v474, %v482
      %v491 = vadd.f32 %v475, %v483
      %v492 = vadd.f32 %v476, %v484
      %v493 = vadd.f32 %v477, %v485
      %v494 = vadd.f32 %v478, %v486
      %v495 = vadd.f32 %v479, %v487
      %v496 = vadd.f32 %v480, %v488
      %v497 = vadd.f32 %v481, %v489
      %v498 = vrsqrt.pop %v490
      %v499 = vmul.f32 %v490, %v498
      %vm500 = vcmp.eq.f32.partialorder %v490, inf
      %v501 = vsel %vm500, %v490, %v499
      %vm502 = vcmp.eq.f32.partialorder %v490, 0.0
      %v503 = vand.u32 %v490, 2147483648
      %v504 = vsel %vm502, %v503, %v501
      %v505 = vrsqrt.pop %v491
      %v506 = vmul.f32 %v491, %v505
      %vm507 = vcmp.eq.f32.partialorder %v491, inf
      %v508 = vsel %vm507, %v491, %v506
      %vm509 = vcmp.eq.f32.partialorder %v491, 0.0
      %v510 = vand.u32 %v491, 2147483648
      %v511 = vsel %vm509, %v510, %v508
      %v512 = vrsqrt.pop %v492
      %v513 = vmul.f32 %v492, %v512
      %vm514 = vcmp.eq.f32.partialorder %v492, inf
      %v515 = vsel %vm514, %v492, %v513
      %vm516 = vcmp.eq.f32.partialorder %v492, 0.0
      %v517 = vand.u32 %v492, 2147483648
      %v518 = vsel %vm516, %v517, %v515
      %v519 = vrsqrt.pop %v493
      %v520 = vmul.f32 %v493, %v519
      %vm521 = vcmp.eq.f32.partialorder %v493, inf
      %v522 = vsel %vm521, %v493, %v520
      %vm523 = vcmp.eq.f32.partialorder %v493, 0.0
      %v524 = vand.u32 %v493, 2147483648
      %v525 = vsel %vm523, %v524, %v522
      %v526 = vrsqrt.pop %v494
      %v527 = vmul.f32 %v494, %v526
      %vm528 = vcmp.eq.f32.partialorder %v494, inf
      %v529 = vsel %vm528, %v494, %v527
      %vm530 = vcmp.eq.f32.partialorder %v494, 0.0
      %v531 = vand.u32 %v494, 2147483648
      %v532 = vsel %vm530, %v531, %v529
      %v533 = vrsqrt.pop %v495
      %v534 = vmul.f32 %v495, %v533
      %vm535 = vcmp.eq.f32.partialorder %v495, inf
      %v536 = vsel %vm535, %v495, %v534
      %vm537 = vcmp.eq.f32.partialorder %v495, 0.0
      %v538 = vand.u32 %v495, 2147483648
      %v539 = vsel %vm537, %v538, %v536
      %v540 = vrsqrt.pop %v496
      %v541 = vmul.f32 %v496, %v540
      %vm542 = vcmp.eq.f32.partialorder %v496, inf
      %v543 = vsel %vm542, %v496, %v541
      %vm544 = vcmp.eq.f32.partialorder %v496, 0.0
      %v545 = vand.u32 %v496, 2147483648
      %v546 = vsel %vm544, %v545, %v543
      %v547 = vrsqrt.pop %v497
      %v548 = vmul.f32 %v497, %v547
      %vm549 = vcmp.eq.f32.partialorder %v497, inf
      %v550 = vsel %vm549, %v497, %v548
      %vm551 = vcmp.eq.f32.partialorder %v497, 0.0
      %v552 = vand.u32 %v497, 2147483648
      %v553 = vsel %vm551, %v552, %v550
      %v554 = vld [vmem:[%s2] sm:$0xff]
      %v555 = vld [vmem:[%s2 + $0x8] sm:$0xff]
      %v557 = vsel %vm280, %v554, 0
      %v560 = vsel %vm280, %v555, 0
      %562 = vmatprep.subr.mxu0 0.0
      %563 = vmatpush1.msra.mxu0 %v504
      %564 = vmatprep.subr.mxu0 0.0
      %565 = vmatpush1.msra.mxu0 %v511
      %566 = vmatprep.subr.mxu0 0.0
      %567 = vmatpush1.msra.mxu0 %v518
      %568 = vmatprep.subr.mxu0 0.0
      %569 = vmatpush1.msra.mxu0 %v525
      %570 = vmatprep.subr.mxu0 0.0
      %571 = vmatpush1.msra.mxu0 %v532
      %572 = vmatprep.subr.mxu0 0.0
      %573 = vmatpush1.msra.mxu0 %v539
      %574 = vmatprep.subr.mxu0 0.0
      %575 = vmatpush1.msra.mxu0 %v546
      %576 = vmatprep.subr.mxu0 0.0
      %577 = vmatpush1.msra.mxu0 %v553
      %578 = vmatprep.subr.mxu0 0.0
      %579 = vmatpush1.msra.mxu0 0.0
      %580 = vmatprep.subr.mxu0 0.0
      %581 = vmatpush1.msra.mxu0 0.0
      %582 = vmatprep.subr.mxu0 0.0
      %583 = vmatpush1.msra.mxu0 0.0
      %584 = vmatprep.subr.mxu0 0.0
      %585 = vmatpush1.msra.mxu0 0.0
      %586 = vmatprep.subr.mxu0 0.0
      %587 = vmatpush1.msra.mxu0 0.0
      %588 = vmatprep.subr.mxu0 0.0
      %589 = vmatpush1.msra.mxu0 0.0
      %590 = vmatprep.subr.mxu0 0.0
      %591 = vmatpush1.msra.mxu0 0.0
      %592 = vmatprep.subr.mxu0 0.0
      %593 = vmatpush1.msra.mxu0 0.0
      %594 = vmatprep.subr.mxu0 0.0
      %595 = vmatpush1.msra.mxu0 0.0
      %596 = vmatprep.subr.mxu0 0.0
      %597 = vmatpush1.msra.mxu0 0.0
      %598 = vmatprep.subr.mxu0 0.0
      %599 = vmatpush1.msra.mxu0 0.0
      %600 = vmatprep.subr.mxu0 0.0
      %601 = vmatpush1.msra.mxu0 0.0
      %602 = vmatprep.subr.mxu0 0.0
      %603 = vmatpush1.msra.mxu0 0.0
      %604 = vmatprep.subr.mxu0 0.0
      %605 = vmatpush1.msra.mxu0 0.0
      %606 = vmatprep.subr.mxu0 0.0
      %607 = vmatpush1.msra.mxu0 0.0
      %608 = vmatprep.subr.mxu0 0.0
      %609 = vmatpush1.msra.mxu0 0.0
      %610 = vmatprep.subr.mxu0 0.0
      %611 = vmatpush1.msra.mxu0 0.0
      %612 = vmatprep.subr.mxu0 0.0
      %613 = vmatpush1.msra.mxu0 0.0
      %614 = vmatprep.subr.mxu0 0.0
      %615 = vmatpush1.msra.mxu0 0.0
      %616 = vmatprep.subr.mxu0 0.0
      %617 = vmatpush1.msra.mxu0 0.0
      %618 = vmatprep.subr.mxu0 0.0
      %619 = vmatpush1.msra.mxu0 0.0
      %620 = vmatprep.subr.mxu0 0.0
      %621 = vmatpush1.msra.mxu0 0.0
      %622 = vmatprep.subr.mxu0 0.0
      %623 = vmatpush1.msra.mxu0 0.0
      %624 = vmatprep.subr.mxu0 0.0
      %625 = vmatpush1.msra.mxu0 0.0
      %626 = vmatprep.mubr.f32.mxu0 0.0
      %627 = vmatmul.mubr.f32.gmra.mrb[0].mxu0 %v557
      %v628 = vpop.f32.mrb[0].mxu0
      %v629 = vadd.f32 0.0, %v628
      %v630 = vpop.f32.mrb[0].mxu0
      %631 = vmatprep.mubr.f32.mxu0 0.0
      %632 = vmatmul.mubr.f32.gmra.mrb[0].mxu0 %v560
      %v633 = vpop.f32.mrb[0].mxu0
      %v634 = vadd.f32 0.0, %v633
      %v635 = vpop.f32.mrb[0].mxu0
      %636 = vdwg.mxu0
      %v637 = vmax.f32 %v629, 1e-10
      %v638 = vmax.f32 %v634, 1e-10
      %v639 = vlog2.pop %v637
      %v640 = vmul.f32 %v639, 0.6931472
      %v641 = vlog2.pop %v638
      %v642 = vmul.f32 %v641, 0.6931472
      %v643 = vmul.f32 %v640, 0.4342945
      %v644 = vmul.f32 %v642, 0.4342945
      %v645 = vld [vmem:[%s3] sm:$0xff]
      %v646 = vld [vmem:[%s3 + $0x8] sm:$0xff]
      %648 = vset.pattern.permute.xlu0 0
      %649 = vperm.xlu0 %648, %v645
      %v650 = vpop.permute.xlu0 %649
      %653 = vset.pattern.permute.xlu0 0
      %654 = vperm.xlu0 %653, %v646
      %v655 = vpop.permute.xlu0 %654
      %v657 = vsub.f32 %v643, %v650
      %v658 = vsub.f32 %v644, %v655
      %v659 = vld [vmem:[%s4] sm:$0xff]
      %v660 = vld [vmem:[%s4 + $0x8] sm:$0xff]
      %662 = vset.pattern.permute.xlu0 0
      %663 = vperm.xlu0 %662, %v659
      %v664 = vpop.permute.xlu0 %663
      %667 = vset.pattern.permute.xlu0 0
      %668 = vperm.xlu0 %667, %v660
      %v669 = vpop.permute.xlu0 %668
      %v671 = vmul.f32 %v657, %v664
      %v672 = vmul.f32 %v658, %v669
      %673 = vst [vmem:[%s255] sm:$0xff] %v671
      %674 = vst [vmem:[%s255 + $0x8] sm:$0xff] %v672
      %p675 = scmp.lt.s32.totalorder %s20, 1
      %s676 = scalar_select %p675, %s20, 1
      %p677 = scmp.lt.s32.totalorder %s21, 0
      %s678 = scalar_select %p677, %s21, 0
      %s679 = smul.addr %s676, 2
      %s680 = sadd.s32 %s678, %s679
      %s681 = smul.addr %s680, 8
      %s682 = scalar_lea.vmem %s5, %s681
      // Predicated region
      $region41: #{_wavegan_pipeline.2} parent=39 // pred_check
        %p683 = pneg %p160
      $region42: #{_wavegan_pipeline.2} parent=39 // pred_check_branch
        %685 = sbr.rel (%p683) target = $region44
      $region43: #{_wavegan_pipeline.2} parent=39 // pred_region
        _
      $region44: #{_wavegan_pipeline.2} parent=39 // pred_fallthru
        _
    $region40: #{_wavegan_pipeline.2} parent=5 // pred_fallthru
      _
    %p686 = scmp.le.s32.totalorder 2, %s11
    // Predicated region
    $region45: #{_wavegan_pipeline.2} parent=5 // pred_check
      %p687 = pneg %p686
    $region46: #{_wavegan_pipeline.2} parent=5 // pred_check_branch
      %689 = sbr.rel (%p687) target = $region48
    $region47: #{_wavegan_pipeline.2} parent=5 // pred_region
      %s690 = ssub.s32 %s11, 2
      // Predicated region
      $region49: #{_wavegan_pipeline.2} parent=47 // pred_check
        %p691 = pneg %p166
      $region50: #{_wavegan_pipeline.2} parent=47 // pred_check_branch
        %693 = sbr.rel (%p691) target = $region52
      $region51: #{_wavegan_pipeline.2} parent=47 // pred_region
        %p694 = scmp.lt.s32.totalorder %s22, 1
        %s695 = scalar_select %p694, %s22, 1
        %p696 = scmp.lt.s32.totalorder %s23, 0
        %s697 = scalar_select %p696, %s23, 0
        %s698 = smul.addr %s695, 2
        %s699 = sadd.s32 %s697, %s698
        %s700 = smul.addr %s699, 8
        %s701 = scalar_lea.vmem %s5, %s700
      $region52: #{_wavegan_pipeline.2} parent=47 // pred_fallthru
        _
    $region48: #{_wavegan_pipeline.2} parent=5 // pred_fallthru
      _
  $region6: #{_wavegan_pipeline.2} parent=0 // loop_footer
    %s15 = sadd.s32 1, %s11
  $region7: #{_wavegan_pipeline.2} parent=0 // loop_footer_branch
    %10 = sbr.rel target = $region3
  $region8: #{_wavegan_pipeline.2} parent=0 // loop_exit
    _

// kernel: _wavegan_pipeline.3
$region0: #{_wavegan_pipeline.3}
  #allocation0 [shape = 'u32[]', space=smem, size = 0x4, offset = 0x4, fixed_abs, tag = 'smem constant byte address 0x4 - core index']
  #allocation1 [shape = 'u32[144,128]{1,0:T(1,128)}', space=vmem, size = 0x12000, scoped, tag = 'internal scratch']
  #allocation2 [shape = 'f32[1,1]{1,0:T(1,128)S(1)}', space=vmem, size = 0x200, scoped, tag = 'scoped memory for _wavegan_pipeline.3']
  %s0 = inlined_call_operand.vmem [shape: f32[2,1,1,512], index: 0, kind: input, shape index: {}]
  %s1 = inlined_call_operand.vmem [shape: f32[2,1,16,32], index: 1, kind: input, shape index: {}]
  %s2 = inlined_call_operand.vmem [shape: f32[32,512], index: 2, kind: input, shape index: {}]
  %s3 = inlined_call_operand.vmem [shape: f32[16,1], index: 3, kind: input, shape index: {}]
  %s4 = inlined_call_operand.vmem [shape: f32[16,1], index: 4, kind: input, shape index: {}]
  %s5 = inlined_call_operand.vmem [shape: f32[4,32,64], index: 5, kind: input, shape index: {}]
  %s6 = inlined_call_operand.vmem [shape: f32[4,32,1], index: 6, kind: input, shape index: {}]
  %s7 = inlined_call_operand.vmem [shape: f32[4,32,16], index: 7, kind: input, shape index: {}]
  %s8 = inlined_call_operand.vmem [shape: f32[4,32,1], index: 8, kind: input, shape index: {}]
  %s9 = inlined_call_operand.vmem [shape: f32[16,16], index: 9, kind: input, shape index: {}]
  %s10 = inlined_call_operand.vmem [shape: f32[16,1], index: 10, kind: input, shape index: {}]
  %s11 = inlined_call_operand.vmem [shape: f32[1,16], index: 11, kind: input, shape index: {}]
  %s12 = inlined_call_operand.<no memory space> [shape: f32[1,1], index: 12, kind: input, shape index: {}]
  %s13 = inlined_call_operand.vmem [shape: f32[2,1,384], index: 13, kind: output, shape index: {}]
  %s14 = sld [smem:[#allocation0]]
  $region85: #{_wavegan_pipeline.3} parent=0
    _
  %s16 = ssub.s32 1, %s14
  %s17 = scalar_select 0, %s16, %s14
  %v18 = vstv %s12
  %19 = vst [vmem:[#allocation2] sm:$0x1] %v18
  loop: start=0, step=1, limit=4
  $region2: #{_wavegan_pipeline.3} parent=0 // loop_pre_header
    _
  $region3: #{_wavegan_pipeline.3} parent=0 // loop_header
    %s21 = sphi 0, %s25
    %p22 = scmp.ge.s32.totalorder %s21, 4
    %s28 = sphi 0, %s40
    %s29 = sphi 0, %s36
    %s30 = sphi 0, %s28
    %s31 = sphi 0, %s29
    %s32 = sphi 0, %s30
    %s33 = sphi 0, %s31
    %s45 = sphi 0, %s47
    %s48 = sphi 0, %s45
    %s49 = sphi 0, %s48
    %s65 = sphi 0, %s49
    %s73 = sphi 0, %s75
    %s76 = sphi 0, %s73
    %s77 = sphi 0, %s76
    %s93 = sphi 0, %s77
    %s97 = sphi 0, %s97
    %s99 = sphi 0, %s97
    %s100 = sphi 0, %s99
    %s114 = sphi 0, %s100
    %s118 = sphi 0, %s118
    %s120 = sphi 0, %s118
    %s121 = sphi 0, %s120
    %s135 = sphi 0, %s121
    %s139 = sphi 0, %s139
    %s141 = sphi 0, %s139
    %s142 = sphi 0, %s141
    %s156 = sphi 0, %s142
    %s160 = sphi 0, %s160
    %s162 = sphi 0, %s160
    %s163 = sphi 0, %s162
    %s177 = sphi 0, %s163
    %s181 = sphi 0, %s181
    %s183 = sphi 0, %s181
    %s184 = sphi 0, %s183
    %s198 = sphi 0, %s184
    %s202 = sphi 0, %s202
    %s204 = sphi 0, %s202
    %s205 = sphi 0, %s204
    %s219 = sphi 0, %s205
    %s223 = sphi 0, %s223
    %s225 = sphi 0, %s223
    %s226 = sphi 0, %s225
    %s240 = sphi 0, %s226
    %s244 = sphi 0, %s244
    %s246 = sphi 0, %s244
    %s247 = sphi 0, %s246
    %s261 = sphi 0, %s247
    %s265 = sphi 0, %s265
    %s267 = sphi 0, %s265
    %s268 = sphi 0, %s267
    %s282 = sphi 0, %s268
    %s286 = sphi 0, %s286
    %s288 = sphi 0, %s286
    %s289 = sphi 0, %s288
    %s303 = sphi 0, %s289
    %s307 = sphi 0, %s307
    %s309 = sphi 0, %s307
    %s310 = sphi 0, %s309
    %s324 = sphi 0, %s310
    %s332 = sphi 0, %s334
    %s335 = sphi 0, %s332
    %s336 = sphi 0, %s335
    %s352 = sphi 0, %s336
  $region4: #{_wavegan_pipeline.3} parent=0 // loop_header_branch
    %24 = sbr.rel (%p22) target = $region8
  $region5: #{_wavegan_pipeline.3} parent=0 // loop_body
    %s26 = ssub.s32 %s21, 1
    %s27 = ssub.s32 %s21, 2
    %s34 = sadd.s32 1, %s29
    %p35 = scmp.ge.s32.totalorder %s34, 1
    %s36 = scalar_select %p35, 0, %s34
    %s37 = sadd.s32 1, %s28
    %s38 = scalar_select %p35, %s37, %s28
    %p39 = scmp.ge.s32.totalorder %s38, 2
    %s40 = scalar_select %p39, 0, %s38
    %s41 = ssub.s32 %s28, %s40
    %s42 = ssub.s32 %s29, %s36
    %s43 = sor.u32 %s41, %s42
    %p44 = scmp.eq.s32.totalorder %s43, 0
    %s46 = sadd.s32 %s45, 1
    %s47 = scalar_select %p44, %s45, %s46
    %p50 = pneg %p44
    %p51 = scmp.eq.s32.totalorder %s21, 1
    %p52 = por %p50, %p51
    %p53 = scmp.ne.s32.totalorder %s45, %s48
    %p54 = scmp.eq.s32.totalorder %s21, 0
    %p55 = por %p53, %p54
    %p56 = scmp.ne.s32.totalorder %s45, %s48
    %p57 = scmp.eq.s32.totalorder %s26, 1
    %p58 = por %p56, %p57
    %p59 = scmp.ne.s32.totalorder %s48, %s49
    %p60 = scmp.eq.s32.totalorder %s26, 0
    %p61 = por %p59, %p60
    %p62 = scmp.ne.s32.totalorder %s48, %s49
    %p63 = scmp.eq.s32.totalorder %s27, 1
    %p64 = por %p62, %p63
    %p66 = scmp.ne.s32.totalorder %s49, %s65
    %p67 = scmp.eq.s32.totalorder %s27, 0
    %p68 = por %p66, %p67
    %s69 = ssub.s32 %s28, %s40
    %s70 = ssub.s32 %s29, %s36
    %s71 = sor.u32 %s69, %s70
    %p72 = scmp.eq.s32.totalorder %s71, 0
    %s74 = sadd.s32 %s73, 1
    %s75 = scalar_select %p72, %s73, %s74
    %p78 = pneg %p72
    %p79 = scmp.eq.s32.totalorder %s21, 1
    %p80 = por %p78, %p79
    %p81 = scmp.ne.s32.totalorder %s73, %s76
    %p82 = scmp.eq.s32.totalorder %s21, 0
    %p83 = por %p81, %p82
    %p84 = scmp.ne.s32.totalorder %s73, %s76
    %p85 = scmp.eq.s32.totalorder %s26, 1
    %p86 = por %p84, %p85
    %p87 = scmp.ne.s32.totalorder %s76, %s77
    %p88 = scmp.eq.s32.totalorder %s26, 0
    %p89 = por %p87, %p88
    %p90 = scmp.ne.s32.totalorder %s76, %s77
    %p91 = scmp.eq.s32.totalorder %s27, 1
    %p92 = por %p90, %p91
    %p94 = scmp.ne.s32.totalorder %s77, %s93
    %p95 = scmp.eq.s32.totalorder %s27, 0
    %p96 = por %p94, %p95
    %s98 = sadd.s32 %s97, 1
    %p101 = scmp.eq.s32.totalorder %s21, 1
    %p102 = scmp.ne.s32.totalorder %s97, %s99
    %p103 = scmp.eq.s32.totalorder %s21, 0
    %p104 = por %p102, %p103
    %p105 = scmp.ne.s32.totalorder %s97, %s99
    %p106 = scmp.eq.s32.totalorder %s26, 1
    %p107 = por %p105, %p106
    %p108 = scmp.ne.s32.totalorder %s99, %s100
    %p109 = scmp.eq.s32.totalorder %s26, 0
    %p110 = por %p108, %p109
    %p111 = scmp.ne.s32.totalorder %s99, %s100
    %p112 = scmp.eq.s32.totalorder %s27, 1
    %p113 = por %p111, %p112
    %p115 = scmp.ne.s32.totalorder %s100, %s114
    %p116 = scmp.eq.s32.totalorder %s27, 0
    %p117 = por %p115, %p116
    %s119 = sadd.s32 %s118, 1
    %p122 = scmp.eq.s32.totalorder %s21, 1
    %p123 = scmp.ne.s32.totalorder %s118, %s120
    %p124 = scmp.eq.s32.totalorder %s21, 0
    %p125 = por %p123, %p124
    %p126 = scmp.ne.s32.totalorder %s118, %s120
    %p127 = scmp.eq.s32.totalorder %s26, 1
    %p128 = por %p126, %p127
    %p129 = scmp.ne.s32.totalorder %s120, %s121
    %p130 = scmp.eq.s32.totalorder %s26, 0
    %p131 = por %p129, %p130
    %p132 = scmp.ne.s32.totalorder %s120, %s121
    %p133 = scmp.eq.s32.totalorder %s27, 1
    %p134 = por %p132, %p133
    %p136 = scmp.ne.s32.totalorder %s121, %s135
    %p137 = scmp.eq.s32.totalorder %s27, 0
    %p138 = por %p136, %p137
    %s140 = sadd.s32 %s139, 1
    %p143 = scmp.eq.s32.totalorder %s21, 1
    %p144 = scmp.ne.s32.totalorder %s139, %s141
    %p145 = scmp.eq.s32.totalorder %s21, 0
    %p146 = por %p144, %p145
    %p147 = scmp.ne.s32.totalorder %s139, %s141
    %p148 = scmp.eq.s32.totalorder %s26, 1
    %p149 = por %p147, %p148
    %p150 = scmp.ne.s32.totalorder %s141, %s142
    %p151 = scmp.eq.s32.totalorder %s26, 0
    %p152 = por %p150, %p151
    %p153 = scmp.ne.s32.totalorder %s141, %s142
    %p154 = scmp.eq.s32.totalorder %s27, 1
    %p155 = por %p153, %p154
    %p157 = scmp.ne.s32.totalorder %s142, %s156
    %p158 = scmp.eq.s32.totalorder %s27, 0
    %p159 = por %p157, %p158
    %s161 = sadd.s32 %s160, 1
    %p164 = scmp.eq.s32.totalorder %s21, 1
    %p165 = scmp.ne.s32.totalorder %s160, %s162
    %p166 = scmp.eq.s32.totalorder %s21, 0
    %p167 = por %p165, %p166
    %p168 = scmp.ne.s32.totalorder %s160, %s162
    %p169 = scmp.eq.s32.totalorder %s26, 1
    %p170 = por %p168, %p169
    %p171 = scmp.ne.s32.totalorder %s162, %s163
    %p172 = scmp.eq.s32.totalorder %s26, 0
    %p173 = por %p171, %p172
    %p174 = scmp.ne.s32.totalorder %s162, %s163
    %p175 = scmp.eq.s32.totalorder %s27, 1
    %p176 = por %p174, %p175
    %p178 = scmp.ne.s32.totalorder %s163, %s177
    %p179 = scmp.eq.s32.totalorder %s27, 0
    %p180 = por %p178, %p179
    %s182 = sadd.s32 %s181, 1
    %p185 = scmp.eq.s32.totalorder %s21, 1
    %p186 = scmp.ne.s32.totalorder %s181, %s183
    %p187 = scmp.eq.s32.totalorder %s21, 0
    %p188 = por %p186, %p187
    %p189 = scmp.ne.s32.totalorder %s181, %s183
    %p190 = scmp.eq.s32.totalorder %s26, 1
    %p191 = por %p189, %p190
    %p192 = scmp.ne.s32.totalorder %s183, %s184
    %p193 = scmp.eq.s32.totalorder %s26, 0
    %p194 = por %p192, %p193
    %p195 = scmp.ne.s32.totalorder %s183, %s184
    %p196 = scmp.eq.s32.totalorder %s27, 1
    %p197 = por %p195, %p196
    %p199 = scmp.ne.s32.totalorder %s184, %s198
    %p200 = scmp.eq.s32.totalorder %s27, 0
    %p201 = por %p199, %p200
    %s203 = sadd.s32 %s202, 1
    %p206 = scmp.eq.s32.totalorder %s21, 1
    %p207 = scmp.ne.s32.totalorder %s202, %s204
    %p208 = scmp.eq.s32.totalorder %s21, 0
    %p209 = por %p207, %p208
    %p210 = scmp.ne.s32.totalorder %s202, %s204
    %p211 = scmp.eq.s32.totalorder %s26, 1
    %p212 = por %p210, %p211
    %p213 = scmp.ne.s32.totalorder %s204, %s205
    %p214 = scmp.eq.s32.totalorder %s26, 0
    %p215 = por %p213, %p214
    %p216 = scmp.ne.s32.totalorder %s204, %s205
    %p217 = scmp.eq.s32.totalorder %s27, 1
    %p218 = por %p216, %p217
    %p220 = scmp.ne.s32.totalorder %s205, %s219
    %p221 = scmp.eq.s32.totalorder %s27, 0
    %p222 = por %p220, %p221
    %s224 = sadd.s32 %s223, 1
    %p227 = scmp.eq.s32.totalorder %s21, 1
    %p228 = scmp.ne.s32.totalorder %s223, %s225
    %p229 = scmp.eq.s32.totalorder %s21, 0
    %p230 = por %p228, %p229
    %p231 = scmp.ne.s32.totalorder %s223, %s225
    %p232 = scmp.eq.s32.totalorder %s26, 1
    %p233 = por %p231, %p232
    %p234 = scmp.ne.s32.totalorder %s225, %s226
    %p235 = scmp.eq.s32.totalorder %s26, 0
    %p236 = por %p234, %p235
    %p237 = scmp.ne.s32.totalorder %s225, %s226
    %p238 = scmp.eq.s32.totalorder %s27, 1
    %p239 = por %p237, %p238
    %p241 = scmp.ne.s32.totalorder %s226, %s240
    %p242 = scmp.eq.s32.totalorder %s27, 0
    %p243 = por %p241, %p242
    %s245 = sadd.s32 %s244, 1
    %p248 = scmp.eq.s32.totalorder %s21, 1
    %p249 = scmp.ne.s32.totalorder %s244, %s246
    %p250 = scmp.eq.s32.totalorder %s21, 0
    %p251 = por %p249, %p250
    %p252 = scmp.ne.s32.totalorder %s244, %s246
    %p253 = scmp.eq.s32.totalorder %s26, 1
    %p254 = por %p252, %p253
    %p255 = scmp.ne.s32.totalorder %s246, %s247
    %p256 = scmp.eq.s32.totalorder %s26, 0
    %p257 = por %p255, %p256
    %p258 = scmp.ne.s32.totalorder %s246, %s247
    %p259 = scmp.eq.s32.totalorder %s27, 1
    %p260 = por %p258, %p259
    %p262 = scmp.ne.s32.totalorder %s247, %s261
    %p263 = scmp.eq.s32.totalorder %s27, 0
    %p264 = por %p262, %p263
    %s266 = sadd.s32 %s265, 1
    %p269 = scmp.eq.s32.totalorder %s21, 1
    %p270 = scmp.ne.s32.totalorder %s265, %s267
    %p271 = scmp.eq.s32.totalorder %s21, 0
    %p272 = por %p270, %p271
    %p273 = scmp.ne.s32.totalorder %s265, %s267
    %p274 = scmp.eq.s32.totalorder %s26, 1
    %p275 = por %p273, %p274
    %p276 = scmp.ne.s32.totalorder %s267, %s268
    %p277 = scmp.eq.s32.totalorder %s26, 0
    %p278 = por %p276, %p277
    %p279 = scmp.ne.s32.totalorder %s267, %s268
    %p280 = scmp.eq.s32.totalorder %s27, 1
    %p281 = por %p279, %p280
    %p283 = scmp.ne.s32.totalorder %s268, %s282
    %p284 = scmp.eq.s32.totalorder %s27, 0
    %p285 = por %p283, %p284
    %s287 = sadd.s32 %s286, 1
    %p290 = scmp.eq.s32.totalorder %s21, 1
    %p291 = scmp.ne.s32.totalorder %s286, %s288
    %p292 = scmp.eq.s32.totalorder %s21, 0
    %p293 = por %p291, %p292
    %p294 = scmp.ne.s32.totalorder %s286, %s288
    %p295 = scmp.eq.s32.totalorder %s26, 1
    %p296 = por %p294, %p295
    %p297 = scmp.ne.s32.totalorder %s288, %s289
    %p298 = scmp.eq.s32.totalorder %s26, 0
    %p299 = por %p297, %p298
    %p300 = scmp.ne.s32.totalorder %s288, %s289
    %p301 = scmp.eq.s32.totalorder %s27, 1
    %p302 = por %p300, %p301
    %p304 = scmp.ne.s32.totalorder %s289, %s303
    %p305 = scmp.eq.s32.totalorder %s27, 0
    %p306 = por %p304, %p305
    %s308 = sadd.s32 %s307, 1
    %p311 = scmp.eq.s32.totalorder %s21, 1
    %p312 = scmp.ne.s32.totalorder %s307, %s309
    %p313 = scmp.eq.s32.totalorder %s21, 0
    %p314 = por %p312, %p313
    %p315 = scmp.ne.s32.totalorder %s307, %s309
    %p316 = scmp.eq.s32.totalorder %s26, 1
    %p317 = por %p315, %p316
    %p318 = scmp.ne.s32.totalorder %s309, %s310
    %p319 = scmp.eq.s32.totalorder %s26, 0
    %p320 = por %p318, %p319
    %p321 = scmp.ne.s32.totalorder %s309, %s310
    %p322 = scmp.eq.s32.totalorder %s27, 1
    %p323 = por %p321, %p322
    %p325 = scmp.ne.s32.totalorder %s310, %s324
    %p326 = scmp.eq.s32.totalorder %s27, 0
    %p327 = por %p325, %p326
    %s328 = ssub.s32 %s28, %s40
    %s329 = ssub.s32 %s29, %s36
    %s330 = sor.u32 %s328, %s329
    %p331 = scmp.eq.s32.totalorder %s330, 0
    %s333 = sadd.s32 %s332, 1
    %s334 = scalar_select %p331, %s332, %s333
    %p337 = pneg %p331
    %p338 = scmp.eq.s32.totalorder %s21, 1
    %p339 = por %p337, %p338
    %p340 = scmp.ne.s32.totalorder %s332, %s335
    %p341 = scmp.eq.s32.totalorder %s21, 0
    %p342 = por %p340, %p341
    %p343 = scmp.ne.s32.totalorder %s332, %s335
    %p344 = scmp.eq.s32.totalorder %s26, 1
    %p345 = por %p343, %p344
    %p346 = scmp.ne.s32.totalorder %s335, %s336
    %p347 = scmp.eq.s32.totalorder %s26, 0
    %p348 = por %p346, %p347
    %p349 = scmp.ne.s32.totalorder %s335, %s336
    %p350 = scmp.eq.s32.totalorder %s27, 1
    %p351 = por %p349, %p350
    %p353 = scmp.ne.s32.totalorder %s336, %s352
    %p354 = scmp.eq.s32.totalorder %s27, 0
    %p355 = por %p353, %p354
    %p356 = scmp.le.s32.totalorder 1, %s21
    %p357 = scmp.lt.s32.totalorder %s21, 3
    %p358 = pnand %p356, %p357
    %p359 = pneg %p358
    // Predicated region
    $region9: #{_wavegan_pipeline.3} parent=5 // pred_check
      _
    $region10: #{_wavegan_pipeline.3} parent=5 // pred_check_branch
      %361 = sbr.rel (%p358) target = $region12
    $region11: #{_wavegan_pipeline.3} parent=5 // pred_region
      %s362 = ssub.s32 %s21, 1
      // Predicated region
      $region13: #{_wavegan_pipeline.3} parent=11 // pred_check
        %p363 = pneg %p110
      $region14: #{_wavegan_pipeline.3} parent=11 // pred_check_branch
        %365 = sbr.rel (%p363) target = $region16
      $region15: #{_wavegan_pipeline.3} parent=11 // pred_region
        _
      $region16: #{_wavegan_pipeline.3} parent=11 // pred_fallthru
        _
      // Predicated region
      $region17: #{_wavegan_pipeline.3} parent=11 // pred_check
        %p366 = pneg %p131
      $region18: #{_wavegan_pipeline.3} parent=11 // pred_check_branch
        %368 = sbr.rel (%p366) target = $region20
      $region19: #{_wavegan_pipeline.3} parent=11 // pred_region
        _
      $region20: #{_wavegan_pipeline.3} parent=11 // pred_fallthru
        _
      // Predicated region
      $region21: #{_wavegan_pipeline.3} parent=11 // pred_check
        %p369 = pneg %p152
      $region22: #{_wavegan_pipeline.3} parent=11 // pred_check_branch
        %371 = sbr.rel (%p369) target = $region24
      $region23: #{_wavegan_pipeline.3} parent=11 // pred_region
        _
      $region24: #{_wavegan_pipeline.3} parent=11 // pred_fallthru
        _
      // Predicated region
      $region25: #{_wavegan_pipeline.3} parent=11 // pred_check
        %p372 = pneg %p173
      $region26: #{_wavegan_pipeline.3} parent=11 // pred_check_branch
        %374 = sbr.rel (%p372) target = $region28
      $region27: #{_wavegan_pipeline.3} parent=11 // pred_region
        _
      $region28: #{_wavegan_pipeline.3} parent=11 // pred_fallthru
        _
      // Predicated region
      $region29: #{_wavegan_pipeline.3} parent=11 // pred_check
        %p375 = pneg %p194
      $region30: #{_wavegan_pipeline.3} parent=11 // pred_check_branch
        %377 = sbr.rel (%p375) target = $region32
      $region31: #{_wavegan_pipeline.3} parent=11 // pred_region
        _
      $region32: #{_wavegan_pipeline.3} parent=11 // pred_fallthru
        _
      // Predicated region
      $region33: #{_wavegan_pipeline.3} parent=11 // pred_check
        %p378 = pneg %p215
      $region34: #{_wavegan_pipeline.3} parent=11 // pred_check_branch
        %380 = sbr.rel (%p378) target = $region36
      $region35: #{_wavegan_pipeline.3} parent=11 // pred_region
        _
      $region36: #{_wavegan_pipeline.3} parent=11 // pred_fallthru
        _
      // Predicated region
      $region37: #{_wavegan_pipeline.3} parent=11 // pred_check
        %p381 = pneg %p236
      $region38: #{_wavegan_pipeline.3} parent=11 // pred_check_branch
        %383 = sbr.rel (%p381) target = $region40
      $region39: #{_wavegan_pipeline.3} parent=11 // pred_region
        _
      $region40: #{_wavegan_pipeline.3} parent=11 // pred_fallthru
        _
      // Predicated region
      $region41: #{_wavegan_pipeline.3} parent=11 // pred_check
        %p384 = pneg %p257
      $region42: #{_wavegan_pipeline.3} parent=11 // pred_check_branch
        %386 = sbr.rel (%p384) target = $region44
      $region43: #{_wavegan_pipeline.3} parent=11 // pred_region
        _
      $region44: #{_wavegan_pipeline.3} parent=11 // pred_fallthru
        _
      // Predicated region
      $region45: #{_wavegan_pipeline.3} parent=11 // pred_check
        %p387 = pneg %p278
      $region46: #{_wavegan_pipeline.3} parent=11 // pred_check_branch
        %389 = sbr.rel (%p387) target = $region48
      $region47: #{_wavegan_pipeline.3} parent=11 // pred_region
        _
      $region48: #{_wavegan_pipeline.3} parent=11 // pred_fallthru
        _
      // Predicated region
      $region49: #{_wavegan_pipeline.3} parent=11 // pred_check
        %p390 = pneg %p299
      $region50: #{_wavegan_pipeline.3} parent=11 // pred_check_branch
        %392 = sbr.rel (%p390) target = $region52
      $region51: #{_wavegan_pipeline.3} parent=11 // pred_region
        _
      $region52: #{_wavegan_pipeline.3} parent=11 // pred_fallthru
        _
      // Predicated region
      $region53: #{_wavegan_pipeline.3} parent=11 // pred_check
        %p393 = pneg %p320
      $region54: #{_wavegan_pipeline.3} parent=11 // pred_check_branch
        %395 = sbr.rel (%p393) target = $region56
      $region55: #{_wavegan_pipeline.3} parent=11 // pred_region
        _
      $region56: #{_wavegan_pipeline.3} parent=11 // pred_fallthru
        _
    $region12: #{_wavegan_pipeline.3} parent=5 // pred_fallthru
      _
    %p396 = scmp.lt.s32.totalorder %s21, 2
    // Predicated region
    $region57: #{_wavegan_pipeline.3} parent=5 // pred_check
      %p397 = pneg %p396
    $region58: #{_wavegan_pipeline.3} parent=5 // pred_check_branch
      %399 = sbr.rel (%p397) target = $region60
    $region59: #{_wavegan_pipeline.3} parent=5 // pred_region
      // Predicated region
      $region61: #{_wavegan_pipeline.3} parent=59 // pred_check
        %p400 = pneg %p55
      $region62: #{_wavegan_pipeline.3} parent=59 // pred_check_branch
        %402 = sbr.rel (%p400) target = $region64
      $region63: #{_wavegan_pipeline.3} parent=59 // pred_region
        %p403 = scmp.lt.s32.totalorder %s28, 1
        %s404 = scalar_select %p403, %s28, 1
        %p405 = scmp.lt.s32.totalorder %s29, 0
        %s406 = scalar_select %p405, %s29, 0
        %s407 = smul.addr %s406, 4
        %s408 = smul.addr %s404, 4
        %s409 = sadd.s32 %s407, %s408
        %s410 = scalar_lea.vmem %s0, %s409
      $region64: #{_wavegan_pipeline.3} parent=59 // pred_fallthru
        _
      // Predicated region
      $region65: #{_wavegan_pipeline.3} parent=59 // pred_check
        %p411 = pneg %p83
      $region66: #{_wavegan_pipeline.3} parent=59 // pred_check_branch
        %413 = sbr.rel (%p411) target = $region68
      $region67: #{_wavegan_pipeline.3} parent=59 // pred_region
        %p414 = scmp.lt.s32.totalorder %s28, 1
        %s415 = scalar_select %p414, %s28, 1
        %p416 = scmp.lt.s32.totalorder %s29, 0
        %s417 = scalar_select %p416, %s29, 0
        %s418 = smul.addr %s417, 2
        %s419 = smul.addr %s415, 2
        %s420 = sadd.s32 %s418, %s419
        %s421 = smul.addr %s420, 8
        %s422 = scalar_lea.vmem %s1, %s421
      $region68: #{_wavegan_pipeline.3} parent=59 // pred_fallthru
        _
    $region60: #{_wavegan_pipeline.3} parent=5 // pred_fallthru
      _
    %p423 = scmp.le.s32.totalorder 1, %s21
    %p424 = scmp.lt.s32.totalorder %s21, 3
    %p425 = pnand %p423, %p424
    %p426 = pneg %p425
    // Predicated region
    $region69: #{_wavegan_pipeline.3} parent=5 // pred_check
      _
    $region70: #{_wavegan_pipeline.3} parent=5 // pred_check_branch
      %428 = sbr.rel (%p425) target = $region72
    $region71: #{_wavegan_pipeline.3} parent=5 // pred_region
      %s429 = ssub.s32 %s21, 1
      %p430 = scmp.lt.s32.totalorder %s30, 1
      %s431 = scalar_select %p430, %s30, 1
      %p432 = scmp.lt.s32.totalorder %s31, 0
      %s433 = scalar_select %p432, %s31, 0
      %s434 = smul.addr %s433, 4
      %s435 = smul.addr %s431, 4
      %s436 = sadd.s32 %s434, %s435
      %s437 = scalar_lea.vmem %s0, %s436
      %p438 = pneg %p61
      %p439 = pneg %p58
      %p440 = scmp.lt.s32.totalorder %s30, 1
      %s441 = scalar_select %p440, %s30, 1
      %p442 = scmp.lt.s32.totalorder %s31, 0
      %s443 = scalar_select %p442, %s31, 0
      %s444 = smul.addr %s443, 2
      %s445 = smul.addr %s441, 2
      %s446 = sadd.s32 %s444, %s445
      %s447 = smul.addr %s446, 8
      %s448 = scalar_lea.vmem %s1, %s447
      %p449 = pneg %p89
      %p450 = pneg %p86
      %p451 = pneg %p110
      %p452 = pneg %p107
      %p453 = pneg %p131
      %p454 = pneg %p128
      %p455 = pneg %p152
      %p456 = pneg %p149
      %p457 = pneg %p173
      %p458 = pneg %p170
      %p459 = pneg %p194
      %p460 = pneg %p191
      %p461 = pneg %p215
      %p462 = pneg %p212
      %p463 = pneg %p236
      %p464 = pneg %p233
      %p465 = pneg %p257
      %p466 = pneg %p254
      %p467 = pneg %p278
      %p468 = pneg %p275
      %p469 = pneg %p299
      %p470 = pneg %p296
      %p471 = pneg %p320
      %p472 = pneg %p317
      %p473 = pneg %p348
      %p474 = pneg %p345
      %s475 = smul.u32 3, %s31
      %p476 = scmp.lt.s32.totalorder %s30, 1
      %s477 = scalar_select %p476, %s30, 1
      %p478 = scmp.lt.s32.totalorder %s475, 2
      %s479 = scalar_select %p478, %s475, 2
      %s480 = smul.addr %s477, 3
      %s481 = sadd.s32 %s479, %s480
      %s482 = scalar_lea.vmem %s13, %s481
      %p483 = scmp.lt.s32.totalorder %s30, 1
      %s484 = scalar_select %p483, %s30, 1
      %p485 = scmp.lt.s32.totalorder %s31, 0
      %s486 = scalar_select %p485, %s31, 0
      %s487 = smul.addr %s486, 4
      %s488 = smul.addr %s484, 4
      %s489 = sadd.s32 %s487, %s488
      %s490 = scalar_lea.vmem %s0, %s489
      %p491 = scmp.lt.s32.totalorder %s30, 1
      %s492 = scalar_select %p491, %s30, 1
      %p493 = scmp.lt.s32.totalorder %s31, 0
      %s494 = scalar_select %p493, %s31, 0
      %s495 = smul.addr %s494, 2
      %s496 = smul.addr %s492, 2
      %s497 = sadd.s32 %s495, %s496
      %s498 = smul.addr %s497, 8
      %s499 = scalar_lea.vmem %s1, %s498
      %s500 = smul.u32 3, %s31
      %p501 = scmp.lt.s32.totalorder %s30, 1
      %s502 = scalar_select %p501, %s30, 1
      %p503 = scmp.lt.s32.totalorder %s500, 2
      %s504 = scalar_select %p503, %s500, 2
      %s505 = smul.addr %s502, 3
      %s506 = sadd.s32 %s504, %s505
      %s507 = scalar_lea.vmem %s13, %s506
      %s508 = smul.u32 3, %s31
      %s509 = smul.u32 %s31, 384
      %s510 = ssub.s32 %s509, 64
      %v511 = vlaneseq
      %v512 = vand.u32 %v511, 127
      %v513 = vadd.s32 %v512, 128
      %v514 = vadd.s32 %v512, 256
      %v515 = vadd.s32 %v512, 384
      %v516 = vstv %s510
      %v517 = vadd.s32 %v516, %v512
      %v518 = vadd.s32 %v516, %v513
      %v519 = vadd.s32 %v516, %v514
      %v520 = vadd.s32 %v516, %v515
      %vm521 = vcmp.ge.s32.totalorder %v517, 0
      %vm522 = vcmp.ge.s32.totalorder %v518, 0
      %vm523 = vcmp.ge.s32.totalorder %v519, 0
      %vm524 = vcmp.ge.s32.totalorder %v520, 0
      %vm525 = vcmp.lt.s32.totalorder %v517, 272
      %vm526 = vcmp.lt.s32.totalorder %v518, 272
      %vm527 = vcmp.lt.s32.totalorder %v519, 272
      %vm528 = vcmp.lt.s32.totalorder %v520, 272
      %vm529 = vmand %vm521, %vm525
      %vm530 = vmand %vm522, %vm526
      %vm531 = vmand %vm523, %vm527
      %vm532 = vmand %vm524, %vm528
      %v533 = vsel %vm529, 1, 0
      %v534 = vsel %vm530, 1, 0
      %v535 = vsel %vm531, 1, 0
      %v536 = vsel %vm532, 1, 0
      %v537 = vcvt.s32.f32 %v533
      %v538 = vcvt.s32.f32 %v534
      %v539 = vcvt.s32.f32 %v535
      %v540 = vcvt.s32.f32 %v536
      %v541 = vmul.f32 %v537, 0.70710677
      %v542 = vmul.f32 %v538, 0.70710677
      %v543 = vmul.f32 %v539, 0.70710677
      %v544 = vmul.f32 %v540, 0.70710677
      %v545 = vld [vmem:[%s490] sm:$0xf]
      %v546 = vld [vmem:[%s499] sm:$0xff]
      %v547 = vld [vmem:[%s499 + $0x8] sm:$0xff]
      %v548 = vld [vmem:[%s2] sm:$0xff]
      %v549 = vld [vmem:[%s2 + $0x8] sm:$0xff]
      %v550 = vld [vmem:[%s2 + $0x10] sm:$0xff]
      %v551 = vld [vmem:[%s2 + $0x18] sm:$0xff]
      %v552 = vld [vmem:[%s2 + $0x20] sm:$0xff]
      %v553 = vld [vmem:[%s2 + $0x28] sm:$0xff]
      %v554 = vld [vmem:[%s2 + $0x30] sm:$0xff]
      %v555 = vld [vmem:[%s2 + $0x38] sm:$0xff]
      %v556 = vld [vmem:[%s2 + $0x40] sm:$0xff]
      %v557 = vld [vmem:[%s2 + $0x48] sm:$0xff]
      %v558 = vld [vmem:[%s2 + $0x50] sm:$0xff]
      %v559 = vld [vmem:[%s2 + $0x58] sm:$0xff]
      %v560 = vld [vmem:[%s2 + $0x60] sm:$0xff]
      %v561 = vld [vmem:[%s2 + $0x68] sm:$0xff]
      %v562 = vld [vmem:[%s2 + $0x70] sm:$0xff]
      %v563 = vld [vmem:[%s2 + $0x78] sm:$0xff]
      %vm564 = vcmask 261120
      %v566 = vsel %vm564, %v546, 0
      %v569 = vsel %vm564, %v547, 0
      %571 = vmatprep.subr.mxu0 %v549
      %572 = vmatpush1.msra.mxu0 %v548
      %573 = vmatprep.subr.mxu0 %v553
      %574 = vmatpush1.msra.mxu0 %v552
      %575 = vmatprep.subr.mxu0 %v557
      %576 = vmatpush1.msra.mxu0 %v556
      %577 = vmatprep.subr.mxu0 %v561
      %578 = vmatpush1.msra.mxu0 %v560
      %579 = vmatprep.subr.mxu0 0.0
      %580 = vmatpush1.msra.mxu0 0.0
      %581 = vmatprep.subr.mxu0 0.0
      %582 = vmatpush1.msra.mxu0 0.0
      %583 = vmatprep.subr.mxu0 0.0
      %584 = vmatpush1.msra.mxu0 0.0
      %585 = vmatprep.subr.mxu0 0.0
      %586 = vmatpush1.msra.mxu0 0.0
      %587 = vmatprep.subr.mxu0 0.0
      %588 = vmatpush1.msra.mxu0 0.0
      %589 = vmatprep.subr.mxu0 0.0
      %590 = vmatpush1.msra.mxu0 0.0
      %591 = vmatprep.subr.mxu0 0.0
      %592 = vmatpush1.msra.mxu0 0.0
      %593 = vmatprep.subr.mxu0 0.0
      %594 = vmatpush1.msra.mxu0 0.0
      %595 = vmatprep.subr.mxu0 0.0
      %596 = vmatpush1.msra.mxu0 0.0
      %597 = vmatprep.subr.mxu0 0.0
      %598 = vmatpush1.msra.mxu0 0.0
      %599 = vmatprep.subr.mxu0 0.0
      %600 = vmatpush1.msra.mxu0 0.0
      %601 = vmatprep.subr.mxu0 0.0
      %602 = vmatpush1.msra.mxu0 0.0
      %603 = vmatprep.subr.mxu0 0.0
      %604 = vmatpush1.msra.mxu0 0.0
      %605 = vmatprep.subr.mxu0 0.0
      %606 = vmatpush1.msra.mxu0 0.0
      %607 = vmatprep.subr.mxu0 0.0
      %608 = vmatpush1.msra.mxu0 0.0
      %609 = vmatprep.subr.mxu0 0.0
      %610 = vmatpush1.msra.mxu0 0.0
      %611 = vmatprep.subr.mxu0 0.0
      %612 = vmatpush1.msra.mxu0 0.0
      %613 = vmatprep.subr.mxu0 0.0
      %614 = vmatpush1.msra.mxu0 0.0
      %615 = vmatprep.subr.mxu0 0.0
      %616 = vmatpush1.msra.mxu0 0.0
      %617 = vmatprep.subr.mxu0 0.0
      %618 = vmatpush1.msra.mxu0 0.0
      %619 = vmatprep.subr.mxu0 0.0
      %620 = vmatpush1.msra.mxu0 0.0
      %621 = vmatprep.subr.mxu0 0.0
      %622 = vmatpush1.msra.mxu0 0.0
      %623 = vmatprep.subr.mxu0 0.0
      %624 = vmatpush1.msra.mxu0 0.0
      %625 = vmatprep.subr.mxu0 0.0
      %626 = vmatpush1.msra.mxu0 0.0
      %627 = vmatprep.subr.mxu0 0.0
      %628 = vmatpush1.msra.mxu0 0.0
      %629 = vmatprep.subr.mxu0 0.0
      %630 = vmatpush1.msra.mxu0 0.0
      %631 = vmatprep.subr.mxu0 0.0
      %632 = vmatpush1.msra.mxu0 0.0
      %633 = vmatprep.subr.mxu0 0.0
      %634 = vmatpush1.msra.mxu0 0.0
      %635 = vmatprep.mubr.f32.mxu0 0.0
      %636 = vmatmul.mubr.f32.gmra.mrb[0].mxu0 %v566
      %v637 = vpop.f32.mrb[0].mxu0
      %v638 = vadd.f32 0.0, %v637
      %v639 = vpop.f32.mrb[0].mxu0
      %v640 = vadd.f32 0.0, %v639
      %641 = vmatprep.mubr.f32.mxu0 0.0
      %642 = vmatmul.mubr.f32.gmra.mrb[0].mxu0 %v569
      %v643 = vpop.f32.mrb[0].mxu0
      %v644 = vadd.f32 0.0, %v643
      %v645 = vpop.f32.mrb[0].mxu0
      %v646 = vadd.f32 0.0, %v645
      %647 = vdwg.mxu0
      %648 = vmatprep.subr.mxu0 %v551
      %649 = vmatpush1.msra.mxu0 %v550
      %650 = vmatprep.subr.mxu0 %v555
      %651 = vmatpush1.msra.mxu0 %v554
      %652 = vmatprep.subr.mxu0 %v559
      %653 = vmatpush1.msra.mxu0 %v558
      %654 = vmatprep.subr.mxu0 %v563
      %655 = vmatpush1.msra.mxu0 %v562
      %656 = vmatprep.subr.mxu0 0.0
      %657 = vmatpush1.msra.mxu0 0.0
      %658 = vmatprep.subr.mxu0 0.0
      %659 = vmatpush1.msra.mxu0 0.0
      %660 = vmatprep.subr.mxu0 0.0
      %661 = vmatpush1.msra.mxu0 0.0
      %662 = vmatprep.subr.mxu0 0.0
      %663 = vmatpush1.msra.mxu0 0.0
      %664 = vmatprep.subr.mxu0 0.0
      %665 = vmatpush1.msra.mxu0 0.0
      %666 = vmatprep.subr.mxu0 0.0
      %667 = vmatpush1.msra.mxu0 0.0
      %668 = vmatprep.subr.mxu0 0.0
      %669 = vmatpush1.msra.mxu0 0.0
      %670 = vmatprep.subr.mxu0 0.0
      %671 = vmatpush1.msra.mxu0 0.0
      %672 = vmatprep.subr.mxu0 0.0
      %673 = vmatpush1.msra.mxu0 0.0
      %674 = vmatprep.subr.mxu0 0.0
      %675 = vmatpush1.msra.mxu0 0.0
      %676 = vmatprep.subr.mxu0 0.0
      %677 = vmatpush1.msra.mxu0 0.0
      %678 = vmatprep.subr.mxu0 0.0
      %679 = vmatpush1.msra.mxu0 0.0
      %680 = vmatprep.subr.mxu0 0.0
      %681 = vmatpush1.msra.mxu0 0.0
      %682 = vmatprep.subr.mxu0 0.0
      %683 = vmatpush1.msra.mxu0 0.0
      %684 = vmatprep.subr.mxu0 0.0
      %685 = vmatpush1.msra.mxu0 0.0
      %686 = vmatprep.subr.mxu0 0.0
      %687 = vmatpush1.msra.mxu0 0.0
      %688 = vmatprep.subr.mxu0 0.0
      %689 = vmatpush1.msra.mxu0 0.0
      %690 = vmatprep.subr.mxu0 0.0
      %691 = vmatpush1.msra.mxu0 0.0
      %692 = vmatprep.subr.mxu0 0.0
      %693 = vmatpush1.msra.mxu0 0.0
      %694 = vmatprep.subr.mxu0 0.0
      %695 = vmatpush1.msra.mxu0 0.0
      %696 = vmatprep.subr.mxu0 0.0
      %697 = vmatpush1.msra.mxu0 0.0
      %698 = vmatprep.subr.mxu0 0.0
      %699 = vmatpush1.msra.mxu0 0.0
      %700 = vmatprep.subr.mxu0 0.0
      %701 = vmatpush1.msra.mxu0 0.0
      %702 = vmatprep.subr.mxu0 0.0
      %703 = vmatpush1.msra.mxu0 0.0
      %704 = vmatprep.subr.mxu0 0.0
      %705 = vmatpush1.msra.mxu0 0.0
      %706 = vmatprep.subr.mxu0 0.0
      %707 = vmatpush1.msra.mxu0 0.0
      %708 = vmatprep.subr.mxu0 0.0
      %709 = vmatpush1.msra.mxu0 0.0
      %710 = vmatprep.subr.mxu0 0.0
      %711 = vmatpush1.msra.mxu0 0.0
      %712 = vmatprep.mubr.f32.mxu0 0.0
      %713 = vmatmul.mubr.f32.gmra.mrb[0].mxu0 %v566
      %v714 = vpop.f32.mrb[0].mxu0
      %v715 = vadd.f32 0.0, %v714
      %v716 = vpop.f32.mrb[0].mxu0
      %v717 = vadd.f32 0.0, %v716
      %718 = vmatprep.mubr.f32.mxu0 0.0
      %719 = vmatmul.mubr.f32.gmra.mrb[0].mxu0 %v569
      %v720 = vpop.f32.mrb[0].mxu0
      %v721 = vadd.f32 0.0, %v720
      %v722 = vpop.f32.mrb[0].mxu0
      %v723 = vadd.f32 0.0, %v722
      %724 = vdwg.mxu0
      %v725 = vld [vmem:[%s3] sm:$0xff]
      %v726 = vld [vmem:[%s3 + $0x8] sm:$0xff]
      %728 = vset.pattern.permute.xlu0 0
      %729 = vperm.xlu0 %728, %v725
      %v730 = vpop.permute.xlu0 %729
      %733 = vset.pattern.permute.xlu0 0
      %734 = vperm.xlu0 %733, %v726
      %v735 = vpop.permute.xlu0 %734
      %v738 = vlaneseq
      %v739 = vshrl.u32 %v738, 7
      %v740 = vsub.s32 0, %v739
      %v741 = vrot.slane %v545, %v740
      %v742 = vlaneseq
      %v743 = vshrl.u32 %v742, 7
      %v744 = vsub.s32 1, %v743
      %v745 = vrot.slane %v545, %v744
      %v746 = vlaneseq
      %v747 = vshrl.u32 %v746, 7
      %v748 = vsub.s32 2, %v747
      %v749 = vrot.slane %v545, %v748
      %v750 = vlaneseq
      %v751 = vshrl.u32 %v750, 7
      %v752 = vsub.s32 3, %v751
      %v753 = vrot.slane %v545, %v752
      %v758 = vmul.f32 %v730, %v741
      %v759 = vmul.f32 %v730, %v745
      %v760 = vmul.f32 %v730, %v749
      %v761 = vmul.f32 %v730, %v753
      %v762 = vmul.f32 %v735, %v741
      %v763 = vmul.f32 %v735, %v745
      %v764 = vmul.f32 %v735, %v749
      %v765 = vmul.f32 %v735, %v753
      %v766 = vld [vmem:[%s4] sm:$0xff]
      %v767 = vld [vmem:[%s4 + $0x8] sm:$0xff]
      %769 = vset.pattern.permute.xlu0 0
      %770 = vperm.xlu0 %769, %v766
      %v771 = vpop.permute.xlu0 %770
      %774 = vset.pattern.permute.xlu0 0
      %775 = vperm.xlu0 %774, %v767
      %v776 = vpop.permute.xlu0 %775
      %v778 = vadd.f32 %v758, %v771
      %v779 = vadd.f32 %v759, %v771
      %v780 = vadd.f32 %v760, %v771
      %v781 = vadd.f32 %v761, %v771
      %v782 = vadd.f32 %v762, %v776
      %v783 = vadd.f32 %v763, %v776
      %v784 = vadd.f32 %v764, %v776
      %v785 = vadd.f32 %v765, %v776
      %v786 = vmul.f32 %v778, %v537
      %v787 = vmul.f32 %v779, %v538
      %v788 = vmul.f32 %v780, %v539
      %v789 = vmul.f32 %v781, %v540
      %v790 = vmul.f32 %v782, %v537
      %v791 = vmul.f32 %v783, %v538
      %v792 = vmul.f32 %v784, %v539
      %v793 = vmul.f32 %v785, %v540
      %794 = vrot.lane.b32.xlu0 %v786, 1
      %v795 = vpop.permute.xlu0 %794
      %796 = vrot.lane.b32.xlu0 %v790, 1
      %v797 = vpop.permute.xlu0 %796
      %798 = vrot.lane.b32.xlu0 %v787, 1
      %v799 = vpop.permute.xlu0 %798
      %800 = vrot.lane.b32.xlu0 %v791, 1
      %v801 = vpop.permute.xlu0 %800
      %802 = vrot.lane.b32.xlu0 %v788, 1
      %v803 = vpop.permute.xlu0 %802
      %804 = vrot.lane.b32.xlu0 %v792, 1
      %v805 = vpop.permute.xlu0 %804
      %806 = vrot.lane.b32.xlu0 %v789, 1
      %v807 = vpop.permute.xlu0 %806
      %808 = vrot.lane.b32.xlu0 %v793, 1
      %v809 = vpop.permute.xlu0 %808
      %vm810 = vcmp.lt.s32.totalorder %v512, 1
      %v811 = vsel %vm810, %v803, %v807
      %v812 = vsel %vm810, %v805, %v809
      %v813 = vsel %vm810, %v799, %v803
      %v814 = vsel %vm810, %v801, %v805
      %v815 = vsel %vm810, %v795, %v799
      %v816 = vsel %vm810, %v797, %v801
      %v817 = vsel %vm810, %v807, %v795
      %v818 = vsel %vm810, %v809, %v797
      %819 = vrot.lane.b32.xlu0 %v786, 127
      %v820 = vpop.permute.xlu0 %819
      %821 = vrot.lane.b32.xlu0 %v790, 127
      %v822 = vpop.permute.xlu0 %821
      %823 = vrot.lane.b32.xlu0 %v787, 127
      %v824 = vpop.permute.xlu0 %823
      %825 = vrot.lane.b32.xlu0 %v791, 127
      %v826 = vpop.permute.xlu0 %825
      %827 = vrot.lane.b32.xlu0 %v788, 127
      %v828 = vpop.permute.xlu0 %827
      %829 = vrot.lane.b32.xlu0 %v792, 127
      %v830 = vpop.permute.xlu0 %829
      %831 = vrot.lane.b32.xlu0 %v789, 127
      %v832 = vpop.permute.xlu0 %831
      %833 = vrot.lane.b32.xlu0 %v793, 127
      %v834 = vpop.permute.xlu0 %833
      %vm835 = vcmp.lt.s32.totalorder %v512, 127
      %v836 = vsel %vm835, %v828, %v832
      %v837 = vsel %vm835, %v830, %v834
      %v838 = vsel %vm835, %v824, %v828
      %v839 = vsel %vm835, %v826, %v830
      %v840 = vsel %vm835, %v820, %v824
      %v841 = vsel %vm835, %v822, %v826
      %v842 = vsel %vm835, %v832, %v820
      %v843 = vsel %vm835, %v834, %v822
      %v844 = vld [vmem:[%s5] sm:$0xff]
      %v845 = vld [vmem:[%s5 + $0x8] sm:$0xff]
      %v846 = vld [vmem:[%s5 + $0x10] sm:$0xff]
      %v847 = vld [vmem:[%s5 + $0x18] sm:$0xff]
      %v848 = vld [vmem:[%s6] sm:$0xff]
      %v849 = vld [vmem:[%s6 + $0x8] sm:$0xff]
      %v850 = vld [vmem:[%s6 + $0x10] sm:$0xff]
      %v851 = vld [vmem:[%s6 + $0x18] sm:$0xff]
      %853 = vset.pattern.permute.xlu0 0
      %854 = vperm.xlu0 %853, %v848
      %v855 = vpop.permute.xlu0 %854
      %858 = vset.pattern.permute.xlu0 0
      %859 = vperm.xlu0 %858, %v849
      %v860 = vpop.permute.xlu0 %859
      %863 = vset.pattern.permute.xlu0 0
      %864 = vperm.xlu0 %863, %v850
      %v865 = vpop.permute.xlu0 %864
      %868 = vset.pattern.permute.xlu0 0
      %869 = vperm.xlu0 %868, %v851
      %v870 = vpop.permute.xlu0 %869
      %vm872 = vcmask 523264
      %v874 = vsel %vm872, %v844, 0
      %v877 = vsel %vm872, %v845, 0
      %v880 = vsel %vm872, %v846, 0
      %v883 = vsel %vm872, %v847, 0
      %885 = vmatprep.subr.mxu0 %v815
      %886 = vmatpush1.msra.mxu0 %v817
      %887 = vmatprep.subr.mxu0 %v816
      %888 = vmatpush1.msra.mxu0 %v818
      %889 = vmatprep.subr.mxu0 %v787
      %890 = vmatpush1.msra.mxu0 %v786
      %891 = vmatprep.subr.mxu0 %v791
      %892 = vmatpush1.msra.mxu0 %v790
      %893 = vmatprep.subr.mxu0 %v838
      %894 = vmatpush1.msra.mxu0 %v840
      %895 = vmatprep.subr.mxu0 %v839
      %896 = vmatpush1.msra.mxu0 %v841
      %897 = vmatprep.subr.mxu0 %v640
      %898 = vmatpush1.msra.mxu0 %v638
      %899 = vmatprep.subr.mxu0 %v646
      %900 = vmatpush1.msra.mxu0 %v644
      %901 = vmatprep.subr.mxu0 0.0
      %902 = vmatpush1.msra.mxu0 0.0
      %903 = vmatprep.subr.mxu0 0.0
      %904 = vmatpush1.msra.mxu0 0.0
      %905 = vmatprep.subr.mxu0 0.0
      %906 = vmatpush1.msra.mxu0 0.0
      %907 = vmatprep.subr.mxu0 0.0
      %908 = vmatpush1.msra.mxu0 0.0
      %909 = vmatprep.subr.mxu0 0.0
      %910 = vmatpush1.msra.mxu0 0.0
      %911 = vmatprep.subr.mxu0 0.0
      %912 = vmatpush1.msra.mxu0 0.0
      %913 = vmatprep.subr.mxu0 0.0
      %914 = vmatpush1.msra.mxu0 0.0
      %915 = vmatprep.subr.mxu0 0.0
      %916 = vmatpush1.msra.mxu0 0.0
      %917 = vmatprep.subr.mxu0 0.0
      %918 = vmatpush1.msra.mxu0 0.0
      %919 = vmatprep.subr.mxu0 0.0
      %920 = vmatpush1.msra.mxu0 0.0
      %921 = vmatprep.subr.mxu0 0.0
      %922 = vmatpush1.msra.mxu0 0.0
      %923 = vmatprep.subr.mxu0 0.0
      %924 = vmatpush1.msra.mxu0 0.0
      %925 = vmatprep.subr.mxu0 0.0
      %926 = vmatpush1.msra.mxu0 0.0
      %927 = vmatprep.subr.mxu0 0.0
      %928 = vmatpush1.msra.mxu0 0.0
      %929 = vmatprep.subr.mxu0 0.0
      %930 = vmatpush1.msra.mxu0 0.0
      %931 = vmatprep.subr.mxu0 0.0
      %932 = vmatpush1.msra.mxu0 0.0
      %933 = vmatprep.subr.mxu0 0.0
      %934 = vmatpush1.msra.mxu0 0.0
      %935 = vmatprep.subr.mxu0 0.0
      %936 = vmatpush1.msra.mxu0 0.0
      %937 = vmatprep.subr.mxu0 0.0
      %938 = vmatpush1.msra.mxu0 0.0
      %939 = vmatprep.subr.mxu0 0.0
      %940 = vmatpush1.msra.mxu0 0.0
      %941 = vmatprep.subr.mxu0 0.0
      %942 = vmatpush1.msra.mxu0 0.0
      %943 = vmatprep.subr.mxu0 0.0
      %944 = vmatpush1.msra.mxu0 0.0
      %945 = vmatprep.subr.mxu0 0.0
      %946 = vmatpush1.msra.mxu0 0.0
      %947 = vmatprep.subr.mxu0 0.0
      %948 = vmatpush1.msra.mxu0 0.0
      %949 = vmatprep.mubr.f32.mxu0 0.0
      %950 = vmatmul.mubr.f32.gmra.mrb[0].mxu0 %v874
      %v951 = vpop.f32.mrb[0].mxu0
      %v952 = vadd.f32 %v855, %v951
      %v953 = vpop.f32.mrb[0].mxu0
      %v954 = vadd.f32 %v855, %v953
      %955 = vmatprep.mubr.f32.mxu0 0.0
      %956 = vmatmul.mubr.f32.gmra.mrb[0].mxu0 %v877
      %v957 = vpop.f32.mrb[0].mxu0
      %v958 = vadd.f32 %v860, %v957
      %v959 = vpop.f32.mrb[0].mxu0
      %v960 = vadd.f32 %v860, %v959
      %961 = vmatprep.mubr.f32.mxu0 0.0
      %962 = vmatmul.mubr.f32.gmra.mrb[0].mxu0 %v880
      %v963 = vpop.f32.mrb[0].mxu0
      %v964 = vadd.f32 %v865, %v963
      %v965 = vpop.f32.mrb[0].mxu0
      %v966 = vadd.f32 %v865, %v965
      %967 = vmatprep.mubr.f32.mxu0 0.0
      %968 = vmatmul.mubr.f32.gmra.mrb[0].mxu0 %v883
      %v969 = vpop.f32.mrb[0].mxu0
      %v970 = vadd.f32 %v870, %v969
      %v971 = vpop.f32.mrb[0].mxu0
      %v972 = vadd.f32 %v870, %v971
      %973 = vdwg.mxu0
      %974 = vmatprep.subr.mxu0 %v811
      %975 = vmatpush1.msra.mxu0 %v813
      %976 = vmatprep.subr.mxu0 %v812
      %977 = vmatpush1.msra.mxu0 %v814
      %978 = vmatprep.subr.mxu0 %v789
      %979 = vmatpush1.msra.mxu0 %v788
      %980 = vmatprep.subr.mxu0 %v793
      %981 = vmatpush1.msra.mxu0 %v792
      %982 = vmatprep.subr.mxu0 %v842
      %983 = vmatpush1.msra.mxu0 %v836
      %984 = vmatprep.subr.mxu0 %v843
      %985 = vmatpush1.msra.mxu0 %v837
      %986 = vmatprep.subr.mxu0 %v717
      %987 = vmatpush1.msra.mxu0 %v715
      %988 = vmatprep.subr.mxu0 %v723
      %989 = vmatpush1.msra.mxu0 %v721
      %990 = vmatprep.subr.mxu0 0.0
      %991 = vmatpush1.msra.mxu0 0.0
      %992 = vmatprep.subr.mxu0 0.0
      %993 = vmatpush1.msra.mxu0 0.0
      %994 = vmatprep.subr.mxu0 0.0
      %995 = vmatpush1.msra.mxu0 0.0
      %996 = vmatprep.subr.mxu0 0.0
      %997 = vmatpush1.msra.mxu0 0.0
      %998 = vmatprep.subr.mxu0 0.0
      %999 = vmatpush1.msra.mxu0 0.0
      %1000 = vmatprep.subr.mxu0 0.0
      %1001 = vmatpush1.msra.mxu0 0.0
      %1002 = vmatprep.subr.mxu0 0.0
      %1003 = vmatpush1.msra.mxu0 0.0
      %1004 = vmatprep.subr.mxu0 0.0
      %1005 = vmatpush1.msra.mxu0 0.0
      %1006 = vmatprep.subr.mxu0 0.0
      %1007 = vmatpush1.msra.mxu0 0.0
      %1008 = vmatprep.subr.mxu0 0.0
      %1009 = vmatpush1.msra.mxu0 0.0
      %1010 = vmatprep.subr.mxu0 0.0
      %1011 = vmatpush1.msra.mxu0 0.0
      %1012 = vmatprep.subr.mxu0 0.0
      %1013 = vmatpush1.msra.mxu0 0.0
      %1014 = vmatprep.subr.mxu0 0.0
      %1015 = vmatpush1.msra.mxu0 0.0
      %1016 = vmatprep.subr.mxu0 0.0
      %1017 = vmatpush1.msra.mxu0 0.0
      %1018 = vmatprep.subr.mxu0 0.0
      %1019 = vmatpush1.msra.mxu0 0.0
      %1020 = vmatprep.subr.mxu0 0.0
      %1021 = vmatpush1.msra.mxu0 0.0
      %1022 = vmatprep.subr.mxu0 0.0
      %1023 = vmatpush1.msra.mxu0 0.0
      %1024 = vmatprep.subr.mxu0 0.0
      %1025 = vmatpush1.msra.mxu0 0.0
      %1026 = vmatprep.subr.mxu0 0.0
      %1027 = vmatpush1.msra.mxu0 0.0
      %1028 = vmatprep.subr.mxu0 0.0
      %1029 = vmatpush1.msra.mxu0 0.0
      %1030 = vmatprep.subr.mxu0 0.0
      %1031 = vmatpush1.msra.mxu0 0.0
      %1032 = vmatprep.subr.mxu0 0.0
      %1033 = vmatpush1.msra.mxu0 0.0
      %1034 = vmatprep.subr.mxu0 0.0
      %1035 = vmatpush1.msra.mxu0 0.0
      %1036 = vmatprep.subr.mxu0 0.0
      %1037 = vmatpush1.msra.mxu0 0.0
      %1038 = vmatprep.mubr.f32.mxu0 0.0
      %1039 = vmatmul.mubr.f32.gmra.mrb[0].mxu0 %v874
      %v1040 = vpop.f32.mrb[0].mxu0
      %v1041 = vadd.f32 %v855, %v1040
      %v1042 = vpop.f32.mrb[0].mxu0
      %v1043 = vadd.f32 %v855, %v1042
      %1044 = vmatprep.mubr.f32.mxu0 0.0
      %1045 = vmatmul.mubr.f32.gmra.mrb[0].mxu0 %v877
      %v1046 = vpop.f32.mrb[0].mxu0
      %v1047 = vadd.f32 %v860, %v1046
      %v1048 = vpop.f32.mrb[0].mxu0
      %v1049 = vadd.f32 %v860, %v1048
      %1050 = vmatprep.mubr.f32.mxu0 0.0
      %1051 = vmatmul.mubr.f32.gmra.mrb[0].mxu0 %v880
      %v1052 = vpop.f32.mrb[0].mxu0
      %v1053 = vadd.f32 %v865, %v1052
      %v1054 = vpop.f32.mrb[0].mxu0
      %v1055 = vadd.f32 %v865, %v1054
      %1056 = vmatprep.mubr.f32.mxu0 0.0
      %1057 = vmatmul.mubr.f32.gmra.mrb[0].mxu0 %v883
      %v1058 = vpop.f32.mrb[0].mxu0
      %v1059 = vadd.f32 %v870, %v1058
      %v1060 = vpop.f32.mrb[0].mxu0
      %v1061 = vadd.f32 %v870, %v1060
      %1062 = vdwg.mxu0
      %v1063 = vtanh.pop %v952
      %v1064 = vtanh.pop %v954
      %v1065 = vtanh.pop %v1041
      %v1066 = vtanh.pop %v1043
      %v1067 = vtanh.pop %v958
      %v1068 = vtanh.pop %v960
      %v1069 = vtanh.pop %v1047
      %v1070 = vtanh.pop %v1049
      %v1071 = vmul.f32 %v964, 0.5
      %v1072 = vmul.f32 %v966, 0.5
      %v1073 = vmul.f32 %v1053, 0.5
      %v1074 = vmul.f32 %v1055, 0.5
      %v1075 = vmul.f32 %v970, 0.5
      %v1076 = vmul.f32 %v972, 0.5
      %v1077 = vmul.f32 %v1059, 0.5
      %v1078 = vmul.f32 %v1061, 0.5
      %v1079 = vtanh.pop %v1071
      %v1080 = vtanh.pop %v1072
      %v1081 = vtanh.pop %v1073
      %v1082 = vtanh.pop %v1074
      %v1083 = vtanh.pop %v1075
      %v1084 = vtanh.pop %v1076
      %v1085 = vtanh.pop %v1077
      %v1086 = vtanh.pop %v1078
      %v1087 = vadd.f32 %v1079, 1.0
      %v1088 = vadd.f32 %v1080, 1.0
      %v1089 = vadd.f32 %v1081, 1.0
      %v1090 = vadd.f32 %v1082, 1.0
      %v1091 = vadd.f32 %v1083, 1.0
      %v1092 = vadd.f32 %v1084, 1.0
      %v1093 = vadd.f32 %v1085, 1.0
      %v1094 = vadd.f32 %v1086, 1.0
      %v1095 = vmul.f32 %v1087, 0.5
      %v1096 = vmul.f32 %v1088, 0.5
      %v1097 = vmul.f32 %v1089, 0.5
      %v1098 = vmul.f32 %v1090, 0.5
      %v1099 = vmul.f32 %v1091, 0.5
      %v1100 = vmul.f32 %v1092, 0.5
      %v1101 = vmul.f32 %v1093, 0.5
      %v1102 = vmul.f32 %v1094, 0.5
      %v1103 = vmul.f32 %v1063, %v1095
      %v1104 = vmul.f32 %v1064, %v1096
      %v1105 = vmul.f32 %v1065, %v1097
      %v1106 = vmul.f32 %v1066, %v1098
      %v1107 = vmul.f32 %v1067, %v1099
      %v1108 = vmul.f32 %v1068, %v1100
      %v1109 = vmul.f32 %v1069, %v1101
      %v1110 = vmul.f32 %v1070, %v1102
      %v1111 = vld [vmem:[%s7] sm:$0xff]
      %v1112 = vld [vmem:[%s7 + $0x8] sm:$0xff]
      %v1113 = vld [vmem:[%s7 + $0x10] sm:$0xff]
      %v1114 = vld [vmem:[%s7 + $0x18] sm:$0xff]
      %v1115 = vld [vmem:[%s8] sm:$0xff]
      %v1116 = vld [vmem:[%s8 + $0x8] sm:$0xff]
      %v1117 = vld [vmem:[%s8 + $0x10] sm:$0xff]
      %v1118 = vld [vmem:[%s8 + $0x18] sm:$0xff]
      %1120 = vset.pattern.permute.xlu0 0
      %1121 = vperm.xlu0 %1120, %v1115
      %v1122 = vpop.permute.xlu0 %1121
      %1125 = vset.pattern.permute.xlu0 0
      %1126 = vperm.xlu0 %1125, %v1116
      %v1127 = vpop.permute.xlu0 %1126
      %1130 = vset.pattern.permute.xlu0 0
      %1131 = vperm.xlu0 %1130, %v1117
      %v1132 = vpop.permute.xlu0 %1131
      %1135 = vset.pattern.permute.xlu0 0
      %1136 = vperm.xlu0 %1135, %v1118
      %v1137 = vpop.permute.xlu0 %1136
      %vm1139 = vcmask 130048
      %v1141 = vsel %vm1139, %v1111, 0
      %v1144 = vsel %vm1139, %v1112, 0
      %v1147 = vsel %vm1139, %v1113, 0
      %v1150 = vsel %vm1139, %v1114, 0
      %1152 = vmatprep.subr.mxu0 %v1104
      %1153 = vmatpush1.msra.mxu0 %v1103
      %1154 = vmatprep.subr.mxu0 %v1108
      %1155 = vmatpush1.msra.mxu0 %v1107
      %1156 = vmatprep.subr.mxu0 0.0
      %1157 = vmatpush1.msra.mxu0 0.0
      %1158 = vmatprep.subr.mxu0 0.0
      %1159 = vmatpush1.msra.mxu0 0.0
      %1160 = vmatprep.subr.mxu0 0.0
      %1161 = vmatpush1.msra.mxu0 0.0
      %1162 = vmatprep.subr.mxu0 0.0
      %1163 = vmatpush1.msra.mxu0 0.0
      %1164 = vmatprep.subr.mxu0 0.0
      %1165 = vmatpush1.msra.mxu0 0.0
      %1166 = vmatprep.subr.mxu0 0.0
      %1167 = vmatpush1.msra.mxu0 0.0
      %1168 = vmatprep.subr.mxu0 0.0
      %1169 = vmatpush1.msra.mxu0 0.0
      %1170 = vmatprep.subr.mxu0 0.0
      %1171 = vmatpush1.msra.mxu0 0.0
      %1172 = vmatprep.subr.mxu0 0.0
      %1173 = vmatpush1.msra.mxu0 0.0
      %1174 = vmatprep.subr.mxu0 0.0
      %1175 = vmatpush1.msra.mxu0 0.0
      %1176 = vmatprep.subr.mxu0 0.0
      %1177 = vmatpush1.msra.mxu0 0.0
      %1178 = vmatprep.subr.mxu0 0.0
      %1179 = vmatpush1.msra.mxu0 0.0
      %1180 = vmatprep.subr.mxu0 0.0
      %1181 = vmatpush1.msra.mxu0 0.0
      %1182 = vmatprep.subr.mxu0 0.0
      %1183 = vmatpush1.msra.mxu0 0.0
      %1184 = vmatprep.subr.mxu0 0.0
      %1185 = vmatpush1.msra.mxu0 0.0
      %1186 = vmatprep.subr.mxu0 0.0
      %1187 = vmatpush1.msra.mxu0 0.0
      %1188 = vmatprep.subr.mxu0 0.0
      %1189 = vmatpush1.msra.mxu0 0.0
      %1190 = vmatprep.subr.mxu0 0.0
      %1191 = vmatpush1.msra.mxu0 0.0
      %1192 = vmatprep.subr.mxu0 0.0
      %1193 = vmatpush1.msra.mxu0 0.0
      %1194 = vmatprep.subr.mxu0 0.0
      %1195 = vmatpush1.msra.mxu0 0.0
      %1196 = vmatprep.subr.mxu0 0.0
      %1197 = vmatpush1.msra.mxu0 0.0
      %1198 = vmatprep.subr.mxu0 0.0
      %1199 = vmatpush1.msra.mxu0 0.0
      %1200 = vmatprep.subr.mxu0 0.0
      %1201 = vmatpush1.msra.mxu0 0.0
      %1202 = vmatprep.subr.mxu0 0.0
      %1203 = vmatpush1.msra.mxu0 0.0
      %1204 = vmatprep.subr.mxu0 0.0
      %1205 = vmatpush1.msra.mxu0 0.0
      %1206 = vmatprep.subr.mxu0 0.0
      %1207 = vmatpush1.msra.mxu0 0.0
      %1208 = vmatprep.subr.mxu0 0.0
      %1209 = vmatpush1.msra.mxu0 0.0
      %1210 = vmatprep.subr.mxu0 0.0
      %1211 = vmatpush1.msra.mxu0 0.0
      %1212 = vmatprep.subr.mxu0 0.0
      %1213 = vmatpush1.msra.mxu0 0.0
      %1214 = vmatprep.subr.mxu0 0.0
      %1215 = vmatpush1.msra.mxu0 0.0
      %1216 = vmatprep.mubr.f32.mxu0 0.0
      %1217 = vmatmul.mubr.f32.gmra.mrb[0].mxu0 %v1141
      %v1218 = vpop.f32.mrb[0].mxu0
      %v1219 = vadd.f32 %v1122, %v1218
      %v1220 = vpop.f32.mrb[0].mxu0
      %v1221 = vadd.f32 %v1122, %v1220
      %1222 = vmatprep.mubr.f32.mxu0 0.0
      %1223 = vmatmul.mubr.f32.gmra.mrb[0].mxu0 %v1144
      %v1224 = vpop.f32.mrb[0].mxu0
      %v1225 = vadd.f32 %v1127, %v1224
      %v1226 = vpop.f32.mrb[0].mxu0
      %v1227 = vadd.f32 %v1127, %v1226
      %1228 = vmatprep.mubr.f32.mxu0 0.0
      %1229 = vmatmul.mubr.f32.gmra.mrb[0].mxu0 %v1147
      %v1230 = vpop.f32.mrb[0].mxu0
      %v1231 = vadd.f32 %v1132, %v1230
      %v1232 = vpop.f32.mrb[0].mxu0
      %v1233 = vadd.f32 %v1132, %v1232
      %1234 = vmatprep.mubr.f32.mxu0 0.0
      %1235 = vmatmul.mubr.f32.gmra.mrb[0].mxu0 %v1150
      %v1236 = vpop.f32.mrb[0].mxu0
      %v1237 = vadd.f32 %v1137, %v1236
      %v1238 = vpop.f32.mrb[0].mxu0
      %v1239 = vadd.f32 %v1137, %v1238
      %1240 = vdwg.mxu0
      %1241 = vmatprep.subr.mxu0 %v1106
      %1242 = vmatpush1.msra.mxu0 %v1105
      %1243 = vmatprep.subr.mxu0 %v1110
      %1244 = vmatpush1.msra.mxu0 %v1109
      %1245 = vmatprep.subr.mxu0 0.0
      %1246 = vmatpush1.msra.mxu0 0.0
      %1247 = vmatprep.subr.mxu0 0.0
      %1248 = vmatpush1.msra.mxu0 0.0
      %1249 = vmatprep.subr.mxu0 0.0
      %1250 = vmatpush1.msra.mxu0 0.0
      %1251 = vmatprep.subr.mxu0 0.0
      %1252 = vmatpush1.msra.mxu0 0.0
      %1253 = vmatprep.subr.mxu0 0.0
      %1254 = vmatpush1.msra.mxu0 0.0
      %1255 = vmatprep.subr.mxu0 0.0
      %1256 = vmatpush1.msra.mxu0 0.0
      %1257 = vmatprep.subr.mxu0 0.0
      %1258 = vmatpush1.msra.mxu0 0.0
      %1259 = vmatprep.subr.mxu0 0.0
      %1260 = vmatpush1.msra.mxu0 0.0
      %1261 = vmatprep.subr.mxu0 0.0
      %1262 = vmatpush1.msra.mxu0 0.0
      %1263 = vmatprep.subr.mxu0 0.0
      %1264 = vmatpush1.msra.mxu0 0.0
      %1265 = vmatprep.subr.mxu0 0.0
      %1266 = vmatpush1.msra.mxu0 0.0
      %1267 = vmatprep.subr.mxu0 0.0
      %1268 = vmatpush1.msra.mxu0 0.0
      %1269 = vmatprep.subr.mxu0 0.0
      %1270 = vmatpush1.msra.mxu0 0.0
      %1271 = vmatprep.subr.mxu0 0.0
      %1272 = vmatpush1.msra.mxu0 0.0
      %1273 = vmatprep.subr.mxu0 0.0
      %1274 = vmatpush1.msra.mxu0 0.0
      %1275 = vmatprep.subr.mxu0 0.0
      %1276 = vmatpush1.msra.mxu0 0.0
      %1277 = vmatprep.subr.mxu0 0.0
      %1278 = vmatpush1.msra.mxu0 0.0
      %1279 = vmatprep.subr.mxu0 0.0
      %1280 = vmatpush1.msra.mxu0 0.0
      %1281 = vmatprep.subr.mxu0 0.0
      %1282 = vmatpush1.msra.mxu0 0.0
      %1283 = vmatprep.subr.mxu0 0.0
      %1284 = vmatpush1.msra.mxu0 0.0
      %1285 = vmatprep.subr.mxu0 0.0
      %1286 = vmatpush1.msra.mxu0 0.0
      %1287 = vmatprep.subr.mxu0 0.0
      %1288 = vmatpush1.msra.mxu0 0.0
      %1289 = vmatprep.subr.mxu0 0.0
      %1290 = vmatpush1.msra.mxu0 0.0
      %1291 = vmatprep.subr.mxu0 0.0
      %1292 = vmatpush1.msra.mxu0 0.0
      %1293 = vmatprep.subr.mxu0 0.0
      %1294 = vmatpush1.msra.mxu0 0.0
      %1295 = vmatprep.subr.mxu0 0.0
      %1296 = vmatpush1.msra.mxu0 0.0
      %1297 = vmatprep.subr.mxu0 0.0
      %1298 = vmatpush1.msra.mxu0 0.0
      %1299 = vmatprep.subr.mxu0 0.0
      %1300 = vmatpush1.msra.mxu0 0.0
      %1301 = vmatprep.subr.mxu0 0.0
      %1302 = vmatpush1.msra.mxu0 0.0
      %1303 = vmatprep.subr.mxu0 0.0
      %1304 = vmatpush1.msra.mxu0 0.0
      %1305 = vmatprep.mubr.f32.mxu0 0.0
      %1306 = vmatmul.mubr.f32.gmra.mrb[0].mxu0 %v1141
      %v1307 = vpop.f32.mrb[0].mxu0
      %v1308 = vadd.f32 %v1122, %v1307
      %v1309 = vpop.f32.mrb[0].mxu0
      %v1310 = vadd.f32 %v1122, %v1309
      %1311 = vmatprep.mubr.f32.mxu0 0.0
      %1312 = vmatmul.mubr.f32.gmra.mrb[0].mxu0 %v1144
      %v1313 = vpop.f32.mrb[0].mxu0
      %v1314 = vadd.f32 %v1127, %v1313
      %v1315 = vpop.f32.mrb[0].mxu0
      %v1316 = vadd.f32 %v1127, %v1315
      %1317 = vmatprep.mubr.f32.mxu0 0.0
      %1318 = vmatmul.mubr.f32.gmra.mrb[0].mxu0 %v1147
      %v1319 = vpop.f32.mrb[0].mxu0
      %v1320 = vadd.f32 %v1132, %v1319
      %v1321 = vpop.f32.mrb[0].mxu0
      %v1322 = vadd.f32 %v1132, %v1321
      %1323 = vmatprep.mubr.f32.mxu0 0.0
      %1324 = vmatmul.mubr.f32.gmra.mrb[0].mxu0 %v1150
      %v1325 = vpop.f32.mrb[0].mxu0
      %v1326 = vadd.f32 %v1137, %v1325
      %v1327 = vpop.f32.mrb[0].mxu0
      %v1328 = vadd.f32 %v1137, %v1327
      %1329 = vdwg.mxu0
      %v1330 = vadd.f32 %v1219, 0.0
      %v1331 = vadd.f32 %v1221, 0.0
      %v1332 = vadd.f32 %v1308, 0.0
      %v1333 = vadd.f32 %v1310, 0.0
      %v1334 = vadd.f32 %v1225, 0.0
      %v1335 = vadd.f32 %v1227, 0.0
      %v1336 = vadd.f32 %v1314, 0.0
      %v1337 = vadd.f32 %v1316, 0.0
      %v1338 = vadd.f32 %v1231, %v786
      %v1339 = vadd.f32 %v1233, %v787
      %v1340 = vadd.f32 %v1320, %v788
      %v1341 = vadd.f32 %v1322, %v789
      %v1342 = vadd.f32 %v1237, %v790
      %v1343 = vadd.f32 %v1239, %v791
      %v1344 = vadd.f32 %v1326, %v792
      %v1345 = vadd.f32 %v1328, %v793
      %v1346 = vmul.f32 %v1338, %v541
      %v1347 = vmul.f32 %v1339, %v542
      %v1348 = vmul.f32 %v1340, %v543
      %v1349 = vmul.f32 %v1341, %v544
      %v1350 = vmul.f32 %v1342, %v541
      %v1351 = vmul.f32 %v1343, %v542
      %v1352 = vmul.f32 %v1344, %v543
      %v1353 = vmul.f32 %v1345, %v544
      %1354 = vrot.lane.b32.xlu0 %v1346, 2
      %v1355 = vpop.permute.xlu0 %1354
      %1356 = vrot.lane.b32.xlu0 %v1350, 2
      %v1357 = vpop.permute.xlu0 %1356
      %1358 = vrot.lane.b32.xlu0 %v1347, 2
      %v1359 = vpop.permute.xlu0 %1358
      %1360 = vrot.lane.b32.xlu0 %v1351, 2
      %v1361 = vpop.permute.xlu0 %1360
      %1362 = vrot.lane.b32.xlu0 %v1348, 2
      %v1363 = vpop.permute.xlu0 %1362
      %1364 = vrot.lane.b32.xlu0 %v1352, 2
      %v1365 = vpop.permute.xlu0 %1364
      %1366 = vrot.lane.b32.xlu0 %v1349, 2
      %v1367 = vpop.permute.xlu0 %1366
      %1368 = vrot.lane.b32.xlu0 %v1353, 2
      %v1369 = vpop.permute.xlu0 %1368
      %vm1370 = vcmp.lt.s32.totalorder %v512, 2
      %v1371 = vsel %vm1370, %v1363, %v1367
      %v1372 = vsel %vm1370, %v1365, %v1369
      %v1373 = vsel %vm1370, %v1359, %v1363
      %v1374 = vsel %vm1370, %v1361, %v1365
      %v1375 = vsel %vm1370, %v1355, %v1359
      %v1376 = vsel %vm1370, %v1357, %v1361
      %v1377 = vsel %vm1370, %v1367, %v1355
      %v1378 = vsel %vm1370, %v1369, %v1357
      %1379 = vrot.lane.b32.xlu0 %v1346, 126
      %v1380 = vpop.permute.xlu0 %1379
      %1381 = vrot.lane.b32.xlu0 %v1350, 126
      %v1382 = vpop.permute.xlu0 %1381
      %1383 = vrot.lane.b32.xlu0 %v1347, 126
      %v1384 = vpop.permute.xlu0 %1383
      %1385 = vrot.lane.b32.xlu0 %v1351, 126
      %v1386 = vpop.permute.xlu0 %1385
      %1387 = vrot.lane.b32.xlu0 %v1348, 126
      %v1388 = vpop.permute.xlu0 %1387
      %1389 = vrot.lane.b32.xlu0 %v1352, 126
      %v1390 = vpop.permute.xlu0 %1389
      %1391 = vrot.lane.b32.xlu0 %v1349, 126
      %v1392 = vpop.permute.xlu0 %1391
      %1393 = vrot.lane.b32.xlu0 %v1353, 126
      %v1394 = vpop.permute.xlu0 %1393
      %vm1395 = vcmp.lt.s32.totalorder %v512, 126
      %v1396 = vsel %vm1395, %v1388, %v1392
      %v1397 = vsel %vm1395, %v1390, %v1394
      %v1398 = vsel %vm1395, %v1384, %v1388
      %v1399 = vsel %vm1395, %v1386, %v1390
      %v1400 = vsel %vm1395, %v1380, %v1384
      %v1401 = vsel %vm1395, %v1382, %v1386
      %v1402 = vsel %vm1395, %v1392, %v1380
      %v1403 = vsel %vm1395, %v1394, %v1382
      %s1404 = scalar_lea.vmem %s5, 32
      %v1405 = vld [vmem:[%s1404] sm:$0xff]
      %v1406 = vld [vmem:[%s1404 + $0x8] sm:$0xff]
      %v1407 = vld [vmem:[%s1404 + $0x10] sm:$0xff]
      %v1408 = vld [vmem:[%s1404 + $0x18] sm:$0xff]
      %s1409 = scalar_lea.vmem %s6, 32
      %v1410 = vld [vmem:[%s1409] sm:$0xff]
      %v1411 = vld [vmem:[%s1409 + $0x8] sm:$0xff]
      %v1412 = vld [vmem:[%s1409 + $0x10] sm:$0xff]
      %v1413 = vld [vmem:[%s1409 + $0x18] sm:$0xff]
      %1415 = vset.pattern.permute.xlu0 0
      %1416 = vperm.xlu0 %1415, %v1410
      %v1417 = vpop.permute.xlu0 %1416
      %1420 = vset.pattern.permute.xlu0 0
      %1421 = vperm.xlu0 %1420, %v1411
      %v1422 = vpop.permute.xlu0 %1421
      %1425 = vset.pattern.permute.xlu0 0
      %1426 = vperm.xlu0 %1425, %v1412
      %v1427 = vpop.permute.xlu0 %1426
      %1430 = vset.pattern.permute.xlu0 0
      %1431 = vperm.xlu0 %1430, %v1413
      %v1432 = vpop.permute.xlu0 %1431
      %v1435 = vsel %vm872, %v1405, 0
      %v1438 = vsel %vm872, %v1406, 0
      %v1441 = vsel %vm872, %v1407, 0
      %v1444 = vsel %vm872, %v1408, 0
      %1446 = vmatprep.subr.mxu0 %v1375
      %1447 = vmatpush1.msra.mxu0 %v1377
      %1448 = vmatprep.subr.mxu0 %v1376
      %1449 = vmatpush1.msra.mxu0 %v1378
      %1450 = vmatprep.subr.mxu0 %v1347
      %1451 = vmatpush1.msra.mxu0 %v1346
      %1452 = vmatprep.subr.mxu0 %v1351
      %1453 = vmatpush1.msra.mxu0 %v1350
      %1454 = vmatprep.subr.mxu0 %v1398
      %1455 = vmatpush1.msra.mxu0 %v1400
      %1456 = vmatprep.subr.mxu0 %v1399
      %1457 = vmatpush1.msra.mxu0 %v1401
      %1458 = vmatprep.subr.mxu0 %v640
      %1459 = vmatpush1.msra.mxu0 %v638
      %1460 = vmatprep.subr.mxu0 %v646
      %1461 = vmatpush1.msra.mxu0 %v644
      %1462 = vmatprep.subr.mxu0 0.0
      %1463 = vmatpush1.msra.mxu0 0.0
      %1464 = vmatprep.subr.mxu0 0.0
      %1465 = vmatpush1.msra.mxu0 0.0
      %1466 = vmatprep.subr.mxu0 0.0
      %1467 = vmatpush1.msra.mxu0 0.0
      %1468 = vmatprep.subr.mxu0 0.0
      %1469 = vmatpush1.msra.mxu0 0.0
      %1470 = vmatprep.subr.mxu0 0.0
      %1471 = vmatpush1.msra.mxu0 0.0
      %1472 = vmatprep.subr.mxu0 0.0
      %1473 = vmatpush1.msra.mxu0 0.0
      %1474 = vmatprep.subr.mxu0 0.0
      %1475 = vmatpush1.msra.mxu0 0.0
      %1476 = vmatprep.subr.mxu0 0.0
      %1477 = vmatpush1.msra.mxu0 0.0
      %1478 = vmatprep.subr.mxu0 0.0
      %1479 = vmatpush1.msra.mxu0 0.0
      %1480 = vmatprep.subr.mxu0 0.0
      %1481 = vmatpush1.msra.mxu0 0.0
      %1482 = vmatprep.subr.mxu0 0.0
      %1483 = vmatpush1.msra.mxu0 0.0
      %1484 = vmatprep.subr.mxu0 0.0
      %1485 = vmatpush1.msra.mxu0 0.0
      %1486 = vmatprep.subr.mxu0 0.0
      %1487 = vmatpush1.msra.mxu0 0.0
      %1488 = vmatprep.subr.mxu0 0.0
      %1489 = vmatpush1.msra.mxu0 0.0
      %1490 = vmatprep.subr.mxu0 0.0
      %1491 = vmatpush1.msra.mxu0 0.0
      %1492 = vmatprep.subr.mxu0 0.0
      %1493 = vmatpush1.msra.mxu0 0.0
      %1494 = vmatprep.subr.mxu0 0.0
      %1495 = vmatpush1.msra.mxu0 0.0
      %1496 = vmatprep.subr.mxu0 0.0
      %1497 = vmatpush1.msra.mxu0 0.0
      %1498 = vmatprep.subr.mxu0 0.0
      %1499 = vmatpush1.msra.mxu0 0.0
      %1500 = vmatprep.subr.mxu0 0.0
      %1501 = vmatpush1.msra.mxu0 0.0
      %1502 = vmatprep.subr.mxu0 0.0
      %1503 = vmatpush1.msra.mxu0 0.0
      %1504 = vmatprep.subr.mxu0 0.0
      %1505 = vmatpush1.msra.mxu0 0.0
      %1506 = vmatprep.subr.mxu0 0.0
      %1507 = vmatpush1.msra.mxu0 0.0
      %1508 = vmatprep.subr.mxu0 0.0
      %1509 = vmatpush1.msra.mxu0 0.0
      %1510 = vmatprep.mubr.f32.mxu0 0.0
      %1511 = vmatmul.mubr.f32.gmra.mrb[0].mxu0 %v1435
      %v1512 = vpop.f32.mrb[0].mxu0
      %v1513 = vadd.f32 %v1417, %v1512
      %v1514 = vpop.f32.mrb[0].mxu0
      %v1515 = vadd.f32 %v1417, %v1514
      %1516 = vmatprep.mubr.f32.mxu0 0.0
      %1517 = vmatmul.mubr.f32.gmra.mrb[0].mxu0 %v1438
      %v1518 = vpop.f32.mrb[0].mxu0
      %v1519 = vadd.f32 %v1422, %v1518
      %v1520 = vpop.f32.mrb[0].mxu0
      %v1521 = vadd.f32 %v1422, %v1520
      %1522 = vmatprep.mubr.f32.mxu0 0.0
      %1523 = vmatmul.mubr.f32.gmra.mrb[0].mxu0 %v1441
      %v1524 = vpop.f32.mrb[0].mxu0
      %v1525 = vadd.f32 %v1427, %v1524
      %v1526 = vpop.f32.mrb[0].mxu0
      %v1527 = vadd.f32 %v1427, %v1526
      %1528 = vmatprep.mubr.f32.mxu0 0.0
      %1529 = vmatmul.mubr.f32.gmra.mrb[0].mxu0 %v1444
      %v1530 = vpop.f32.mrb[0].mxu0
      %v1531 = vadd.f32 %v1432, %v1530
      %v1532 = vpop.f32.mrb[0].mxu0
      %v1533 = vadd.f32 %v1432, %v1532
      %1534 = vdwg.mxu0
      %1535 = vmatprep.subr.mxu0 %v1371
      %1536 = vmatpush1.msra.mxu0 %v1373
      %1537 = vmatprep.subr.mxu0 %v1372
      %1538 = vmatpush1.msra.mxu0 %v1374
      %1539 = vmatprep.subr.mxu0 %v1349
      %1540 = vmatpush1.msra.mxu0 %v1348
      %1541 = vmatprep.subr.mxu0 %v1353
      %1542 = vmatpush1.msra.mxu0 %v1352
      %1543 = vmatprep.subr.mxu0 %v1402
      %1544 = vmatpush1.msra.mxu0 %v1396
      %1545 = vmatprep.subr.mxu0 %v1403
      %1546 = vmatpush1.msra.mxu0 %v1397
      %1547 = vmatprep.subr.mxu0 %v717
      %1548 = vmatpush1.msra.mxu0 %v715
      %1549 = vmatprep.subr.mxu0 %v723
      %1550 = vmatpush1.msra.mxu0 %v721
      %1551 = vmatprep.subr.mxu0 0.0
      %1552 = vmatpush1.msra.mxu0 0.0
      %1553 = vmatprep.subr.mxu0 0.0
      %1554 = vmatpush1.msra.mxu0 0.0
      %1555 = vmatprep.subr.mxu0 0.0
      %1556 = vmatpush1.msra.mxu0 0.0
      %1557 = vmatprep.subr.mxu0 0.0
      %1558 = vmatpush1.msra.mxu0 0.0
      %1559 = vmatprep.subr.mxu0 0.0
      %1560 = vmatpush1.msra.mxu0 0.0
      %1561 = vmatprep.subr.mxu0 0.0
      %1562 = vmatpush1.msra.mxu0 0.0
      %1563 = vmatprep.subr.mxu0 0.0
      %1564 = vmatpush1.msra.mxu0 0.0
      %1565 = vmatprep.subr.mxu0 0.0
      %1566 = vmatpush1.msra.mxu0 0.0
      %1567 = vmatprep.subr.mxu0 0.0
      %1568 = vmatpush1.msra.mxu0 0.0
      %1569 = vmatprep.subr.mxu0 0.0
      %1570 = vmatpush1.msra.mxu0 0.0
      %1571 = vmatprep.subr.mxu0 0.0
      %1572 = vmatpush1.msra.mxu0 0.0
      %1573 = vmatprep.subr.mxu0 0.0
      %1574 = vmatpush1.msra.mxu0 0.0
      %1575 = vmatprep.subr.mxu0 0.0
      %1576 = vmatpush1.msra.mxu0 0.0
      %1577 = vmatprep.subr.mxu0 0.0
      %1578 = vmatpush1.msra.mxu0 0.0
      %1579 = vmatprep.subr.mxu0 0.0
      %1580 = vmatpush1.msra.mxu0 0.0
      %1581 = vmatprep.subr.mxu0 0.0
      %1582 = vmatpush1.msra.mxu0 0.0
      %1583 = vmatprep.subr.mxu0 0.0
      %1584 = vmatpush1.msra.mxu0 0.0
      %1585 = vmatprep.subr.mxu0 0.0
      %1586 = vmatpush1.msra.mxu0 0.0
      %1587 = vmatprep.subr.mxu0 0.0
      %1588 = vmatpush1.msra.mxu0 0.0
      %1589 = vmatprep.subr.mxu0 0.0
      %1590 = vmatpush1.msra.mxu0 0.0
      %1591 = vmatprep.subr.mxu0 0.0
      %1592 = vmatpush1.msra.mxu0 0.0
      %1593 = vmatprep.subr.mxu0 0.0
      %1594 = vmatpush1.msra.mxu0 0.0
      %1595 = vmatprep.subr.mxu0 0.0
      %1596 = vmatpush1.msra.mxu0 0.0
      %1597 = vmatprep.subr.mxu0 0.0
      %1598 = vmatpush1.msra.mxu0 0.0
      %1599 = vmatprep.mubr.f32.mxu0 0.0
      %1600 = vmatmul.mubr.f32.gmra.mrb[0].mxu0 %v1435
      %v1601 = vpop.f32.mrb[0].mxu0
      %v1602 = vadd.f32 %v1417, %v1601
      %v1603 = vpop.f32.mrb[0].mxu0
      %v1604 = vadd.f32 %v1417, %v1603
      %1605 = vmatprep.mubr.f32.mxu0 0.0
      %1606 = vmatmul.mubr.f32.gmra.mrb[0].mxu0 %v1438
      %v1607 = vpop.f32.mrb[0].mxu0
      %v1608 = vadd.f32 %v1422, %v1607
      %v1609 = vpop.f32.mrb[0].mxu0
      %v1610 = vadd.f32 %v1422, %v1609
      %1611 = vmatprep.mubr.f32.mxu0 0.0
      %1612 = vmatmul.mubr.f32.gmra.mrb[0].mxu0 %v1441
      %v1613 = vpop.f32.mrb[0].mxu0
      %v1614 = vadd.f32 %v1427, %v1613
      %v1615 = vpop.f32.mrb[0].mxu0
      %v1616 = vadd.f32 %v1427, %v1615
      %1617 = vmatprep.mubr.f32.mxu0 0.0
      %1618 = vmatmul.mubr.f32.gmra.mrb[0].mxu0 %v1444
      %v1619 = vpop.f32.mrb[0].mxu0
      %v1620 = vadd.f32 %v1432, %v1619
      %v1621 = vpop.f32.mrb[0].mxu0
      %v1622 = vadd.f32 %v1432, %v1621
      %1623 = vdwg.mxu0
      %v1624 = vtanh.pop %v1513
      %v1625 = vtanh.pop %v1515
      %v1626 = vtanh.pop %v1602
      %v1627 = vtanh.pop %v1604
      %v1628 = vtanh.pop %v1519
      %v1629 = vtanh.pop %v1521
      %v1630 = vtanh.pop %v1608
      %v1631 = vtanh.pop %v1610
      %v1632 = vmul.f32 %v1525, 0.5
      %v1633 = vmul.f32 %v1527, 0.5
      %v1634 = vmul.f32 %v1614, 0.5
      %v1635 = vmul.f32 %v1616, 0.5
      %v1636 = vmul.f32 %v1531, 0.5
      %v1637 = vmul.f32 %v1533, 0.5
      %v1638 = vmul.f32 %v1620, 0.5
      %v1639 = vmul.f32 %v1622, 0.5
      %v1640 = vtanh.pop %v1632
      %v1641 = vtanh.pop %v1633
      %v1642 = vtanh.pop %v1634
      %v1643 = vtanh.pop %v1635
      %v1644 = vtanh.pop %v1636
      %v1645 = vtanh.pop %v1637
      %v1646 = vtanh.pop %v1638
      %v1647 = vtanh.pop %v1639
      %v1648 = vadd.f32 %v1640, 1.0
      %v1649 = vadd.f32 %v1641, 1.0
      %v1650 = vadd.f32 %v1642, 1.0
      %v1651 = vadd.f32 %v1643, 1.0
      %v1652 = vadd.f32 %v1644, 1.0
      %v1653 = vadd.f32 %v1645, 1.0
      %v1654 = vadd.f32 %v1646, 1.0
      %v1655 = vadd.f32 %v1647, 1.0
      %v1656 = vmul.f32 %v1648, 0.5
      %v1657 = vmul.f32 %v1649, 0.5
      %v1658 = vmul.f32 %v1650, 0.5
      %v1659 = vmul.f32 %v1651, 0.5
      %v1660 = vmul.f32 %v1652, 0.5
      %v1661 = vmul.f32 %v1653, 0.5
      %v1662 = vmul.f32 %v1654, 0.5
      %v1663 = vmul.f32 %v1655, 0.5
      %v1664 = vmul.f32 %v1624, %v1656
      %v1665 = vmul.f32 %v1625, %v1657
      %v1666 = vmul.f32 %v1626, %v1658
      %v1667 = vmul.f32 %v1627, %v1659
      %v1668 = vmul.f32 %v1628, %v1660
      %v1669 = vmul.f32 %v1629, %v1661
      %v1670 = vmul.f32 %v1630, %v1662
      %v1671 = vmul.f32 %v1631, %v1663
      %s1672 = scalar_lea.vmem %s7, 32
      %v1673 = vld [vmem:[%s1672] sm:$0xff]
      %v1674 = vld [vmem:[%s1672 + $0x8] sm:$0xff]
      %v1675 = vld [vmem:[%s1672 + $0x10] sm:$0xff]
      %v1676 = vld [vmem:[%s1672 + $0x18] sm:$0xff]
      %s1677 = scalar_lea.vmem %s8, 32
      %v1678 = vld [vmem:[%s1677] sm:$0xff]
      %v1679 = vld [vmem:[%s1677 + $0x8] sm:$0xff]
      %v1680 = vld [vmem:[%s1677 + $0x10] sm:$0xff]
      %v1681 = vld [vmem:[%s1677 + $0x18] sm:$0xff]
      %1683 = vset.pattern.permute.xlu0 0
      %1684 = vperm.xlu0 %1683, %v1678
      %v1685 = vpop.permute.xlu0 %1684
      %1688 = vset.pattern.permute.xlu0 0
      %1689 = vperm.xlu0 %1688, %v1679
      %v1690 = vpop.permute.xlu0 %1689
      %1693 = vset.pattern.permute.xlu0 0
      %1694 = vperm.xlu0 %1693, %v1680
      %v1695 = vpop.permute.xlu0 %1694
      %1698 = vset.pattern.permute.xlu0 0
      %1699 = vperm.xlu0 %1698, %v1681
      %v1700 = vpop.permute.xlu0 %1699
      %v1703 = vsel %vm1139, %v1673, 0
      %v1706 = vsel %vm1139, %v1674, 0
      %v1709 = vsel %vm1139, %v1675, 0
      %v1712 = vsel %vm1139, %v1676, 0
      %1714 = vmatprep.subr.mxu0 %v1665
      %1715 = vmatpush1.msra.mxu0 %v1664
      %1716 = vmatprep.subr.mxu0 %v1669
      %1717 = vmatpush1.msra.mxu0 %v1668
      %1718 = vmatprep.subr.mxu0 0.0
      %1719 = vmatpush1.msra.mxu0 0.0
      %1720 = vmatprep.subr.mxu0 0.0
      %1721 = vmatpush1.msra.mxu0 0.0
      %1722 = vmatprep.subr.mxu0 0.0
      %1723 = vmatpush1.msra.mxu0 0.0
      %1724 = vmatprep.subr.mxu0 0.0
      %1725 = vmatpush1.msra.mxu0 0.0
      %1726 = vmatprep.subr.mxu0 0.0
      %1727 = vmatpush1.msra.mxu0 0.0
      %1728 = vmatprep.subr.mxu0 0.0
      %1729 = vmatpush1.msra.mxu0 0.0
      %1730 = vmatprep.subr.mxu0 0.0
      %1731 = vmatpush1.msra.mxu0 0.0
      %1732 = vmatprep.subr.mxu0 0.0
      %1733 = vmatpush1.msra.mxu0 0.0
      %1734 = vmatprep.subr.mxu0 0.0
      %1735 = vmatpush1.msra.mxu0 0.0
      %1736 = vmatprep.subr.mxu0 0.0
      %1737 = vmatpush1.msra.mxu0 0.0
      %1738 = vmatprep.subr.mxu0 0.0
      %1739 = vmatpush1.msra.mxu0 0.0
      %1740 = vmatprep.subr.mxu0 0.0
      %1741 = vmatpush1.msra.mxu0 0.0
      %1742 = vmatprep.subr.mxu0 0.0
      %1743 = vmatpush1.msra.mxu0 0.0
      %1744 = vmatprep.subr.mxu0 0.0
      %1745 = vmatpush1.msra.mxu0 0.0
      %1746 = vmatprep.subr.mxu0 0.0
      %1747 = vmatpush1.msra.mxu0 0.0
      %1748 = vmatprep.subr.mxu0 0.0
      %1749 = vmatpush1.msra.mxu0 0.0
      %1750 = vmatprep.subr.mxu0 0.0
      %1751 = vmatpush1.msra.mxu0 0.0
      %1752 = vmatprep.subr.mxu0 0.0
      %1753 = vmatpush1.msra.mxu0 0.0
      %1754 = vmatprep.subr.mxu0 0.0
      %1755 = vmatpush1.msra.mxu0 0.0
      %1756 = vmatprep.subr.mxu0 0.0
      %1757 = vmatpush1.msra.mxu0 0.0
      %1758 = vmatprep.subr.mxu0 0.0
      %1759 = vmatpush1.msra.mxu0 0.0
      %1760 = vmatprep.subr.mxu0 0.0
      %1761 = vmatpush1.msra.mxu0 0.0
      %1762 = vmatprep.subr.mxu0 0.0
      %1763 = vmatpush1.msra.mxu0 0.0
      %1764 = vmatprep.subr.mxu0 0.0
      %1765 = vmatpush1.msra.mxu0 0.0
      %1766 = vmatprep.subr.mxu0 0.0
      %1767 = vmatpush1.msra.mxu0 0.0
      %1768 = vmatprep.subr.mxu0 0.0
      %1769 = vmatpush1.msra.mxu0 0.0
      %1770 = vmatprep.subr.mxu0 0.0
      %1771 = vmatpush1.msra.mxu0 0.0
      %1772 = vmatprep.subr.mxu0 0.0
      %1773 = vmatpush1.msra.mxu0 0.0
      %1774 = vmatprep.subr.mxu0 0.0
      %1775 = vmatpush1.msra.mxu0 0.0
      %1776 = vmatprep.subr.mxu0 0.0
      %1777 = vmatpush1.msra.mxu0 0.0
      %1778 = vmatprep.mubr.f32.mxu0 0.0
      %1779 = vmatmul.mubr.f32.gmra.mrb[0].mxu0 %v1703
      %v1780 = vpop.f32.mrb[0].mxu0
      %v1781 = vadd.f32 %v1685, %v1780
      %v1782 = vpop.f32.mrb[0].mxu0
      %v1783 = vadd.f32 %v1685, %v1782
      %1784 = vmatprep.mubr.f32.mxu0 0.0
      %1785 = vmatmul.mubr.f32.gmra.mrb[0].mxu0 %v1706
      %v1786 = vpop.f32.mrb[0].mxu0
      %v1787 = vadd.f32 %v1690, %v1786
      %v1788 = vpop.f32.mrb[0].mxu0
      %v1789 = vadd.f32 %v1690, %v1788
      %1790 = vmatprep.mubr.f32.mxu0 0.0
      %1791 = vmatmul.mubr.f32.gmra.mrb[0].mxu0 %v1709
      %v1792 = vpop.f32.mrb[0].mxu0
      %v1793 = vadd.f32 %v1695, %v1792
      %v1794 = vpop.f32.mrb[0].mxu0
      %v1795 = vadd.f32 %v1695, %v1794
      %1796 = vmatprep.mubr.f32.mxu0 0.0
      %1797 = vmatmul.mubr.f32.gmra.mrb[0].mxu0 %v1712
      %v1798 = vpop.f32.mrb[0].mxu0
      %v1799 = vadd.f32 %v1700, %v1798
      %v1800 = vpop.f32.mrb[0].mxu0
      %v1801 = vadd.f32 %v1700, %v1800
      %1802 = vdwg.mxu0
      %1803 = vmatprep.subr.mxu0 %v1667
      %1804 = vmatpush1.msra.mxu0 %v1666
      %1805 = vmatprep.subr.mxu0 %v1671
      %1806 = vmatpush1.msra.mxu0 %v1670
      %1807 = vmatprep.subr.mxu0 0.0
      %1808 = vmatpush1.msra.mxu0 0.0
      %1809 = vmatprep.subr.mxu0 0.0
      %1810 = vmatpush1.msra.mxu0 0.0
      %1811 = vmatprep.subr.mxu0 0.0
      %1812 = vmatpush1.msra.mxu0 0.0
      %1813 = vmatprep.subr.mxu0 0.0
      %1814 = vmatpush1.msra.mxu0 0.0
      %1815 = vmatprep.subr.mxu0 0.0
      %1816 = vmatpush1.msra.mxu0 0.0
      %1817 = vmatprep.subr.mxu0 0.0
      %1818 = vmatpush1.msra.mxu0 0.0
      %1819 = vmatprep.subr.mxu0 0.0
      %1820 = vmatpush1.msra.mxu0 0.0
      %1821 = vmatprep.subr.mxu0 0.0
      %1822 = vmatpush1.msra.mxu0 0.0
      %1823 = vmatprep.subr.mxu0 0.0
      %1824 = vmatpush1.msra.mxu0 0.0
      %1825 = vmatprep.subr.mxu0 0.0
      %1826 = vmatpush1.msra.mxu0 0.0
      %1827 = vmatprep.subr.mxu0 0.0
      %1828 = vmatpush1.msra.mxu0 0.0
      %1829 = vmatprep.subr.mxu0 0.0
      %1830 = vmatpush1.msra.mxu0 0.0
      %1831 = vmatprep.subr.mxu0 0.0
      %1832 = vmatpush1.msra.mxu0 0.0
      %1833 = vmatprep.subr.mxu0 0.0
      %1834 = vmatpush1.msra.mxu0 0.0
      %1835 = vmatprep.subr.mxu0 0.0
      %1836 = vmatpush1.msra.mxu0 0.0
      %1837 = vmatprep.subr.mxu0 0.0
      %1838 = vmatpush1.msra.mxu0 0.0
      %1839 = vmatprep.subr.mxu0 0.0
      %1840 = vmatpush1.msra.mxu0 0.0
      %1841 = vmatprep.subr.mxu0 0.0
      %1842 = vmatpush1.msra.mxu0 0.0
      %1843 = vmatprep.subr.mxu0 0.0
      %1844 = vmatpush1.msra.mxu0 0.0
      %1845 = vmatprep.subr.mxu0 0.0
      %1846 = vmatpush1.msra.mxu0 0.0
      %1847 = vmatprep.subr.mxu0 0.0
      %1848 = vmatpush1.msra.mxu0 0.0
      %1849 = vmatprep.subr.mxu0 0.0
      %1850 = vmatpush1.msra.mxu0 0.0
      %1851 = vmatprep.subr.mxu0 0.0
      %1852 = vmatpush1.msra.mxu0 0.0
      %1853 = vmatprep.subr.mxu0 0.0
      %1854 = vmatpush1.msra.mxu0 0.0
      %1855 = vmatprep.subr.mxu0 0.0
      %1856 = vmatpush1.msra.mxu0 0.0
      %1857 = vmatprep.subr.mxu0 0.0
      %1858 = vmatpush1.msra.mxu0 0.0
      %1859 = vmatprep.subr.mxu0 0.0
      %1860 = vmatpush1.msra.mxu0 0.0
      %1861 = vmatprep.subr.mxu0 0.0
      %1862 = vmatpush1.msra.mxu0 0.0
      %1863 = vmatprep.subr.mxu0 0.0
      %1864 = vmatpush1.msra.mxu0 0.0
      %1865 = vmatprep.subr.mxu0 0.0
      %1866 = vmatpush1.msra.mxu0 0.0
      %1867 = vmatprep.mubr.f32.mxu0 0.0
      %1868 = vmatmul.mubr.f32.gmra.mrb[0].mxu0 %v1703
      %v1869 = vpop.f32.mrb[0].mxu0
      %v1870 = vadd.f32 %v1685, %v1869
      %v1871 = vpop.f32.mrb[0].mxu0
      %v1872 = vadd.f32 %v1685, %v1871
      %1873 = vmatprep.mubr.f32.mxu0 0.0
      %1874 = vmatmul.mubr.f32.gmra.mrb[0].mxu0 %v1706
      %v1875 = vpop.f32.mrb[0].mxu0
      %v1876 = vadd.f32 %v1690, %v1875
      %v1877 = vpop.f32.mrb[0].mxu0
      %v1878 = vadd.f32 %v1690, %v1877
      %1879 = vmatprep.mubr.f32.mxu0 0.0
      %1880 = vmatmul.mubr.f32.gmra.mrb[0].mxu0 %v1709
      %v1881 = vpop.f32.mrb[0].mxu0
      %v1882 = vadd.f32 %v1695, %v1881
      %v1883 = vpop.f32.mrb[0].mxu0
      %v1884 = vadd.f32 %v1695, %v1883
      %1885 = vmatprep.mubr.f32.mxu0 0.0
      %1886 = vmatmul.mubr.f32.gmra.mrb[0].mxu0 %v1712
      %v1887 = vpop.f32.mrb[0].mxu0
      %v1888 = vadd.f32 %v1700, %v1887
      %v1889 = vpop.f32.mrb[0].mxu0
      %v1890 = vadd.f32 %v1700, %v1889
      %1891 = vdwg.mxu0
      %v1892 = vadd.f32 %v1330, %v1781
      %v1893 = vadd.f32 %v1331, %v1783
      %v1894 = vadd.f32 %v1332, %v1870
      %v1895 = vadd.f32 %v1333, %v1872
      %v1896 = vadd.f32 %v1334, %v1787
      %v1897 = vadd.f32 %v1335, %v1789
      %v1898 = vadd.f32 %v1336, %v1876
      %v1899 = vadd.f32 %v1337, %v1878
      %v1900 = vadd.f32 %v1793, %v1346
      %v1901 = vadd.f32 %v1795, %v1347
      %v1902 = vadd.f32 %v1882, %v1348
      %v1903 = vadd.f32 %v1884, %v1349
      %v1904 = vadd.f32 %v1799, %v1350
      %v1905 = vadd.f32 %v1801, %v1351
      %v1906 = vadd.f32 %v1888, %v1352
      %v1907 = vadd.f32 %v1890, %v1353
      %v1908 = vmul.f32 %v1900, %v541
      %v1909 = vmul.f32 %v1901, %v542
      %v1910 = vmul.f32 %v1902, %v543
      %v1911 = vmul.f32 %v1903, %v544
      %v1912 = vmul.f32 %v1904, %v541
      %v1913 = vmul.f32 %v1905, %v542
      %v1914 = vmul.f32 %v1906, %v543
      %v1915 = vmul.f32 %v1907, %v544
      %1916 = vrot.lane.b32.xlu0 %v1908, 1
      %v1917 = vpop.permute.xlu0 %1916
      %1918 = vrot.lane.b32.xlu0 %v1912, 1
      %v1919 = vpop.permute.xlu0 %1918
      %1920 = vrot.lane.b32.xlu0 %v1909, 1
      %v1921 = vpop.permute.xlu0 %1920
      %1922 = vrot.lane.b32.xlu0 %v1913, 1
      %v1923 = vpop.permute.xlu0 %1922
      %1924 = vrot.lane.b32.xlu0 %v1910, 1
      %v1925 = vpop.permute.xlu0 %1924
      %1926 = vrot.lane.b32.xlu0 %v1914, 1
      %v1927 = vpop.permute.xlu0 %1926
      %1928 = vrot.lane.b32.xlu0 %v1911, 1
      %v1929 = vpop.permute.xlu0 %1928
      %1930 = vrot.lane.b32.xlu0 %v1915, 1
      %v1931 = vpop.permute.xlu0 %1930
      %v1932 = vsel %vm810, %v1925, %v1929
      %v1933 = vsel %vm810, %v1927, %v1931
      %v1934 = vsel %vm810, %v1921, %v1925
      %v1935 = vsel %vm810, %v1923, %v1927
      %v1936 = vsel %vm810, %v1917, %v1921
      %v1937 = vsel %vm810, %v1919, %v1923
      %v1938 = vsel %vm810, %v1929, %v1917
      %v1939 = vsel %vm810, %v1931, %v1919
      %1940 = vrot.lane.b32.xlu0 %v1908, 127
      %v1941 = vpop.permute.xlu0 %1940
      %1942 = vrot.lane.b32.xlu0 %v1912, 127
      %v1943 = vpop.permute.xlu0 %1942
      %1944 = vrot.lane.b32.xlu0 %v1909, 127
      %v1945 = vpop.permute.xlu0 %1944
      %1946 = vrot.lane.b32.xlu0 %v1913, 127
      %v1947 = vpop.permute.xlu0 %1946
      %1948 = vrot.lane.b32.xlu0 %v1910, 127
      %v1949 = vpop.permute.xlu0 %1948
      %1950 = vrot.lane.b32.xlu0 %v1914, 127
      %v1951 = vpop.permute.xlu0 %1950
      %1952 = vrot.lane.b32.xlu0 %v1911, 127
      %v1953 = vpop.permute.xlu0 %1952
      %1954 = vrot.lane.b32.xlu0 %v1915, 127
      %v1955 = vpop.permute.xlu0 %1954
      %v1956 = vsel %vm835, %v1949, %v1953
      %v1957 = vsel %vm835, %v1951, %v1955
      %v1958 = vsel %vm835, %v1945, %v1949
      %v1959 = vsel %vm835, %v1947, %v1951
      %v1960 = vsel %vm835, %v1941, %v1945
      %v1961 = vsel %vm835, %v1943, %v1947
      %v1962 = vsel %vm835, %v1953, %v1941
      %v1963 = vsel %vm835, %v1955, %v1943
      %s1964 = scalar_lea.vmem %s5, 64
      %v1965 = vld [vmem:[%s1964] sm:$0xff]
      %v1966 = vld [vmem:[%s1964 + $0x8] sm:$0xff]
      %v1967 = vld [vmem:[%s1964 + $0x10] sm:$0xff]
      %v1968 = vld [vmem:[%s1964 + $0x18] sm:$0xff]
      %s1969 = scalar_lea.vmem %s6, 64
      %v1970 = vld [vmem:[%s1969] sm:$0xff]
      %v1971 = vld [vmem:[%s1969 + $0x8] sm:$0xff]
      %v1972 = vld [vmem:[%s1969 + $0x10] sm:$0xff]
      %v1973 = vld [vmem:[%s1969 + $0x18] sm:$0xff]
      %1975 = vset.pattern.permute.xlu0 0
      %1976 = vperm.xlu0 %1975, %v1970
      %v1977 = vpop.permute.xlu0 %1976
      %1980 = vset.pattern.permute.xlu0 0
      %1981 = vperm.xlu0 %1980, %v1971
      %v1982 = vpop.permute.xlu0 %1981
      %1985 = vset.pattern.permute.xlu0 0
      %1986 = vperm.xlu0 %1985, %v1972
      %v1987 = vpop.permute.xlu0 %1986
      %1990 = vset.pattern.permute.xlu0 0
      %1991 = vperm.xlu0 %1990, %v1973
      %v1992 = vpop.permute.xlu0 %1991
      %v1995 = vsel %vm872, %v1965, 0
      %v1998 = vsel %vm872, %v1966, 0
      %v2001 = vsel %vm872, %v1967, 0
      %v2004 = vsel %vm872, %v1968, 0
      %2006 = vmatprep.subr.mxu0 %v1936
      %2007 = vmatpush1.msra.mxu0 %v1938
      %2008 = vmatprep.subr.mxu0 %v1937
      %2009 = vmatpush1.msra.mxu0 %v1939
      %2010 = vmatprep.subr.mxu0 %v1909
      %2011 = vmatpush1.msra.mxu0 %v1908
      %2012 = vmatprep.subr.mxu0 %v1913
      %2013 = vmatpush1.msra.mxu0 %v1912
      %2014 = vmatprep.subr.mxu0 %v1958
      %2015 = vmatpush1.msra.mxu0 %v1960
      %2016 = vmatprep.subr.mxu0 %v1959
      %2017 = vmatpush1.msra.mxu0 %v1961
      %2018 = vmatprep.subr.mxu0 %v640
      %2019 = vmatpush1.msra.mxu0 %v638
      %2020 = vmatprep.subr.mxu0 %v646
      %2021 = vmatpush1.msra.mxu0 %v644
      %2022 = vmatprep.subr.mxu0 0.0
      %2023 = vmatpush1.msra.mxu0 0.0
      %2024 = vmatprep.subr.mxu0 0.0
      %2025 = vmatpush1.msra.mxu0 0.0
      %2026 = vmatprep.subr.mxu0 0.0
      %2027 = vmatpush1.msra.mxu0 0.0
      %2028 = vmatprep.subr.mxu0 0.0
      %2029 = vmatpush1.msra.mxu0 0.0
      %2030 = vmatprep.subr.mxu0 0.0
      %2031 = vmatpush1.msra.mxu0 0.0
      %2032 = vmatprep.subr.mxu0 0.0
      %2033 = vmatpush1.msra.mxu0 0.0
      %2034 = vmatprep.subr.mxu0 0.0
      %2035 = vmatpush1.msra.mxu0 0.0
      %2036 = vmatprep.subr.mxu0 0.0
      %2037 = vmatpush1.msra.mxu0 0.0
      %2038 = vmatprep.subr.mxu0 0.0
      %2039 = vmatpush1.msra.mxu0 0.0
      %2040 = vmatprep.subr.mxu0 0.0
      %2041 = vmatpush1.msra.mxu0 0.0
      %2042 = vmatprep.subr.mxu0 0.0
      %2043 = vmatpush1.msra.mxu0 0.0
      %2044 = vmatprep.subr.mxu0 0.0
      %2045 = vmatpush1.msra.mxu0 0.0
      %2046 = vmatprep.subr.mxu0 0.0
      %2047 = vmatpush1.msra.mxu0 0.0
      %2048 = vmatprep.subr.mxu0 0.0
      %2049 = vmatpush1.msra.mxu0 0.0
      %2050 = vmatprep.subr.mxu0 0.0
      %2051 = vmatpush1.msra.mxu0 0.0
      %2052 = vmatprep.subr.mxu0 0.0
      %2053 = vmatpush1.msra.mxu0 0.0
      %2054 = vmatprep.subr.mxu0 0.0
      %2055 = vmatpush1.msra.mxu0 0.0
      %2056 = vmatprep.subr.mxu0 0.0
      %2057 = vmatpush1.msra.mxu0 0.0
      %2058 = vmatprep.subr.mxu0 0.0
      %2059 = vmatpush1.msra.mxu0 0.0
      %2060 = vmatprep.subr.mxu0 0.0
      %2061 = vmatpush1.msra.mxu0 0.0
      %2062 = vmatprep.subr.mxu0 0.0
      %2063 = vmatpush1.msra.mxu0 0.0
      %2064 = vmatprep.subr.mxu0 0.0
      %2065 = vmatpush1.msra.mxu0 0.0
      %2066 = vmatprep.subr.mxu0 0.0
      %2067 = vmatpush1.msra.mxu0 0.0
      %2068 = vmatprep.subr.mxu0 0.0
      %2069 = vmatpush1.msra.mxu0 0.0
      %2070 = vmatprep.mubr.f32.mxu0 0.0
      %2071 = vmatmul.mubr.f32.gmra.mrb[0].mxu0 %v1995
      %v2072 = vpop.f32.mrb[0].mxu0
      %v2073 = vadd.f32 %v1977, %v2072
      %v2074 = vpop.f32.mrb[0].mxu0
      %v2075 = vadd.f32 %v1977, %v2074
      %2076 = vmatprep.mubr.f32.mxu0 0.0
      %2077 = vmatmul.mubr.f32.gmra.mrb[0].mxu0 %v1998
      %v2078 = vpop.f32.mrb[0].mxu0
      %v2079 = vadd.f32 %v1982, %v2078
      %v2080 = vpop.f32.mrb[0].mxu0
      %v2081 = vadd.f32 %v1982, %v2080
      %2082 = vmatprep.mubr.f32.mxu0 0.0
      %2083 = vmatmul.mubr.f32.gmra.mrb[0].mxu0 %v2001
      %v2084 = vpop.f32.mrb[0].mxu0
      %v2085 = vadd.f32 %v1987, %v2084
      %v2086 = vpop.f32.mrb[0].mxu0
      %v2087 = vadd.f32 %v1987, %v2086
      %2088 = vmatprep.mubr.f32.mxu0 0.0
      %2089 = vmatmul.mubr.f32.gmra.mrb[0].mxu0 %v2004
      %v2090 = vpop.f32.mrb[0].mxu0
      %v2091 = vadd.f32 %v1992, %v2090
      %v2092 = vpop.f32.mrb[0].mxu0
      %v2093 = vadd.f32 %v1992, %v2092
      %2094 = vdwg.mxu0
      %2095 = vmatprep.subr.mxu0 %v1932
      %2096 = vmatpush1.msra.mxu0 %v1934
      %2097 = vmatprep.subr.mxu0 %v1933
      %2098 = vmatpush1.msra.mxu0 %v1935
      %2099 = vmatprep.subr.mxu0 %v1911
      %2100 = vmatpush1.msra.mxu0 %v1910
      %2101 = vmatprep.subr.mxu0 %v1915
      %2102 = vmatpush1.msra.mxu0 %v1914
      %2103 = vmatprep.subr.mxu0 %v1962
      %2104 = vmatpush1.msra.mxu0 %v1956
      %2105 = vmatprep.subr.mxu0 %v1963
      %2106 = vmatpush1.msra.mxu0 %v1957
      %2107 = vmatprep.subr.mxu0 %v717
      %2108 = vmatpush1.msra.mxu0 %v715
      %2109 = vmatprep.subr.mxu0 %v723
      %2110 = vmatpush1.msra.mxu0 %v721
      %2111 = vmatprep.subr.mxu0 0.0
      %2112 = vmatpush1.msra.mxu0 0.0
      %2113 = vmatprep.subr.mxu0 0.0
      %2114 = vmatpush1.msra.mxu0 0.0
      %2115 = vmatprep.subr.mxu0 0.0
      %2116 = vmatpush1.msra.mxu0 0.0
      %2117 = vmatprep.subr.mxu0 0.0
      %2118 = vmatpush1.msra.mxu0 0.0
      %2119 = vmatprep.subr.mxu0 0.0
      %2120 = vmatpush1.msra.mxu0 0.0
      %2121 = vmatprep.subr.mxu0 0.0
      %2122 = vmatpush1.msra.mxu0 0.0
      %2123 = vmatprep.subr.mxu0 0.0
      %2124 = vmatpush1.msra.mxu0 0.0
      %2125 = vmatprep.subr.mxu0 0.0
      %2126 = vmatpush1.msra.mxu0 0.0
      %2127 = vmatprep.subr.mxu0 0.0
      %2128 = vmatpush1.msra.mxu0 0.0
      %2129 = vmatprep.subr.mxu0 0.0
      %2130 = vmatpush1.msra.mxu0 0.0
      %2131 = vmatprep.subr.mxu0 0.0
      %2132 = vmatpush1.msra.mxu0 0.0
      %2133 = vmatprep.subr.mxu0 0.0
      %2134 = vmatpush1.msra.mxu0 0.0
      %2135 = vmatprep.subr.mxu0 0.0
      %2136 = vmatpush1.msra.mxu0 0.0
      %2137 = vmatprep.subr.mxu0 0.0
      %2138 = vmatpush1.msra.mxu0 0.0
      %2139 = vmatprep.subr.mxu0 0.0
      %2140 = vmatpush1.msra.mxu0 0.0
      %2141 = vmatprep.subr.mxu0 0.0
      %2142 = vmatpush1.msra.mxu0 0.0
      %2143 = vmatprep.subr.mxu0 0.0
      %2144 = vmatpush1.msra.mxu0 0.0
      %2145 = vmatprep.subr.mxu0 0.0
      %2146 = vmatpush1.msra.mxu0 0.0
      %2147 = vmatprep.subr.mxu0 0.0
      %2148 = vmatpush1.msra.mxu0 0.0
      %2149 = vmatprep.subr.mxu0 0.0
      %2150 = vmatpush1.msra.mxu0 0.0
      %2151 = vmatprep.subr.mxu0 0.0
      %2152 = vmatpush1.msra.mxu0 0.0
      %2153 = vmatprep.subr.mxu0 0.0
      %2154 = vmatpush1.msra.mxu0 0.0
      %2155 = vmatprep.subr.mxu0 0.0
      %2156 = vmatpush1.msra.mxu0 0.0
      %2157 = vmatprep.subr.mxu0 0.0
      %2158 = vmatpush1.msra.mxu0 0.0
      %2159 = vmatprep.mubr.f32.mxu0 0.0
      %2160 = vmatmul.mubr.f32.gmra.mrb[0].mxu0 %v1995
      %v2161 = vpop.f32.mrb[0].mxu0
      %v2162 = vadd.f32 %v1977, %v2161
      %v2163 = vpop.f32.mrb[0].mxu0
      %v2164 = vadd.f32 %v1977, %v2163
      %2165 = vmatprep.mubr.f32.mxu0 0.0
      %2166 = vmatmul.mubr.f32.gmra.mrb[0].mxu0 %v1998
      %v2167 = vpop.f32.mrb[0].mxu0
      %v2168 = vadd.f32 %v1982, %v2167
      %v2169 = vpop.f32.mrb[0].mxu0
      %v2170 = vadd.f32 %v1982, %v2169
      %2171 = vmatprep.mubr.f32.mxu0 0.0
      %2172 = vmatmul.mubr.f32.gmra.mrb[0].mxu0 %v2001
      %v2173 = vpop.f32.mrb[0].mxu0
      %v2174 = vadd.f32 %v1987, %v2173
      %v2175 = vpop.f32.mrb[0].mxu0
      %v2176 = vadd.f32 %v1987, %v2175
      %2177 = vmatprep.mubr.f32.mxu0 0.0
      %2178 = vmatmul.mubr.f32.gmra.mrb[0].mxu0 %v2004
      %v2179 = vpop.f32.mrb[0].mxu0
      %v2180 = vadd.f32 %v1992, %v2179
      %v2181 = vpop.f32.mrb[0].mxu0
      %v2182 = vadd.f32 %v1992, %v2181
      %2183 = vdwg.mxu0
      %v2184 = vtanh.pop %v2073
      %v2185 = vtanh.pop %v2075
      %v2186 = vtanh.pop %v2162
      %v2187 = vtanh.pop %v2164
      %v2188 = vtanh.pop %v2079
      %v2189 = vtanh.pop %v2081
      %v2190 = vtanh.pop %v2168
      %v2191 = vtanh.pop %v2170
      %v2192 = vmul.f32 %v2085, 0.5
      %v2193 = vmul.f32 %v2087, 0.5
      %v2194 = vmul.f32 %v2174, 0.5
      %v2195 = vmul.f32 %v2176, 0.5
      %v2196 = vmul.f32 %v2091, 0.5
      %v2197 = vmul.f32 %v2093, 0.5
      %v2198 = vmul.f32 %v2180, 0.5
      %v2199 = vmul.f32 %v2182, 0.5
      %v2200 = vtanh.pop %v2192
      %v2201 = vtanh.pop %v2193
      %v2202 = vtanh.pop %v2194
      %v2203 = vtanh.pop %v2195
      %v2204 = vtanh.pop %v2196
      %v2205 = vtanh.pop %v2197
      %v2206 = vtanh.pop %v2198
      %v2207 = vtanh.pop %v2199
      %v2208 = vadd.f32 %v2200, 1.0
      %v2209 = vadd.f32 %v2201, 1.0
      %v2210 = vadd.f32 %v2202, 1.0
      %v2211 = vadd.f32 %v2203, 1.0
      %v2212 = vadd.f32 %v2204, 1.0
      %v2213 = vadd.f32 %v2205, 1.0
      %v2214 = vadd.f32 %v2206, 1.0
      %v2215 = vadd.f32 %v2207, 1.0
      %v2216 = vmul.f32 %v2208, 0.5
      %v2217 = vmul.f32 %v2209, 0.5
      %v2218 = vmul.f32 %v2210, 0.5
      %v2219 = vmul.f32 %v2211, 0.5
      %v2220 = vmul.f32 %v2212, 0.5
      %v2221 = vmul.f32 %v2213, 0.5
      %v2222 = vmul.f32 %v2214, 0.5
      %v2223 = vmul.f32 %v2215, 0.5
      %v2224 = vmul.f32 %v2184, %v2216
      %v2225 = vmul.f32 %v2185, %v2217
      %v2226 = vmul.f32 %v2186, %v2218
      %v2227 = vmul.f32 %v2187, %v2219
      %v2228 = vmul.f32 %v2188, %v2220
      %v2229 = vmul.f32 %v2189, %v2221
      %v2230 = vmul.f32 %v2190, %v2222
      %v2231 = vmul.f32 %v2191, %v2223
      %s2232 = scalar_lea.vmem %s7, 64
      %v2233 = vld [vmem:[%s2232] sm:$0xff]
      %v2234 = vld [vmem:[%s2232 + $0x8] sm:$0xff]
      %v2235 = vld [vmem:[%s2232 + $0x10] sm:$0xff]
      %v2236 = vld [vmem:[%s2232 + $0x18] sm:$0xff]
      %s2237 = scalar_lea.vmem %s8, 64
      %v2238 = vld [vmem:[%s2237] sm:$0xff]
      %v2239 = vld [vmem:[%s2237 + $0x8] sm:$0xff]
      %v2240 = vld [vmem:[%s2237 + $0x10] sm:$0xff]
      %v2241 = vld [vmem:[%s2237 + $0x18] sm:$0xff]
      %2243 = vset.pattern.permute.xlu0 0
      %2244 = vperm.xlu0 %2243, %v2238
      %v2245 = vpop.permute.xlu0 %2244
      %2248 = vset.pattern.permute.xlu0 0
      %2249 = vperm.xlu0 %2248, %v2239
      %v2250 = vpop.permute.xlu0 %2249
      %2253 = vset.pattern.permute.xlu0 0
      %2254 = vperm.xlu0 %2253, %v2240
      %v2255 = vpop.permute.xlu0 %2254
      %2258 = vset.pattern.permute.xlu0 0
      %2259 = vperm.xlu0 %2258, %v2241
      %v2260 = vpop.permute.xlu0 %2259
      %v2263 = vsel %vm1139, %v2233, 0
      %v2266 = vsel %vm1139, %v2234, 0
      %v2269 = vsel %vm1139, %v2235, 0
      %v2272 = vsel %vm1139, %v2236, 0
      %2274 = vmatprep.subr.mxu0 %v2225
      %2275 = vmatpush1.msra.mxu0 %v2224
      %2276 = vmatprep.subr.mxu0 %v2229
      %2277 = vmatpush1.msra.mxu0 %v2228
      %2278 = vmatprep.subr.mxu0 0.0
      %2279 = vmatpush1.msra.mxu0 0.0
      %2280 = vmatprep.subr.mxu0 0.0
      %2281 = vmatpush1.msra.mxu0 0.0
      %2282 = vmatprep.subr.mxu0 0.0
      %2283 = vmatpush1.msra.mxu0 0.0
      %2284 = vmatprep.subr.mxu0 0.0
      %2285 = vmatpush1.msra.mxu0 0.0
      %2286 = vmatprep.subr.mxu0 0.0
      %2287 = vmatpush1.msra.mxu0 0.0
      %2288 = vmatprep.subr.mxu0 0.0
      %2289 = vmatpush1.msra.mxu0 0.0
      %2290 = vmatprep.subr.mxu0 0.0
      %2291 = vmatpush1.msra.mxu0 0.0
      %2292 = vmatprep.subr.mxu0 0.0
      %2293 = vmatpush1.msra.mxu0 0.0
      %2294 = vmatprep.subr.mxu0 0.0
      %2295 = vmatpush1.msra.mxu0 0.0
      %2296 = vmatprep.subr.mxu0 0.0
      %2297 = vmatpush1.msra.mxu0 0.0
      %2298 = vmatprep.subr.mxu0 0.0
      %2299 = vmatpush1.msra.mxu0 0.0
      %2300 = vmatprep.subr.mxu0 0.0
      %2301 = vmatpush1.msra.mxu0 0.0
      %2302 = vmatprep.subr.mxu0 0.0
      %2303 = vmatpush1.msra.mxu0 0.0
      %2304 = vmatprep.subr.mxu0 0.0
      %2305 = vmatpush1.msra.mxu0 0.0
      %2306 = vmatprep.subr.mxu0 0.0
      %2307 = vmatpush1.msra.mxu0 0.0
      %2308 = vmatprep.subr.mxu0 0.0
      %2309 = vmatpush1.msra.mxu0 0.0
      %2310 = vmatprep.subr.mxu0 0.0
      %2311 = vmatpush1.msra.mxu0 0.0
      %2312 = vmatprep.subr.mxu0 0.0
      %2313 = vmatpush1.msra.mxu0 0.0
      %2314 = vmatprep.subr.mxu0 0.0
      %2315 = vmatpush1.msra.mxu0 0.0
      %2316 = vmatprep.subr.mxu0 0.0
      %2317 = vmatpush1.msra.mxu0 0.0
      %2318 = vmatprep.subr.mxu0 0.0
      %2319 = vmatpush1.msra.mxu0 0.0
      %2320 = vmatprep.subr.mxu0 0.0
      %2321 = vmatpush1.msra.mxu0 0.0
      %2322 = vmatprep.subr.mxu0 0.0
      %2323 = vmatpush1.msra.mxu0 0.0
      %2324 = vmatprep.subr.mxu0 0.0
      %2325 = vmatpush1.msra.mxu0 0.0
      %2326 = vmatprep.subr.mxu0 0.0
      %2327 = vmatpush1.msra.mxu0 0.0
      %2328 = vmatprep.subr.mxu0 0.0
      %2329 = vmatpush1.msra.mxu0 0.0
      %2330 = vmatprep.subr.mxu0 0.0
      %2331 = vmatpush1.msra.mxu0 0.0
      %2332 = vmatprep.subr.mxu0 0.0
      %2333 = vmatpush1.msra.mxu0 0.0
      %2334 = vmatprep.subr.mxu0 0.0
      %2335 = vmatpush1.msra.mxu0 0.0
      %2336 = vmatprep.subr.mxu0 0.0
      %2337 = vmatpush1.msra.mxu0 0.0
      %2338 = vmatprep.mubr.f32.mxu0 0.0
      %2339 = vmatmul.mubr.f32.gmra.mrb[0].mxu0 %v2263
      %v2340 = vpop.f32.mrb[0].mxu0
      %v2341 = vadd.f32 %v2245, %v2340
      %v2342 = vpop.f32.mrb[0].mxu0
      %v2343 = vadd.f32 %v2245, %v2342
      %2344 = vmatprep.mubr.f32.mxu0 0.0
      %2345 = vmatmul.mubr.f32.gmra.mrb[0].mxu0 %v2266
      %v2346 = vpop.f32.mrb[0].mxu0
      %v2347 = vadd.f32 %v2250, %v2346
      %v2348 = vpop.f32.mrb[0].mxu0
      %v2349 = vadd.f32 %v2250, %v2348
      %2350 = vmatprep.mubr.f32.mxu0 0.0
      %2351 = vmatmul.mubr.f32.gmra.mrb[0].mxu0 %v2269
      %v2352 = vpop.f32.mrb[0].mxu0
      %v2353 = vadd.f32 %v2255, %v2352
      %v2354 = vpop.f32.mrb[0].mxu0
      %v2355 = vadd.f32 %v2255, %v2354
      %2356 = vmatprep.mubr.f32.mxu0 0.0
      %2357 = vmatmul.mubr.f32.gmra.mrb[0].mxu0 %v2272
      %v2358 = vpop.f32.mrb[0].mxu0
      %v2359 = vadd.f32 %v2260, %v2358
      %v2360 = vpop.f32.mrb[0].mxu0
      %v2361 = vadd.f32 %v2260, %v2360
      %2362 = vdwg.mxu0
      %2363 = vmatprep.subr.mxu0 %v2227
      %2364 = vmatpush1.msra.mxu0 %v2226
      %2365 = vmatprep.subr.mxu0 %v2231
      %2366 = vmatpush1.msra.mxu0 %v2230
      %2367 = vmatprep.subr.mxu0 0.0
      %2368 = vmatpush1.msra.mxu0 0.0
      %2369 = vmatprep.subr.mxu0 0.0
      %2370 = vmatpush1.msra.mxu0 0.0
      %2371 = vmatprep.subr.mxu0 0.0
      %2372 = vmatpush1.msra.mxu0 0.0
      %2373 = vmatprep.subr.mxu0 0.0
      %2374 = vmatpush1.msra.mxu0 0.0
      %2375 = vmatprep.subr.mxu0 0.0
      %2376 = vmatpush1.msra.mxu0 0.0
      %2377 = vmatprep.subr.mxu0 0.0
      %2378 = vmatpush1.msra.mxu0 0.0
      %2379 = vmatprep.subr.mxu0 0.0
      %2380 = vmatpush1.msra.mxu0 0.0
      %2381 = vmatprep.subr.mxu0 0.0
      %2382 = vmatpush1.msra.mxu0 0.0
      %2383 = vmatprep.subr.mxu0 0.0
      %2384 = vmatpush1.msra.mxu0 0.0
      %2385 = vmatprep.subr.mxu0 0.0
      %2386 = vmatpush1.msra.mxu0 0.0
      %2387 = vmatprep.subr.mxu0 0.0
      %2388 = vmatpush1.msra.mxu0 0.0
      %2389 = vmatprep.subr.mxu0 0.0
      %2390 = vmatpush1.msra.mxu0 0.0
      %2391 = vmatprep.subr.mxu0 0.0
      %2392 = vmatpush1.msra.mxu0 0.0
      %2393 = vmatprep.subr.mxu0 0.0
      %2394 = vmatpush1.msra.mxu0 0.0
      %2395 = vmatprep.subr.mxu0 0.0
      %2396 = vmatpush1.msra.mxu0 0.0
      %2397 = vmatprep.subr.mxu0 0.0
      %2398 = vmatpush1.msra.mxu0 0.0
      %2399 = vmatprep.subr.mxu0 0.0
      %2400 = vmatpush1.msra.mxu0 0.0
      %2401 = vmatprep.subr.mxu0 0.0
      %2402 = vmatpush1.msra.mxu0 0.0
      %2403 = vmatprep.subr.mxu0 0.0
      %2404 = vmatpush1.msra.mxu0 0.0
      %2405 = vmatprep.subr.mxu0 0.0
      %2406 = vmatpush1.msra.mxu0 0.0
      %2407 = vmatprep.subr.mxu0 0.0
      %2408 = vmatpush1.msra.mxu0 0.0
      %2409 = vmatprep.subr.mxu0 0.0
      %2410 = vmatpush1.msra.mxu0 0.0
      %2411 = vmatprep.subr.mxu0 0.0
      %2412 = vmatpush1.msra.mxu0 0.0
      %2413 = vmatprep.subr.mxu0 0.0
      %2414 = vmatpush1.msra.mxu0 0.0
      %2415 = vmatprep.subr.mxu0 0.0
      %2416 = vmatpush1.msra.mxu0 0.0
      %2417 = vmatprep.subr.mxu0 0.0
      %2418 = vmatpush1.msra.mxu0 0.0
      %2419 = vmatprep.subr.mxu0 0.0
      %2420 = vmatpush1.msra.mxu0 0.0
      %2421 = vmatprep.subr.mxu0 0.0
      %2422 = vmatpush1.msra.mxu0 0.0
      %2423 = vmatprep.subr.mxu0 0.0
      %2424 = vmatpush1.msra.mxu0 0.0
      %2425 = vmatprep.subr.mxu0 0.0
      %2426 = vmatpush1.msra.mxu0 0.0
      %2427 = vmatprep.mubr.f32.mxu0 0.0
      %2428 = vmatmul.mubr.f32.gmra.mrb[0].mxu0 %v2263
      %v2429 = vpop.f32.mrb[0].mxu0
      %v2430 = vadd.f32 %v2245, %v2429
      %v2431 = vpop.f32.mrb[0].mxu0
      %v2432 = vadd.f32 %v2245, %v2431
      %2433 = vmatprep.mubr.f32.mxu0 0.0
      %2434 = vmatmul.mubr.f32.gmra.mrb[0].mxu0 %v2266
      %v2435 = vpop.f32.mrb[0].mxu0
      %v2436 = vadd.f32 %v2250, %v2435
      %v2437 = vpop.f32.mrb[0].mxu0
      %v2438 = vadd.f32 %v2250, %v2437
      %2439 = vmatprep.mubr.f32.mxu0 0.0
      %2440 = vmatmul.mubr.f32.gmra.mrb[0].mxu0 %v2269
      %v2441 = vpop.f32.mrb[0].mxu0
      %v2442 = vadd.f32 %v2255, %v2441
      %v2443 = vpop.f32.mrb[0].mxu0
      %v2444 = vadd.f32 %v2255, %v2443
      %2445 = vmatprep.mubr.f32.mxu0 0.0
      %2446 = vmatmul.mubr.f32.gmra.mrb[0].mxu0 %v2272
      %v2447 = vpop.f32.mrb[0].mxu0
      %v2448 = vadd.f32 %v2260, %v2447
      %v2449 = vpop.f32.mrb[0].mxu0
      %v2450 = vadd.f32 %v2260, %v2449
      %2451 = vdwg.mxu0
      %v2452 = vadd.f32 %v1892, %v2341
      %v2453 = vadd.f32 %v1893, %v2343
      %v2454 = vadd.f32 %v1894, %v2430
      %v2455 = vadd.f32 %v1895, %v2432
      %v2456 = vadd.f32 %v1896, %v2347
      %v2457 = vadd.f32 %v1897, %v2349
      %v2458 = vadd.f32 %v1898, %v2436
      %v2459 = vadd.f32 %v1899, %v2438
      %v2460 = vadd.f32 %v2353, %v1908
      %v2461 = vadd.f32 %v2355, %v1909
      %v2462 = vadd.f32 %v2442, %v1910
      %v2463 = vadd.f32 %v2444, %v1911
      %v2464 = vadd.f32 %v2359, %v1912
      %v2465 = vadd.f32 %v2361, %v1913
      %v2466 = vadd.f32 %v2448, %v1914
      %v2467 = vadd.f32 %v2450, %v1915
      %v2468 = vmul.f32 %v2460, %v541
      %v2469 = vmul.f32 %v2461, %v542
      %v2470 = vmul.f32 %v2462, %v543
      %v2471 = vmul.f32 %v2463, %v544
      %v2472 = vmul.f32 %v2464, %v541
      %v2473 = vmul.f32 %v2465, %v542
      %v2474 = vmul.f32 %v2466, %v543
      %v2475 = vmul.f32 %v2467, %v544
      %2476 = vrot.lane.b32.xlu0 %v2468, 2
      %v2477 = vpop.permute.xlu0 %2476
      %2478 = vrot.lane.b32.xlu0 %v2472, 2
      %v2479 = vpop.permute.xlu0 %2478
      %2480 = vrot.lane.b32.xlu0 %v2469, 2
      %v2481 = vpop.permute.xlu0 %2480
      %2482 = vrot.lane.b32.xlu0 %v2473, 2
      %v2483 = vpop.permute.xlu0 %2482
      %2484 = vrot.lane.b32.xlu0 %v2470, 2
      %v2485 = vpop.permute.xlu0 %2484
      %2486 = vrot.lane.b32.xlu0 %v2474, 2
      %v2487 = vpop.permute.xlu0 %2486
      %2488 = vrot.lane.b32.xlu0 %v2471, 2
      %v2489 = vpop.permute.xlu0 %2488
      %2490 = vrot.lane.b32.xlu0 %v2475, 2
      %v2491 = vpop.permute.xlu0 %2490
      %v2492 = vsel %vm1370, %v2485, %v2489
      %v2493 = vsel %vm1370, %v2487, %v2491
      %v2494 = vsel %vm1370, %v2481, %v2485
      %v2495 = vsel %vm1370, %v2483, %v2487
      %v2496 = vsel %vm1370, %v2477, %v2481
      %v2497 = vsel %vm1370, %v2479, %v2483
      %v2498 = vsel %vm1370, %v2489, %v2477
      %v2499 = vsel %vm1370, %v2491, %v2479
      %2500 = vrot.lane.b32.xlu0 %v2468, 126
      %v2501 = vpop.permute.xlu0 %2500
      %2502 = vrot.lane.b32.xlu0 %v2472, 126
      %v2503 = vpop.permute.xlu0 %2502
      %2504 = vrot.lane.b32.xlu0 %v2469, 126
      %v2505 = vpop.permute.xlu0 %2504
      %2506 = vrot.lane.b32.xlu0 %v2473, 126
      %v2507 = vpop.permute.xlu0 %2506
      %2508 = vrot.lane.b32.xlu0 %v2470, 126
      %v2509 = vpop.permute.xlu0 %2508
      %2510 = vrot.lane.b32.xlu0 %v2474, 126
      %v2511 = vpop.permute.xlu0 %2510
      %2512 = vrot.lane.b32.xlu0 %v2471, 126
      %v2513 = vpop.permute.xlu0 %2512
      %2514 = vrot.lane.b32.xlu0 %v2475, 126
      %v2515 = vpop.permute.xlu0 %2514
      %v2516 = vsel %vm1395, %v2509, %v2513
      %v2517 = vsel %vm1395, %v2511, %v2515
      %v2518 = vsel %vm1395, %v2505, %v2509
      %v2519 = vsel %vm1395, %v2507, %v2511
      %v2520 = vsel %vm1395, %v2501, %v2505
      %v2521 = vsel %vm1395, %v2503, %v2507
      %v2522 = vsel %vm1395, %v2513, %v2501
      %v2523 = vsel %vm1395, %v2515, %v2503
      %s2524 = scalar_lea.vmem %s5, 96
      %v2525 = vld [vmem:[%s2524] sm:$0xff]
      %v2526 = vld [vmem:[%s2524 + $0x8] sm:$0xff]
      %v2527 = vld [vmem:[%s2524 + $0x10] sm:$0xff]
      %v2528 = vld [vmem:[%s2524 + $0x18] sm:$0xff]
      %s2529 = scalar_lea.vmem %s6, 96
      %v2530 = vld [vmem:[%s2529] sm:$0xff]
      %v2531 = vld [vmem:[%s2529 + $0x8] sm:$0xff]
      %v2532 = vld [vmem:[%s2529 + $0x10] sm:$0xff]
      %v2533 = vld [vmem:[%s2529 + $0x18] sm:$0xff]
      %2535 = vset.pattern.permute.xlu0 0
      %2536 = vperm.xlu0 %2535, %v2530
      %v2537 = vpop.permute.xlu0 %2536
      %2540 = vset.pattern.permute.xlu0 0
      %2541 = vperm.xlu0 %2540, %v2531
      %v2542 = vpop.permute.xlu0 %2541
      %2545 = vset.pattern.permute.xlu0 0
      %2546 = vperm.xlu0 %2545, %v2532
      %v2547 = vpop.permute.xlu0 %2546
      %2550 = vset.pattern.permute.xlu0 0
      %2551 = vperm.xlu0 %2550, %v2533
      %v2552 = vpop.permute.xlu0 %2551
      %v2555 = vsel %vm872, %v2525, 0
      %v2558 = vsel %vm872, %v2526, 0
      %v2561 = vsel %vm872, %v2527, 0
      %v2564 = vsel %vm872, %v2528, 0
      %2566 = vmatprep.subr.mxu0 %v2496
      %2567 = vmatpush1.msra.mxu0 %v2498
      %2568 = vmatprep.subr.mxu0 %v2497
      %2569 = vmatpush1.msra.mxu0 %v2499
      %2570 = vmatprep.subr.mxu0 %v2469
      %2571 = vmatpush1.msra.mxu0 %v2468
      %2572 = vmatprep.subr.mxu0 %v2473
      %2573 = vmatpush1.msra.mxu0 %v2472
      %2574 = vmatprep.subr.mxu0 %v2518
      %2575 = vmatpush1.msra.mxu0 %v2520
      %2576 = vmatprep.subr.mxu0 %v2519
      %2577 = vmatpush1.msra.mxu0 %v2521
      %2578 = vmatprep.subr.mxu0 %v640
      %2579 = vmatpush1.msra.mxu0 %v638
      %2580 = vmatprep.subr.mxu0 %v646
      %2581 = vmatpush1.msra.mxu0 %v644
      %2582 = vmatprep.subr.mxu0 0.0
      %2583 = vmatpush1.msra.mxu0 0.0
      %2584 = vmatprep.subr.mxu0 0.0
      %2585 = vmatpush1.msra.mxu0 0.0
      %2586 = vmatprep.subr.mxu0 0.0
      %2587 = vmatpush1.msra.mxu0 0.0
      %2588 = vmatprep.subr.mxu0 0.0
      %2589 = vmatpush1.msra.mxu0 0.0
      %2590 = vmatprep.subr.mxu0 0.0
      %2591 = vmatpush1.msra.mxu0 0.0
      %2592 = vmatprep.subr.mxu0 0.0
      %2593 = vmatpush1.msra.mxu0 0.0
      %2594 = vmatprep.subr.mxu0 0.0
      %2595 = vmatpush1.msra.mxu0 0.0
      %2596 = vmatprep.subr.mxu0 0.0
      %2597 = vmatpush1.msra.mxu0 0.0
      %2598 = vmatprep.subr.mxu0 0.0
      %2599 = vmatpush1.msra.mxu0 0.0
      %2600 = vmatprep.subr.mxu0 0.0
      %2601 = vmatpush1.msra.mxu0 0.0
      %2602 = vmatprep.subr.mxu0 0.0
      %2603 = vmatpush1.msra.mxu0 0.0
      %2604 = vmatprep.subr.mxu0 0.0
      %2605 = vmatpush1.msra.mxu0 0.0
      %2606 = vmatprep.subr.mxu0 0.0
      %2607 = vmatpush1.msra.mxu0 0.0
      %2608 = vmatprep.subr.mxu0 0.0
      %2609 = vmatpush1.msra.mxu0 0.0
      %2610 = vmatprep.subr.mxu0 0.0
      %2611 = vmatpush1.msra.mxu0 0.0
      %2612 = vmatprep.subr.mxu0 0.0
      %2613 = vmatpush1.msra.mxu0 0.0
      %2614 = vmatprep.subr.mxu0 0.0
      %2615 = vmatpush1.msra.mxu0 0.0
      %2616 = vmatprep.subr.mxu0 0.0
      %2617 = vmatpush1.msra.mxu0 0.0
      %2618 = vmatprep.subr.mxu0 0.0
      %2619 = vmatpush1.msra.mxu0 0.0
      %2620 = vmatprep.subr.mxu0 0.0
      %2621 = vmatpush1.msra.mxu0 0.0
      %2622 = vmatprep.subr.mxu0 0.0
      %2623 = vmatpush1.msra.mxu0 0.0
      %2624 = vmatprep.subr.mxu0 0.0
      %2625 = vmatpush1.msra.mxu0 0.0
      %2626 = vmatprep.subr.mxu0 0.0
      %2627 = vmatpush1.msra.mxu0 0.0
      %2628 = vmatprep.subr.mxu0 0.0
      %2629 = vmatpush1.msra.mxu0 0.0
      %2630 = vmatprep.mubr.f32.mxu0 0.0
      %2631 = vmatmul.mubr.f32.gmra.mrb[0].mxu0 %v2555
      %v2632 = vpop.f32.mrb[0].mxu0
      %v2633 = vadd.f32 %v2537, %v2632
      %v2634 = vpop.f32.mrb[0].mxu0
      %v2635 = vadd.f32 %v2537, %v2634
      %2636 = vmatprep.mubr.f32.mxu0 0.0
      %2637 = vmatmul.mubr.f32.gmra.mrb[0].mxu0 %v2558
      %v2638 = vpop.f32.mrb[0].mxu0
      %v2639 = vadd.f32 %v2542, %v2638
      %v2640 = vpop.f32.mrb[0].mxu0
      %v2641 = vadd.f32 %v2542, %v2640
      %2642 = vmatprep.mubr.f32.mxu0 0.0
      %2643 = vmatmul.mubr.f32.gmra.mrb[0].mxu0 %v2561
      %v2644 = vpop.f32.mrb[0].mxu0
      %v2645 = vadd.f32 %v2547, %v2644
      %v2646 = vpop.f32.mrb[0].mxu0
      %v2647 = vadd.f32 %v2547, %v2646
      %2648 = vmatprep.mubr.f32.mxu0 0.0
      %2649 = vmatmul.mubr.f32.gmra.mrb[0].mxu0 %v2564
      %v2650 = vpop.f32.mrb[0].mxu0
      %v2651 = vadd.f32 %v2552, %v2650
      %v2652 = vpop.f32.mrb[0].mxu0
      %v2653 = vadd.f32 %v2552, %v2652
      %2654 = vdwg.mxu0
      %2655 = vmatprep.subr.mxu0 %v2492
      %2656 = vmatpush1.msra.mxu0 %v2494
      %2657 = vmatprep.subr.mxu0 %v2493
      %2658 = vmatpush1.msra.mxu0 %v2495
      %2659 = vmatprep.subr.mxu0 %v2471
      %2660 = vmatpush1.msra.mxu0 %v2470
      %2661 = vmatprep.subr.mxu0 %v2475
      %2662 = vmatpush1.msra.mxu0 %v2474
      %2663 = vmatprep.subr.mxu0 %v2522
      %2664 = vmatpush1.msra.mxu0 %v2516
      %2665 = vmatprep.subr.mxu0 %v2523
      %2666 = vmatpush1.msra.mxu0 %v2517
      %2667 = vmatprep.subr.mxu0 %v717
      %2668 = vmatpush1.msra.mxu0 %v715
      %2669 = vmatprep.subr.mxu0 %v723
      %2670 = vmatpush1.msra.mxu0 %v721
      %2671 = vmatprep.subr.mxu0 0.0
      %2672 = vmatpush1.msra.mxu0 0.0
      %2673 = vmatprep.subr.mxu0 0.0
      %2674 = vmatpush1.msra.mxu0 0.0
      %2675 = vmatprep.subr.mxu0 0.0
      %2676 = vmatpush1.msra.mxu0 0.0
      %2677 = vmatprep.subr.mxu0 0.0
      %2678 = vmatpush1.msra.mxu0 0.0
      %2679 = vmatprep.subr.mxu0 0.0
      %2680 = vmatpush1.msra.mxu0 0.0
      %2681 = vmatprep.subr.mxu0 0.0
      %2682 = vmatpush1.msra.mxu0 0.0
      %2683 = vmatprep.subr.mxu0 0.0
      %2684 = vmatpush1.msra.mxu0 0.0
      %2685 = vmatprep.subr.mxu0 0.0
      %2686 = vmatpush1.msra.mxu0 0.0
      %2687 = vmatprep.subr.mxu0 0.0
      %2688 = vmatpush1.msra.mxu0 0.0
      %2689 = vmatprep.subr.mxu0 0.0
      %2690 = vmatpush1.msra.mxu0 0.0
      %2691 = vmatprep.subr.mxu0 0.0
      %2692 = vmatpush1.msra.mxu0 0.0
      %2693 = vmatprep.subr.mxu0 0.0
      %2694 = vmatpush1.msra.mxu0 0.0
      %2695 = vmatprep.subr.mxu0 0.0
      %2696 = vmatpush1.msra.mxu0 0.0
      %2697 = vmatprep.subr.mxu0 0.0
      %2698 = vmatpush1.msra.mxu0 0.0
      %2699 = vmatprep.subr.mxu0 0.0
      %2700 = vmatpush1.msra.mxu0 0.0
      %2701 = vmatprep.subr.mxu0 0.0
      %2702 = vmatpush1.msra.mxu0 0.0
      %2703 = vmatprep.subr.mxu0 0.0
      %2704 = vmatpush1.msra.mxu0 0.0
      %2705 = vmatprep.subr.mxu0 0.0
      %2706 = vmatpush1.msra.mxu0 0.0
      %2707 = vmatprep.subr.mxu0 0.0
      %2708 = vmatpush1.msra.mxu0 0.0
      %2709 = vmatprep.subr.mxu0 0.0
      %2710 = vmatpush1.msra.mxu0 0.0
      %2711 = vmatprep.subr.mxu0 0.0
      %2712 = vmatpush1.msra.mxu0 0.0
      %2713 = vmatprep.subr.mxu0 0.0
      %2714 = vmatpush1.msra.mxu0 0.0
      %2715 = vmatprep.subr.mxu0 0.0
      %2716 = vmatpush1.msra.mxu0 0.0
      %2717 = vmatprep.subr.mxu0 0.0
      %2718 = vmatpush1.msra.mxu0 0.0
      %2719 = vmatprep.mubr.f32.mxu0 0.0
      %2720 = vmatmul.mubr.f32.gmra.mrb[0].mxu0 %v2555
      %v2721 = vpop.f32.mrb[0].mxu0
      %v2722 = vadd.f32 %v2537, %v2721
      %v2723 = vpop.f32.mrb[0].mxu0
      %v2724 = vadd.f32 %v2537, %v2723
      %2725 = vmatprep.mubr.f32.mxu0 0.0
      %2726 = vmatmul.mubr.f32.gmra.mrb[0].mxu0 %v2558
      %v2727 = vpop.f32.mrb[0].mxu0
      %v2728 = vadd.f32 %v2542, %v2727
      %v2729 = vpop.f32.mrb[0].mxu0
      %v2730 = vadd.f32 %v2542, %v2729
      %2731 = vmatprep.mubr.f32.mxu0 0.0
      %2732 = vmatmul.mubr.f32.gmra.mrb[0].mxu0 %v2561
      %v2733 = vpop.f32.mrb[0].mxu0
      %v2734 = vadd.f32 %v2547, %v2733
      %v2735 = vpop.f32.mrb[0].mxu0
      %v2736 = vadd.f32 %v2547, %v2735
      %2737 = vmatprep.mubr.f32.mxu0 0.0
      %2738 = vmatmul.mubr.f32.gmra.mrb[0].mxu0 %v2564
      %v2739 = vpop.f32.mrb[0].mxu0
      %v2740 = vadd.f32 %v2552, %v2739
      %v2741 = vpop.f32.mrb[0].mxu0
      %v2742 = vadd.f32 %v2552, %v2741
      %2743 = vdwg.mxu0
      %v2744 = vtanh.pop %v2633
      %v2745 = vtanh.pop %v2635
      %v2746 = vtanh.pop %v2722
      %v2747 = vtanh.pop %v2724
      %v2748 = vtanh.pop %v2639
      %v2749 = vtanh.pop %v2641
      %v2750 = vtanh.pop %v2728
      %v2751 = vtanh.pop %v2730
      %v2752 = vmul.f32 %v2645, 0.5
      %v2753 = vmul.f32 %v2647, 0.5
      %v2754 = vmul.f32 %v2734, 0.5
      %v2755 = vmul.f32 %v2736, 0.5
      %v2756 = vmul.f32 %v2651, 0.5
      %v2757 = vmul.f32 %v2653, 0.5
      %v2758 = vmul.f32 %v2740, 0.5
      %v2759 = vmul.f32 %v2742, 0.5
      %v2760 = vtanh.pop %v2752
      %v2761 = vtanh.pop %v2753
      %v2762 = vtanh.pop %v2754
      %v2763 = vtanh.pop %v2755
      %v2764 = vtanh.pop %v2756
      %v2765 = vtanh.pop %v2757
      %v2766 = vtanh.pop %v2758
      %v2767 = vtanh.pop %v2759
      %v2768 = vadd.f32 %v2760, 1.0
      %v2769 = vadd.f32 %v2761, 1.0
      %v2770 = vadd.f32 %v2762, 1.0
      %v2771 = vadd.f32 %v2763, 1.0
      %v2772 = vadd.f32 %v2764, 1.0
      %v2773 = vadd.f32 %v2765, 1.0
      %v2774 = vadd.f32 %v2766, 1.0
      %v2775 = vadd.f32 %v2767, 1.0
      %v2776 = vmul.f32 %v2768, 0.5
      %v2777 = vmul.f32 %v2769, 0.5
      %v2778 = vmul.f32 %v2770, 0.5
      %v2779 = vmul.f32 %v2771, 0.5
      %v2780 = vmul.f32 %v2772, 0.5
      %v2781 = vmul.f32 %v2773, 0.5
      %v2782 = vmul.f32 %v2774, 0.5
      %v2783 = vmul.f32 %v2775, 0.5
      %v2784 = vmul.f32 %v2744, %v2776
      %v2785 = vmul.f32 %v2745, %v2777
      %v2786 = vmul.f32 %v2746, %v2778
      %v2787 = vmul.f32 %v2747, %v2779
      %v2788 = vmul.f32 %v2748, %v2780
      %v2789 = vmul.f32 %v2749, %v2781
      %v2790 = vmul.f32 %v2750, %v2782
      %v2791 = vmul.f32 %v2751, %v2783
      %s2792 = scalar_lea.vmem %s7, 96
      %v2793 = vld [vmem:[%s2792] sm:$0xff]
      %v2794 = vld [vmem:[%s2792 + $0x8] sm:$0xff]
      %v2795 = vld [vmem:[%s2792 + $0x10] sm:$0xff]
      %v2796 = vld [vmem:[%s2792 + $0x18] sm:$0xff]
      %s2797 = scalar_lea.vmem %s8, 96
      %v2798 = vld [vmem:[%s2797] sm:$0xff]
      %v2799 = vld [vmem:[%s2797 + $0x8] sm:$0xff]
      %v2800 = vld [vmem:[%s2797 + $0x10] sm:$0xff]
      %v2801 = vld [vmem:[%s2797 + $0x18] sm:$0xff]
      %2803 = vset.pattern.permute.xlu0 0
      %2804 = vperm.xlu0 %2803, %v2798
      %v2805 = vpop.permute.xlu0 %2804
      %2808 = vset.pattern.permute.xlu0 0
      %2809 = vperm.xlu0 %2808, %v2799
      %v2810 = vpop.permute.xlu0 %2809
      %2813 = vset.pattern.permute.xlu0 0
      %2814 = vperm.xlu0 %2813, %v2800
      %v2815 = vpop.permute.xlu0 %2814
      %2817 = vset.pattern.permute.xlu0 0
      %2818 = vperm.xlu0 %2817, %v2801
      %v2819 = vpop.permute.xlu0 %2818
      %v2821 = vsel %vm1139, %v2793, 0
      %v2824 = vsel %vm1139, %v2794, 0
      %v2827 = vsel %vm1139, %v2795, 0
      %v2830 = vsel %vm1139, %v2796, 0
      %2832 = vmatprep.subr.mxu0 %v2785
      %2833 = vmatpush1.msra.mxu0 %v2784
      %2834 = vmatprep.subr.mxu0 %v2789
      %2835 = vmatpush1.msra.mxu0 %v2788
      %2836 = vmatprep.subr.mxu0 0.0
      %2837 = vmatpush1.msra.mxu0 0.0
      %2838 = vmatprep.subr.mxu0 0.0
      %2839 = vmatpush1.msra.mxu0 0.0
      %2840 = vmatprep.subr.mxu0 0.0
      %2841 = vmatpush1.msra.mxu0 0.0
      %2842 = vmatprep.subr.mxu0 0.0
      %2843 = vmatpush1.msra.mxu0 0.0
      %2844 = vmatprep.subr.mxu0 0.0
      %2845 = vmatpush1.msra.mxu0 0.0
      %2846 = vmatprep.subr.mxu0 0.0
      %2847 = vmatpush1.msra.mxu0 0.0
      %2848 = vmatprep.subr.mxu0 0.0
      %2849 = vmatpush1.msra.mxu0 0.0
      %2850 = vmatprep.subr.mxu0 0.0
      %2851 = vmatpush1.msra.mxu0 0.0
      %2852 = vmatprep.subr.mxu0 0.0
      %2853 = vmatpush1.msra.mxu0 0.0
      %2854 = vmatprep.subr.mxu0 0.0
      %2855 = vmatpush1.msra.mxu0 0.0
      %2856 = vmatprep.subr.mxu0 0.0
      %2857 = vmatpush1.msra.mxu0 0.0
      %2858 = vmatprep.subr.mxu0 0.0
      %2859 = vmatpush1.msra.mxu0 0.0
      %2860 = vmatprep.subr.mxu0 0.0
      %2861 = vmatpush1.msra.mxu0 0.0
      %2862 = vmatprep.subr.mxu0 0.0
      %2863 = vmatpush1.msra.mxu0 0.0
      %2864 = vmatprep.subr.mxu0 0.0
      %2865 = vmatpush1.msra.mxu0 0.0
      %2866 = vmatprep.subr.mxu0 0.0
      %2867 = vmatpush1.msra.mxu0 0.0
      %2868 = vmatprep.subr.mxu0 0.0
      %2869 = vmatpush1.msra.mxu0 0.0
      %2870 = vmatprep.subr.mxu0 0.0
      %2871 = vmatpush1.msra.mxu0 0.0
      %2872 = vmatprep.subr.mxu0 0.0
      %2873 = vmatpush1.msra.mxu0 0.0
      %2874 = vmatprep.subr.mxu0 0.0
      %2875 = vmatpush1.msra.mxu0 0.0
      %2876 = vmatprep.subr.mxu0 0.0
      %2877 = vmatpush1.msra.mxu0 0.0
      %2878 = vmatprep.subr.mxu0 0.0
      %2879 = vmatpush1.msra.mxu0 0.0
      %2880 = vmatprep.subr.mxu0 0.0
      %2881 = vmatpush1.msra.mxu0 0.0
      %2882 = vmatprep.subr.mxu0 0.0
      %2883 = vmatpush1.msra.mxu0 0.0
      %2884 = vmatprep.subr.mxu0 0.0
      %2885 = vmatpush1.msra.mxu0 0.0
      %2886 = vmatprep.subr.mxu0 0.0
      %2887 = vmatpush1.msra.mxu0 0.0
      %2888 = vmatprep.subr.mxu0 0.0
      %2889 = vmatpush1.msra.mxu0 0.0
      %2890 = vmatprep.subr.mxu0 0.0
      %2891 = vmatpush1.msra.mxu0 0.0
      %2892 = vmatprep.subr.mxu0 0.0
      %2893 = vmatpush1.msra.mxu0 0.0
      %2894 = vmatprep.subr.mxu0 0.0
      %2895 = vmatpush1.msra.mxu0 0.0
      %2896 = vmatprep.mubr.f32.mxu0 0.0
      %2897 = vmatmul.mubr.f32.gmra.mrb[0].mxu0 %v2821
      %v2898 = vpop.f32.mrb[0].mxu0
      %v2899 = vadd.f32 %v2805, %v2898
      %v2900 = vpop.f32.mrb[0].mxu0
      %v2901 = vadd.f32 %v2805, %v2900
      %2902 = vmatprep.mubr.f32.mxu0 0.0
      %2903 = vmatmul.mubr.f32.gmra.mrb[0].mxu0 %v2824
      %v2904 = vpop.f32.mrb[0].mxu0
      %v2905 = vadd.f32 %v2810, %v2904
      %v2906 = vpop.f32.mrb[0].mxu0
      %v2907 = vadd.f32 %v2810, %v2906
      %2908 = vmatprep.mubr.f32.mxu0 0.0
      %2909 = vmatmul.mubr.f32.gmra.mrb[0].mxu0 %v2827
      %v2910 = vpop.f32.mrb[0].mxu0
      %v2911 = vpop.f32.mrb[0].mxu0
      %2912 = vmatprep.mubr.f32.mxu0 0.0
      %2913 = vmatmul.mubr.f32.gmra.mrb[0].mxu0 %v2830
      %v2914 = vpop.f32.mrb[0].mxu0
      %v2915 = vpop.f32.mrb[0].mxu0
      %2916 = vdwg.mxu0
      %2917 = vmatprep.subr.mxu0 %v2787
      %2918 = vmatpush1.msra.mxu0 %v2786
      %2919 = vmatprep.subr.mxu0 %v2791
      %2920 = vmatpush1.msra.mxu0 %v2790
      %2921 = vmatprep.subr.mxu0 0.0
      %2922 = vmatpush1.msra.mxu0 0.0
      %2923 = vmatprep.subr.mxu0 0.0
      %2924 = vmatpush1.msra.mxu0 0.0
      %2925 = vmatprep.subr.mxu0 0.0
      %2926 = vmatpush1.msra.mxu0 0.0
      %2927 = vmatprep.subr.mxu0 0.0
      %2928 = vmatpush1.msra.mxu0 0.0
      %2929 = vmatprep.subr.mxu0 0.0
      %2930 = vmatpush1.msra.mxu0 0.0
      %2931 = vmatprep.subr.mxu0 0.0
      %2932 = vmatpush1.msra.mxu0 0.0
      %2933 = vmatprep.subr.mxu0 0.0
      %2934 = vmatpush1.msra.mxu0 0.0
      %2935 = vmatprep.subr.mxu0 0.0
      %2936 = vmatpush1.msra.mxu0 0.0
      %2937 = vmatprep.subr.mxu0 0.0
      %2938 = vmatpush1.msra.mxu0 0.0
      %2939 = vmatprep.subr.mxu0 0.0
      %2940 = vmatpush1.msra.mxu0 0.0
      %2941 = vmatprep.subr.mxu0 0.0
      %2942 = vmatpush1.msra.mxu0 0.0
      %2943 = vmatprep.subr.mxu0 0.0
      %2944 = vmatpush1.msra.mxu0 0.0
      %2945 = vmatprep.subr.mxu0 0.0
      %2946 = vmatpush1.msra.mxu0 0.0
      %2947 = vmatprep.subr.mxu0 0.0
      %2948 = vmatpush1.msra.mxu0 0.0
      %2949 = vmatprep.subr.mxu0 0.0
      %2950 = vmatpush1.msra.mxu0 0.0
      %2951 = vmatprep.subr.mxu0 0.0
      %2952 = vmatpush1.msra.mxu0 0.0
      %2953 = vmatprep.subr.mxu0 0.0
      %2954 = vmatpush1.msra.mxu0 0.0
      %2955 = vmatprep.subr.mxu0 0.0
      %2956 = vmatpush1.msra.mxu0 0.0
      %2957 = vmatprep.subr.mxu0 0.0
      %2958 = vmatpush1.msra.mxu0 0.0
      %2959 = vmatprep.subr.mxu0 0.0
      %2960 = vmatpush1.msra.mxu0 0.0
      %2961 = vmatprep.subr.mxu0 0.0
      %2962 = vmatpush1.msra.mxu0 0.0
      %2963 = vmatprep.subr.mxu0 0.0
      %2964 = vmatpush1.msra.mxu0 0.0
      %2965 = vmatprep.subr.mxu0 0.0
      %2966 = vmatpush1.msra.mxu0 0.0
      %2967 = vmatprep.subr.mxu0 0.0
      %2968 = vmatpush1.msra.mxu0 0.0
      %2969 = vmatprep.subr.mxu0 0.0
      %2970 = vmatpush1.msra.mxu0 0.0
      %2971 = vmatprep.subr.mxu0 0.0
      %2972 = vmatpush1.msra.mxu0 0.0
      %2973 = vmatprep.subr.mxu0 0.0
      %2974 = vmatpush1.msra.mxu0 0.0
      %2975 = vmatprep.subr.mxu0 0.0
      %2976 = vmatpush1.msra.mxu0 0.0
      %2977 = vmatprep.subr.mxu0 0.0
      %2978 = vmatpush1.msra.mxu0 0.0
      %2979 = vmatprep.subr.mxu0 0.0
      %2980 = vmatpush1.msra.mxu0 0.0
      %2981 = vmatprep.mubr.f32.mxu0 0.0
      %2982 = vmatmul.mubr.f32.gmra.mrb[0].mxu0 %v2821
      %v2983 = vpop.f32.mrb[0].mxu0
      %v2984 = vadd.f32 %v2805, %v2983
      %v2985 = vpop.f32.mrb[0].mxu0
      %v2986 = vadd.f32 %v2805, %v2985
      %2987 = vmatprep.mubr.f32.mxu0 0.0
      %2988 = vmatmul.mubr.f32.gmra.mrb[0].mxu0 %v2824
      %v2989 = vpop.f32.mrb[0].mxu0
      %v2990 = vadd.f32 %v2810, %v2989
      %v2991 = vpop.f32.mrb[0].mxu0
      %v2992 = vadd.f32 %v2810, %v2991
      %2993 = vmatprep.mubr.f32.mxu0 0.0
      %2994 = vmatmul.mubr.f32.gmra.mrb[0].mxu0 %v2827
      %v2995 = vpop.f32.mrb[0].mxu0
      %v2996 = vpop.f32.mrb[0].mxu0
      %2997 = vmatprep.mubr.f32.mxu0 0.0
      %2998 = vmatmul.mubr.f32.gmra.mrb[0].mxu0 %v2830
      %v2999 = vpop.f32.mrb[0].mxu0
      %v3000 = vpop.f32.mrb[0].mxu0
      %3001 = vdwg.mxu0
      %v3002 = vadd.f32 %v2452, %v2899
      %v3003 = vadd.f32 %v2453, %v2901
      %v3004 = vadd.f32 %v2454, %v2984
      %v3005 = vadd.f32 %v2455, %v2986
      %v3006 = vadd.f32 %v2456, %v2905
      %v3007 = vadd.f32 %v2457, %v2907
      %v3008 = vadd.f32 %v2458, %v2990
      %v3009 = vadd.f32 %v2459, %v2992
      %v3010 = vmul.f32 %v3002, 0.5
      %v3011 = vmul.f32 %v3003, 0.5
      %v3012 = vmul.f32 %v3004, 0.5
      %v3013 = vmul.f32 %v3005, 0.5
      %v3014 = vmul.f32 %v3006, 0.5
      %v3015 = vmul.f32 %v3007, 0.5
      %v3016 = vmul.f32 %v3008, 0.5
      %v3017 = vmul.f32 %v3009, 0.5
      %v3018 = vmax.f32 %v3010, 0.0
      %v3019 = vmax.f32 %v3011, 0.0
      %v3020 = vmax.f32 %v3012, 0.0
      %v3021 = vmax.f32 %v3013, 0.0
      %v3022 = vmax.f32 %v3014, 0.0
      %v3023 = vmax.f32 %v3015, 0.0
      %v3024 = vmax.f32 %v3016, 0.0
      %v3025 = vmax.f32 %v3017, 0.0
      %v3026 = vld [vmem:[%s9] sm:$0xff]
      %v3027 = vld [vmem:[%s9 + $0x8] sm:$0xff]
      %v3028 = vld [vmem:[%s10] sm:$0xff]
      %v3029 = vld [vmem:[%s10 + $0x8] sm:$0xff]
      %3031 = vset.pattern.permute.xlu0 0
      %3032 = vperm.xlu0 %3031, %v3028
      %v3033 = vpop.permute.xlu0 %3032
      %3036 = vset.pattern.permute.xlu0 0
      %3037 = vperm.xlu0 %3036, %v3029
      %v3038 = vpop.permute.xlu0 %3037
      %v3041 = vsel %vm1139, %v3026, 0
      %v3044 = vsel %vm1139, %v3027, 0
      %3046 = vmatprep.subr.mxu0 %v3019
      %3047 = vmatpush1.msra.mxu0 %v3018
      %3048 = vmatprep.subr.mxu0 %v3023
      %3049 = vmatpush1.msra.mxu0 %v3022
      %3050 = vmatprep.subr.mxu0 0.0
      %3051 = vmatpush1.msra.mxu0 0.0
      %3052 = vmatprep.subr.mxu0 0.0
      %3053 = vmatpush1.msra.mxu0 0.0
      %3054 = vmatprep.subr.mxu0 0.0
      %3055 = vmatpush1.msra.mxu0 0.0
      %3056 = vmatprep.subr.mxu0 0.0
      %3057 = vmatpush1.msra.mxu0 0.0
      %3058 = vmatprep.subr.mxu0 0.0
      %3059 = vmatpush1.msra.mxu0 0.0
      %3060 = vmatprep.subr.mxu0 0.0
      %3061 = vmatpush1.msra.mxu0 0.0
      %3062 = vmatprep.subr.mxu0 0.0
      %3063 = vmatpush1.msra.mxu0 0.0
      %3064 = vmatprep.subr.mxu0 0.0
      %3065 = vmatpush1.msra.mxu0 0.0
      %3066 = vmatprep.subr.mxu0 0.0
      %3067 = vmatpush1.msra.mxu0 0.0
      %3068 = vmatprep.subr.mxu0 0.0
      %3069 = vmatpush1.msra.mxu0 0.0
      %3070 = vmatprep.subr.mxu0 0.0
      %3071 = vmatpush1.msra.mxu0 0.0
      %3072 = vmatprep.subr.mxu0 0.0
      %3073 = vmatpush1.msra.mxu0 0.0
      %3074 = vmatprep.subr.mxu0 0.0
      %3075 = vmatpush1.msra.mxu0 0.0
      %3076 = vmatprep.subr.mxu0 0.0
      %3077 = vmatpush1.msra.mxu0 0.0
      %3078 = vmatprep.subr.mxu0 0.0
      %3079 = vmatpush1.msra.mxu0 0.0
      %3080 = vmatprep.subr.mxu0 0.0
      %3081 = vmatpush1.msra.mxu0 0.0
      %3082 = vmatprep.subr.mxu0 0.0
      %3083 = vmatpush1.msra.mxu0 0.0
      %3084 = vmatprep.subr.mxu0 0.0
      %3085 = vmatpush1.msra.mxu0 0.0
      %3086 = vmatprep.subr.mxu0 0.0
      %3087 = vmatpush1.msra.mxu0 0.0
      %3088 = vmatprep.subr.mxu0 0.0
      %3089 = vmatpush1.msra.mxu0 0.0
      %3090 = vmatprep.subr.mxu0 0.0
      %3091 = vmatpush1.msra.mxu0 0.0
      %3092 = vmatprep.subr.mxu0 0.0
      %3093 = vmatpush1.msra.mxu0 0.0
      %3094 = vmatprep.subr.mxu0 0.0
      %3095 = vmatpush1.msra.mxu0 0.0
      %3096 = vmatprep.subr.mxu0 0.0
      %3097 = vmatpush1.msra.mxu0 0.0
      %3098 = vmatprep.subr.mxu0 0.0
      %3099 = vmatpush1.msra.mxu0 0.0
      %3100 = vmatprep.subr.mxu0 0.0
      %3101 = vmatpush1.msra.mxu0 0.0
      %3102 = vmatprep.subr.mxu0 0.0
      %3103 = vmatpush1.msra.mxu0 0.0
      %3104 = vmatprep.subr.mxu0 0.0
      %3105 = vmatpush1.msra.mxu0 0.0
      %3106 = vmatprep.subr.mxu0 0.0
      %3107 = vmatpush1.msra.mxu0 0.0
      %3108 = vmatprep.subr.mxu0 0.0
      %3109 = vmatpush1.msra.mxu0 0.0
      %3110 = vmatprep.mubr.f32.mxu0 0.0
      %3111 = vmatmul.mubr.f32.gmra.mrb[0].mxu0 %v3041
      %v3112 = vpop.f32.mrb[0].mxu0
      %v3113 = vadd.f32 %v3033, %v3112
      %v3114 = vpop.f32.mrb[0].mxu0
      %v3115 = vadd.f32 %v3033, %v3114
      %3116 = vmatprep.mubr.f32.mxu0 0.0
      %3117 = vmatmul.mubr.f32.gmra.mrb[0].mxu0 %v3044
      %v3118 = vpop.f32.mrb[0].mxu0
      %v3119 = vadd.f32 %v3038, %v3118
      %v3120 = vpop.f32.mrb[0].mxu0
      %v3121 = vadd.f32 %v3038, %v3120
      %3122 = vdwg.mxu0
      %3123 = vmatprep.subr.mxu0 %v3021
      %3124 = vmatpush1.msra.mxu0 %v3020
      %3125 = vmatprep.subr.mxu0 %v3025
      %3126 = vmatpush1.msra.mxu0 %v3024
      %3127 = vmatprep.subr.mxu0 0.0
      %3128 = vmatpush1.msra.mxu0 0.0
      %3129 = vmatprep.subr.mxu0 0.0
      %3130 = vmatpush1.msra.mxu0 0.0
      %3131 = vmatprep.subr.mxu0 0.0
      %3132 = vmatpush1.msra.mxu0 0.0
      %3133 = vmatprep.subr.mxu0 0.0
      %3134 = vmatpush1.msra.mxu0 0.0
      %3135 = vmatprep.subr.mxu0 0.0
      %3136 = vmatpush1.msra.mxu0 0.0
      %3137 = vmatprep.subr.mxu0 0.0
      %3138 = vmatpush1.msra.mxu0 0.0
      %3139 = vmatprep.subr.mxu0 0.0
      %3140 = vmatpush1.msra.mxu0 0.0
      %3141 = vmatprep.subr.mxu0 0.0
      %3142 = vmatpush1.msra.mxu0 0.0
      %3143 = vmatprep.subr.mxu0 0.0
      %3144 = vmatpush1.msra.mxu0 0.0
      %3145 = vmatprep.subr.mxu0 0.0
      %3146 = vmatpush1.msra.mxu0 0.0
      %3147 = vmatprep.subr.mxu0 0.0
      %3148 = vmatpush1.msra.mxu0 0.0
      %3149 = vmatprep.subr.mxu0 0.0
      %3150 = vmatpush1.msra.mxu0 0.0
      %3151 = vmatprep.subr.mxu0 0.0
      %3152 = vmatpush1.msra.mxu0 0.0
      %3153 = vmatprep.subr.mxu0 0.0
      %3154 = vmatpush1.msra.mxu0 0.0
      %3155 = vmatprep.subr.mxu0 0.0
      %3156 = vmatpush1.msra.mxu0 0.0
      %3157 = vmatprep.subr.mxu0 0.0
      %3158 = vmatpush1.msra.mxu0 0.0
      %3159 = vmatprep.subr.mxu0 0.0
      %3160 = vmatpush1.msra.mxu0 0.0
      %3161 = vmatprep.subr.mxu0 0.0
      %3162 = vmatpush1.msra.mxu0 0.0
      %3163 = vmatprep.subr.mxu0 0.0
      %3164 = vmatpush1.msra.mxu0 0.0
      %3165 = vmatprep.subr.mxu0 0.0
      %3166 = vmatpush1.msra.mxu0 0.0
      %3167 = vmatprep.subr.mxu0 0.0
      %3168 = vmatpush1.msra.mxu0 0.0
      %3169 = vmatprep.subr.mxu0 0.0
      %3170 = vmatpush1.msra.mxu0 0.0
      %3171 = vmatprep.subr.mxu0 0.0
      %3172 = vmatpush1.msra.mxu0 0.0
      %3173 = vmatprep.subr.mxu0 0.0
      %3174 = vmatpush1.msra.mxu0 0.0
      %3175 = vmatprep.subr.mxu0 0.0
      %3176 = vmatpush1.msra.mxu0 0.0
      %3177 = vmatprep.subr.mxu0 0.0
      %3178 = vmatpush1.msra.mxu0 0.0
      %3179 = vmatprep.subr.mxu0 0.0
      %3180 = vmatpush1.msra.mxu0 0.0
      %3181 = vmatprep.subr.mxu0 0.0
      %3182 = vmatpush1.msra.mxu0 0.0
      %3183 = vmatprep.subr.mxu0 0.0
      %3184 = vmatpush1.msra.mxu0 0.0
      %3185 = vmatprep.subr.mxu0 0.0
      %3186 = vmatpush1.msra.mxu0 0.0
      %3187 = vmatprep.mubr.f32.mxu0 0.0
      %3188 = vmatmul.mubr.f32.gmra.mrb[0].mxu0 %v3041
      %v3189 = vpop.f32.mrb[0].mxu0
      %v3190 = vadd.f32 %v3033, %v3189
      %v3191 = vpop.f32.mrb[0].mxu0
      %v3192 = vadd.f32 %v3033, %v3191
      %3193 = vmatprep.mubr.f32.mxu0 0.0
      %3194 = vmatmul.mubr.f32.gmra.mrb[0].mxu0 %v3044
      %v3195 = vpop.f32.mrb[0].mxu0
      %v3196 = vadd.f32 %v3038, %v3195
      %v3197 = vpop.f32.mrb[0].mxu0
      %v3198 = vadd.f32 %v3038, %v3197
      %3199 = vdwg.mxu0
      %v3200 = vmax.f32 %v3113, 0.0
      %v3201 = vmax.f32 %v3115, 0.0
      %v3202 = vmax.f32 %v3190, 0.0
      %v3203 = vmax.f32 %v3192, 0.0
      %v3204 = vmax.f32 %v3119, 0.0
      %v3205 = vmax.f32 %v3121, 0.0
      %v3206 = vmax.f32 %v3196, 0.0
      %v3207 = vmax.f32 %v3198, 0.0
      %v3208 = vld [vmem:[%s11] sm:$0x1]
      %v3209 = vld [vmem:[#allocation2] sm:$0x1]
      %3211 = vset.pattern.permute.xlu0 0
      %3212 = vperm.xlu0 %3211, %v3209
      %v3213 = vpop.permute.xlu0 %3212
      %v3215 = vlaneseq
      %v3216 = vshrl.u32 %v3215, 7
      %v3217 = vsub.s32 0, %v3216
      %v3218 = vrot.slane %v3213, %v3217
      %v3220 = vsel %vm1139, %v3208, 0
      %3222 = vmatprep.subr.mxu0 %v3201
      %3223 = vmatpush1.msra.mxu0 %v3200
      %3224 = vmatprep.subr.mxu0 %v3205
      %3225 = vmatpush1.msra.mxu0 %v3204
      %3226 = vmatprep.subr.mxu0 0.0
      %3227 = vmatpush1.msra.mxu0 0.0
      %3228 = vmatprep.subr.mxu0 0.0
      %3229 = vmatpush1.msra.mxu0 0.0
      %3230 = vmatprep.subr.mxu0 0.0
      %3231 = vmatpush1.msra.mxu0 0.0
      %3232 = vmatprep.subr.mxu0 0.0
      %3233 = vmatpush1.msra.mxu0 0.0
      %3234 = vmatprep.subr.mxu0 0.0
      %3235 = vmatpush1.msra.mxu0 0.0
      %3236 = vmatprep.subr.mxu0 0.0
      %3237 = vmatpush1.msra.mxu0 0.0
      %3238 = vmatprep.subr.mxu0 0.0
      %3239 = vmatpush1.msra.mxu0 0.0
      %3240 = vmatprep.subr.mxu0 0.0
      %3241 = vmatpush1.msra.mxu0 0.0
      %3242 = vmatprep.subr.mxu0 0.0
      %3243 = vmatpush1.msra.mxu0 0.0
      %3244 = vmatprep.subr.mxu0 0.0
      %3245 = vmatpush1.msra.mxu0 0.0
      %3246 = vmatprep.subr.mxu0 0.0
      %3247 = vmatpush1.msra.mxu0 0.0
      %3248 = vmatprep.subr.mxu0 0.0
      %3249 = vmatpush1.msra.mxu0 0.0
      %3250 = vmatprep.subr.mxu0 0.0
      %3251 = vmatpush1.msra.mxu0 0.0
      %3252 = vmatprep.subr.mxu0 0.0
      %3253 = vmatpush1.msra.mxu0 0.0
      %3254 = vmatprep.subr.mxu0 0.0
      %3255 = vmatpush1.msra.mxu0 0.0
      %3256 = vmatprep.subr.mxu0 0.0
      %3257 = vmatpush1.msra.mxu0 0.0
      %3258 = vmatprep.subr.mxu0 0.0
      %3259 = vmatpush1.msra.mxu0 0.0
      %3260 = vmatprep.subr.mxu0 0.0
      %3261 = vmatpush1.msra.mxu0 0.0
      %3262 = vmatprep.subr.mxu0 0.0
      %3263 = vmatpush1.msra.mxu0 0.0
      %3264 = vmatprep.subr.mxu0 0.0
      %3265 = vmatpush1.msra.mxu0 0.0
      %3266 = vmatprep.subr.mxu0 0.0
      %3267 = vmatpush1.msra.mxu0 0.0
      %3268 = vmatprep.subr.mxu0 0.0
      %3269 = vmatpush1.msra.mxu0 0.0
      %3270 = vmatprep.subr.mxu0 0.0
      %3271 = vmatpush1.msra.mxu0 0.0
      %3272 = vmatprep.subr.mxu0 0.0
      %3273 = vmatpush1.msra.mxu0 0.0
      %3274 = vmatprep.subr.mxu0 0.0
      %3275 = vmatpush1.msra.mxu0 0.0
      %3276 = vmatprep.subr.mxu0 0.0
      %3277 = vmatpush1.msra.mxu0 0.0
      %3278 = vmatprep.subr.mxu0 0.0
      %3279 = vmatpush1.msra.mxu0 0.0
      %3280 = vmatprep.subr.mxu0 0.0
      %3281 = vmatpush1.msra.mxu0 0.0
      %3282 = vmatprep.subr.mxu0 0.0
      %3283 = vmatpush1.msra.mxu0 0.0
      %3284 = vmatprep.subr.mxu0 0.0
      %3285 = vmatpush1.msra.mxu0 0.0
      %3286 = vmatprep.mubr.f32.mxu0 0.0
      %3287 = vmatmul.mubr.f32.gmra.mrb[0].mxu0 %v3220
      %v3288 = vpop.f32.mrb[0].mxu0
      %v3289 = vadd.f32 %v3218, %v3288
      %v3290 = vpop.f32.mrb[0].mxu0
      %v3291 = vadd.f32 %v3218, %v3290
      %3292 = vdwg.mxu0
      %3293 = vmatprep.subr.mxu0 %v3203
      %3294 = vmatpush1.msra.mxu0 %v3202
      %3295 = vmatprep.subr.mxu0 %v3207
      %3296 = vmatpush1.msra.mxu0 %v3206
      %3297 = vmatprep.subr.mxu0 0.0
      %3298 = vmatpush1.msra.mxu0 0.0
      %3299 = vmatprep.subr.mxu0 0.0
      %3300 = vmatpush1.msra.mxu0 0.0
      %3301 = vmatprep.subr.mxu0 0.0
      %3302 = vmatpush1.msra.mxu0 0.0
      %3303 = vmatprep.subr.mxu0 0.0
      %3304 = vmatpush1.msra.mxu0 0.0
      %3305 = vmatprep.subr.mxu0 0.0
      %3306 = vmatpush1.msra.mxu0 0.0
      %3307 = vmatprep.subr.mxu0 0.0
      %3308 = vmatpush1.msra.mxu0 0.0
      %3309 = vmatprep.subr.mxu0 0.0
      %3310 = vmatpush1.msra.mxu0 0.0
      %3311 = vmatprep.subr.mxu0 0.0
      %3312 = vmatpush1.msra.mxu0 0.0
      %3313 = vmatprep.subr.mxu0 0.0
      %3314 = vmatpush1.msra.mxu0 0.0
      %3315 = vmatprep.subr.mxu0 0.0
      %3316 = vmatpush1.msra.mxu0 0.0
      %3317 = vmatprep.subr.mxu0 0.0
      %3318 = vmatpush1.msra.mxu0 0.0
      %3319 = vmatprep.subr.mxu0 0.0
      %3320 = vmatpush1.msra.mxu0 0.0
      %3321 = vmatprep.subr.mxu0 0.0
      %3322 = vmatpush1.msra.mxu0 0.0
      %3323 = vmatprep.subr.mxu0 0.0
      %3324 = vmatpush1.msra.mxu0 0.0
      %3325 = vmatprep.subr.mxu0 0.0
      %3326 = vmatpush1.msra.mxu0 0.0
      %3327 = vmatprep.subr.mxu0 0.0
      %3328 = vmatpush1.msra.mxu0 0.0
      %3329 = vmatprep.subr.mxu0 0.0
      %3330 = vmatpush1.msra.mxu0 0.0
      %3331 = vmatprep.subr.mxu0 0.0
      %3332 = vmatpush1.msra.mxu0 0.0
      %3333 = vmatprep.subr.mxu0 0.0
      %3334 = vmatpush1.msra.mxu0 0.0
      %3335 = vmatprep.subr.mxu0 0.0
      %3336 = vmatpush1.msra.mxu0 0.0
      %3337 = vmatprep.subr.mxu0 0.0
      %3338 = vmatpush1.msra.mxu0 0.0
      %3339 = vmatprep.subr.mxu0 0.0
      %3340 = vmatpush1.msra.mxu0 0.0
      %3341 = vmatprep.subr.mxu0 0.0
      %3342 = vmatpush1.msra.mxu0 0.0
      %3343 = vmatprep.subr.mxu0 0.0
      %3344 = vmatpush1.msra.mxu0 0.0
      %3345 = vmatprep.subr.mxu0 0.0
      %3346 = vmatpush1.msra.mxu0 0.0
      %3347 = vmatprep.subr.mxu0 0.0
      %3348 = vmatpush1.msra.mxu0 0.0
      %3349 = vmatprep.subr.mxu0 0.0
      %3350 = vmatpush1.msra.mxu0 0.0
      %3351 = vmatprep.subr.mxu0 0.0
      %3352 = vmatpush1.msra.mxu0 0.0
      %3353 = vmatprep.subr.mxu0 0.0
      %3354 = vmatpush1.msra.mxu0 0.0
      %3355 = vmatprep.subr.mxu0 0.0
      %3356 = vmatpush1.msra.mxu0 0.0
      %3357 = vmatprep.mubr.f32.mxu0 0.0
      %3358 = vmatmul.mubr.f32.gmra.mrb[0].mxu0 %v3220
      %v3359 = vpop.f32.mrb[0].mxu0
      %v3360 = vadd.f32 %v3218, %v3359
      %v3361 = vpop.f32.mrb[0].mxu0
      %v3362 = vadd.f32 %v3218, %v3361
      %3363 = vdwg.mxu0
      %v3368 = vcombine.low %v3289, %v3291
      %v3369 = vcombine.low %v3360, %v3362
      %v3371 = vunpack.c.l.s4 1966171168
      %v3372 = vunpack.c.0.s8 %v3371
      %v3373 = vlaneseq
      %v3374 = vshrl.u32 %v3373, 7
      %v3375 = vsub.s32 %v3372, %v3374
      %v3376 = vrot.slane %v3368, %v3375
      %v3378 = vunpack.c.l.s4 1966171168
      %v3379 = vunpack.c.0.s8 %v3378
      %v3380 = vlaneseq
      %v3381 = vshrl.u32 %v3380, 7
      %v3382 = vsub.s32 %v3379, %v3381
      %v3383 = vrot.slane %v3369, %v3382
      %v3384 = vcombine.low %v3376, %v3383
      %v3386 = vunpack.c.l.s4 1966171168
      %v3387 = vunpack.c.0.s8 %v3386
      %v3388 = vlaneseq
      %v3389 = vshrl.u32 %v3388, 7
      %v3390 = vsub.s32 %v3387, %v3389
      %v3391 = vrot.slane %v3384, %v3390
      %3392 = vrot.lane.b32.xlu0 %v3391, 64
      %v3393 = vpop.permute.xlu0 %3392
      %v3394 = vrot.slane %v3393, 1
      %v3395 = vsel %vm872, %v3393, %v3394
      %v3397 = vlaneseq
      %vm3398 = vcmp.ge.s32.totalorder %v3397, 0
      %vm3399 = vcmp.lt.s32.totalorder %v3397, 384
      %vm3400 = vmand %vm3398, %vm3399
      %3401 = vst.msk [vmem:[%s507] sm:$0x7] %vm3400, %v3395
      %s3402 = smul.u32 3, %s31
      %p3403 = scmp.lt.s32.totalorder %s30, 1
      %s3404 = scalar_select %p3403, %s30, 1
      %p3405 = scmp.lt.s32.totalorder %s3402, 2
      %s3406 = scalar_select %p3405, %s3402, 2
      %s3407 = smul.addr %s3404, 3
      %s3408 = sadd.s32 %s3406, %s3407
      %s3409 = scalar_lea.vmem %s13, %s3408
      // Predicated region
      $region73: #{_wavegan_pipeline.3} parent=71 // pred_check
        %p3410 = pneg %p345
      $region74: #{_wavegan_pipeline.3} parent=71 // pred_check_branch
        %3412 = sbr.rel (%p3410) target = $region76
      $region75: #{_wavegan_pipeline.3} parent=71 // pred_region
        %s3413 = smul.u32 3, %s31
      $region76: #{_wavegan_pipeline.3} parent=71 // pred_fallthru
        _
    $region72: #{_wavegan_pipeline.3} parent=5 // pred_fallthru
      _
    %p3414 = scmp.le.s32.totalorder 2, %s21
    // Predicated region
    $region77: #{_wavegan_pipeline.3} parent=5 // pred_check
      %p3415 = pneg %p3414
    $region78: #{_wavegan_pipeline.3} parent=5 // pred_check_branch
      %3417 = sbr.rel (%p3415) target = $region80
    $region79: #{_wavegan_pipeline.3} parent=5 // pred_region
      %s3418 = ssub.s32 %s21, 2
      // Predicated region
      $region81: #{_wavegan_pipeline.3} parent=79 // pred_check
        %p3419 = pneg %p351
      $region82: #{_wavegan_pipeline.3} parent=79 // pred_check_branch
        %3421 = sbr.rel (%p3419) target = $region84
      $region83: #{_wavegan_pipeline.3} parent=79 // pred_region
        %s3422 = smul.u32 3, %s33
        %p3423 = scmp.lt.s32.totalorder %s32, 1
        %s3424 = scalar_select %p3423, %s32, 1
        %p3425 = scmp.lt.s32.totalorder %s3422, 2
        %s3426 = scalar_select %p3425, %s3422, 2
        %s3427 = smul.addr %s3424, 3
        %s3428 = sadd.s32 %s3426, %s3427
        %s3429 = scalar_lea.vmem %s13, %s3428
      $region84: #{_wavegan_pipeline.3} parent=79 // pred_fallthru
        _
    $region80: #{_wavegan_pipeline.3} parent=5 // pred_fallthru
      _
  $region6: #{_wavegan_pipeline.3} parent=0 // loop_footer
    %s25 = sadd.s32 1, %s21
  $region7: #{_wavegan_pipeline.3} parent=0 // loop_footer_branch
    %20 = sbr.rel target = $region3
  $region8: #{_wavegan_pipeline.3} parent=0 // loop_exit
    _

</llo_original>
